<compile_context>
chip_gen: v6e
topology: v6e:2x2x1
jax: 0.10.0
libtpu: 0.0.40
codegen_flags: <defaults>
</compile_context>

<pallas_src>
import functools

import jax
import jax.numpy as jnp
from jax import lax
from jax.experimental import pallas as pl
from jax.experimental.pallas import tpu as pltpu

EPS = 1e-5


def _write_reflect_pad(src_chw, pad_ref, H, W):
    """Fill pad_ref (C, H+2, W+2) with ReflectionPad2d(1) of src_chw (C, H, W)."""
    # Center.
    pad_ref[:, 1:H + 1, 1:W + 1] = src_chw
    # Reflect left / right columns (rows 1..H).
    pad_ref[:, 1:H + 1, 0:1] = src_chw[:, :, 1:2]
    pad_ref[:, 1:H + 1, W + 1:W + 2] = src_chw[:, :, W - 2:W - 1]
    # Reflect top / bottom rows (full width, corners included) from the
    # already column-padded interior rows.
    pad_ref[:, 0:1, :] = pad_ref[:, 2:3, :]
    pad_ref[:, H + 1:H + 2, :] = pad_ref[:, H - 1:H, :]


def _conv3x3_im2col(pad_ref, col_ref, w_flat, b, C, H, W):
    """3x3 conv as a single wide-K MXU matmul.

    pad_ref: (C, H+2, W+2) padded input (VMEM scratch)
    col_ref: (9*C, H*W) im2col staging buffer (VMEM scratch)
    w_flat : (Cout, 9*Cin), tap-major blocks of Cin matching col_ref rows
    b      : (Cout, 1)
    returns: (Cout, H*W) f32
    """
    HW = H * W
    for tap in range(9):                       # static unroll: 9 slice-stores
        dy, dx = tap // 3, tap % 3
        col_ref[tap * C:(tap + 1) * C, :] = (
            pad_ref[:, dy:dy + H, dx:dx + W].reshape(C, HW))
    acc = jnp.dot(w_flat, col_ref[...], preferred_element_type=jnp.float32)
    return acc + b


def residual_block_kernel(x_ref, w1_ref, b1_ref, w2_ref, b2_ref, o_ref,
                          pad_ref, col_ref, *, C, H, W):
    HW = H * W
    inv_n = 1.0 / float(HW)
    x = x_ref[0]                                # (C, H*W), lane-dense

    def inorm(y):
        # One-pass mean/variance: single reduction sweep for sum and sum-sq.
        s = jnp.sum(y, axis=1, keepdims=True)
        ss = jnp.sum(y * y, axis=1, keepdims=True)
        m = s * inv_n
        var = ss * inv_n - m * m
        return (y - m) * lax.rsqrt(var + EPS)

    # conv1: reflect-pad -> im2col -> matmul -> InstanceNorm -> ReLU
    _write_reflect_pad(x.reshape(C, H, W), pad_ref, H, W)
    y = _conv3x3_im2col(pad_ref, col_ref, w1_ref[...], b1_ref[...], C, H, W)
    y = jnp.maximum(inorm(y), 0.0)

    # conv2: reflect-pad -> im2col -> matmul -> InstanceNorm
    _write_reflect_pad(y.reshape(C, H, W), pad_ref, H, W)
    z = _conv3x3_im2col(pad_ref, col_ref, w2_ref[...], b2_ref[...], C, H, W)
    z = inorm(z)

    # Residual add; lane-dense unmasked store.
    o_ref[0] = (x + z).astype(o_ref.dtype)


def residual_block(x, w1, b1, w2, b2):
    """x: (B, C, H, W); w*: (C, C, 3, 3); b*: (C,).  Assumes Cin == Cout, H,W >= 2."""
    B, C, H, W = x.shape
    HW = H * W

    def relayout_w(w):
        # (Cout, Cin, 3, 3) -> (Cout, 9*Cin); column block `tap = dy*3+dx`
        # holds w[:, :, dy, dx], matching the im2col row ordering.
        return jnp.transpose(w, (0, 2, 3, 1)).reshape(C, 9 * C).astype(jnp.float32)

    w1_r = relayout_w(w1)
    w2_r = relayout_w(w2)
    b1_r = b1.reshape(C, 1).astype(jnp.float32)
    b2_r = b2.reshape(C, 1).astype(jnp.float32)
    x_flat = x.reshape(B, C, HW)

    kernel = functools.partial(residual_block_kernel, C=C, H=H, W=W)

    out_flat = pl.pallas_call(
        kernel,
        out_shape=jax.ShapeDtypeStruct((B, C, HW), x.dtype),
        grid_spec=pltpu.PrefetchScalarGridSpec(
            num_scalar_prefetch=0,
            grid=(B,),
            in_specs=[
                pl.BlockSpec((1, C, HW), lambda b: (b, 0, 0)),
                pl.BlockSpec((C, 9 * C), lambda b: (0, 0)),
                pl.BlockSpec((C, 1), lambda b: (0, 0)),
                pl.BlockSpec((C, 9 * C), lambda b: (0, 0)),
                pl.BlockSpec((C, 1), lambda b: (0, 0)),
            ],
            out_specs=pl.BlockSpec((1, C, HW), lambda b: (b, 0, 0)),
            scratch_shapes=[
                pltpu.VMEM((C, H + 2, W + 2), jnp.float32),   # padded image
                pltpu.VMEM((9 * C, HW), jnp.float32),         # im2col buffer
            ],
        ),
        compiler_params=pltpu.CompilerParams(
            dimension_semantics=("parallel",),
            vmem_limit_bytes=48 * 1024 * 1024,
        ),
    )(x_flat, w1_r, b1_r, w2_r, b2_r)

    return out_flat.reshape(B, C, H, W)


def residual_block_ref(x, w1, b1, w2, b2):
    # Pure-JAX reference matching the PyTorch module.
    dn = ("NCHW", "OIHW", "NCHW")

    def conv(t, w, b):
        y = lax.conv_general_dilated(t, w, (1, 1), "VALID", dimension_numbers=dn)
        return y + b[None, :, None, None]

    def inorm(y):
        m = jnp.mean(y, axis=(2, 3), keepdims=True)
        v = jnp.mean((y - m) ** 2, axis=(2, 3), keepdims=True)
        return (y - m) / jnp.sqrt(v + EPS)

    pad = lambda t: jnp.pad(t, ((0, 0), (0, 0), (1, 1), (1, 1)), mode="reflect")
    y = jnp.maximum(inorm(conv(pad(x), w1, b1)), 0.0)
    z = inorm(conv(pad(y), w2, b2))
    return x + z


if __name__ == "__main__":
    B, C, H, W = 2, 4, 16, 16
    key = jax.random.PRNGKey(0)
    kx, kw1, kb1, kw2, kb2 = jax.random.split(key, 5)

    x = jax.random.normal(kx, (B, C, H, W), dtype=jnp.float32)
    # Conv2d(C, C, 3) style parameters.
    fan_in = C * 3 * 3
    bound = 1.0 / (fan_in ** 0.5)
    w1 = jax.random.uniform(kw1, (C, C, 3, 3), jnp.float32, -bound, bound)
    b1 = jax.random.uniform(kb1, (C,), jnp.float32, -bound, bound)
    w2 = jax.random.uniform(kw2, (C, C, 3, 3), jnp.float32, -bound, bound)
    b2 = jax.random.uniform(kb2, (C,), jnp.float32, -bound, bound)

    out = residual_block(x, w1, b1, w2, b2)
    jax.block_until_ready(out)

    ref = residual_block_ref(x, w1, b1, w2, b2)
    assert out.shape == (B, C, H, W)
    assert jnp.max(jnp.abs(out - ref)) < 1e-4, "mismatch vs reference"

    print("KERNEL_OK")
</pallas_src>

<mosaic_0001>
module attributes {stable_mosaic.version = 11 : i64} {
  func.func @residual_block_kernel(%arg0: i32, %arg1: memref<1x4x256xf32, #tpu.memory_space<vmem>>, %arg2: memref<4x36xf32, #tpu.memory_space<vmem>>, %arg3: memref<4x1xf32, #tpu.memory_space<vmem>>, %arg4: memref<4x36xf32, #tpu.memory_space<vmem>>, %arg5: memref<4x1xf32, #tpu.memory_space<vmem>>, %arg6: memref<1x4x256xf32, #tpu.memory_space<vmem>>, %arg7: memref<4x18x18xf32, #tpu.memory_space<vmem>>, %arg8: memref<36x256xf32, #tpu.memory_space<vmem>>) attributes {dimension_semantics = [#tpu.dimension_semantics<parallel>], iteration_bounds = array<i64: 2>, scalar_prefetch = 0 : i64, scratch_operands = 2 : i64, tpu.core_type = #tpu.core_type<tc>, window_params = [{transform_indices = @transform_0, window_bounds = array<i64: 1, 4, 256>}, {pipeline_mode = #tpu.pipeline_mode<synchronous>, transform_indices = @transform_1, window_bounds = array<i64: 4, 36>}, {pipeline_mode = #tpu.pipeline_mode<synchronous>, transform_indices = @transform_2, window_bounds = array<i64: 4, 1>}, {pipeline_mode = #tpu.pipeline_mode<synchronous>, transform_indices = @transform_3, window_bounds = array<i64: 4, 36>}, {pipeline_mode = #tpu.pipeline_mode<synchronous>, transform_indices = @transform_4, window_bounds = array<i64: 4, 1>}, {transform_indices = @transform_5, window_bounds = array<i64: 1, 4, 256>}]} {
    %c0 = arith.constant 0 : index
    %c0_0 = arith.constant 0 : index
    %c0_1 = arith.constant 0 : index
    %0 = vector.load %arg1[%c0, %c0_0, %c0_1] : memref<1x4x256xf32, #tpu.memory_space<vmem>>, vector<1x4x256xf32>
    %1 = vector.shape_cast %0 : vector<1x4x256xf32> to vector<4x256xf32>
    %2 = vector.shape_cast %1 : vector<4x256xf32> to vector<4x16x16xf32>
    %c0_2 = arith.constant 0 : index
    %c1 = arith.constant 1 : index
    %c1_3 = arith.constant 1 : index
    %3 = vector.load %arg7[%c0_2, %c1, %c1_3] : memref<4x18x18xf32, #tpu.memory_space<vmem>>, vector<4x16x16xf32>
    tpu.vector_store %arg7[%c0_2, %c1, %c1_3], %2 {strides = array<i32>} : memref<4x18x18xf32, #tpu.memory_space<vmem>>, vector<4x16x16xf32>,
    %4 = vector.extract_strided_slice %2 {offsets = [0, 0, 1], sizes = [4, 16, 1], strides = [1, 1, 1]} : vector<4x16x16xf32> to vector<4x16x1xf32>
    %c0_4 = arith.constant 0 : index
    %c1_5 = arith.constant 1 : index
    %c0_6 = arith.constant 0 : index
    %5 = vector.load %arg7[%c0_4, %c1_5, %c0_6] : memref<4x18x18xf32, #tpu.memory_space<vmem>>, vector<4x16x1xf32>
    tpu.vector_store %arg7[%c0_4, %c1_5, %c0_6], %4 {strides = array<i32>} : memref<4x18x18xf32, #tpu.memory_space<vmem>>, vector<4x16x1xf32>,
    %6 = vector.extract_strided_slice %2 {offsets = [0, 0, 14], sizes = [4, 16, 1], strides = [1, 1, 1]} : vector<4x16x16xf32> to vector<4x16x1xf32>
    %c0_7 = arith.constant 0 : index
    %c1_8 = arith.constant 1 : index
    %c17 = arith.constant 17 : index
    %7 = vector.load %arg7[%c0_7, %c1_8, %c17] : memref<4x18x18xf32, #tpu.memory_space<vmem>>, vector<4x16x1xf32>
    tpu.vector_store %arg7[%c0_7, %c1_8, %c17], %6 {strides = array<i32>} : memref<4x18x18xf32, #tpu.memory_space<vmem>>, vector<4x16x1xf32>,
    %c0_9 = arith.constant 0 : index
    %c2 = arith.constant 2 : index
    %c0_10 = arith.constant 0 : index
    %8 = vector.load %arg7[%c0_9, %c2, %c0_10] : memref<4x18x18xf32, #tpu.memory_space<vmem>>, vector<4x1x18xf32>
    %c0_11 = arith.constant 0 : index
    %c0_12 = arith.constant 0 : index
    %c0_13 = arith.constant 0 : index
    %9 = vector.load %arg7[%c0_11, %c0_12, %c0_13] : memref<4x18x18xf32, #tpu.memory_space<vmem>>, vector<4x1x18xf32>
    tpu.vector_store %arg7[%c0_11, %c0_12, %c0_13], %8 {strides = array<i32>} : memref<4x18x18xf32, #tpu.memory_space<vmem>>, vector<4x1x18xf32>,
    %c0_14 = arith.constant 0 : index
    %c15 = arith.constant 15 : index
    %c0_15 = arith.constant 0 : index
    %10 = vector.load %arg7[%c0_14, %c15, %c0_15] : memref<4x18x18xf32, #tpu.memory_space<vmem>>, vector<4x1x18xf32>
    %c0_16 = arith.constant 0 : index
    %c17_17 = arith.constant 17 : index
    %c0_18 = arith.constant 0 : index
    %11 = vector.load %arg7[%c0_16, %c17_17, %c0_18] : memref<4x18x18xf32, #tpu.memory_space<vmem>>, vector<4x1x18xf32>
    tpu.vector_store %arg7[%c0_16, %c17_17, %c0_18], %10 {strides = array<i32>} : memref<4x18x18xf32, #tpu.memory_space<vmem>>, vector<4x1x18xf32>,
    %c0_19 = arith.constant 0 : index
    %c0_20 = arith.constant 0 : index
    %12 = vector.load %arg2[%c0_19, %c0_20] : memref<4x36xf32, #tpu.memory_space<vmem>>, vector<4x36xf32>
    %c0_21 = arith.constant 0 : index
    %c0_22 = arith.constant 0 : index
    %13 = vector.load %arg3[%c0_21, %c0_22] : memref<4x1xf32, #tpu.memory_space<vmem>>, vector<4x1xf32>
    %c0_23 = arith.constant 0 : index
    %c0_24 = arith.constant 0 : index
    %c0_25 = arith.constant 0 : index
    %14 = vector.load %arg7[%c0_23, %c0_24, %c0_25] : memref<4x18x18xf32, #tpu.memory_space<vmem>>, vector<4x16x16xf32>
    %15 = vector.shape_cast %14 : vector<4x16x16xf32> to vector<4x256xf32>
    %c0_26 = arith.constant 0 : index
    %c0_27 = arith.constant 0 : index
    %16 = vector.load %arg8[%c0_26, %c0_27] : memref<36x256xf32, #tpu.memory_space<vmem>>, vector<4x256xf32>
    tpu.vector_store %arg8[%c0_26, %c0_27], %15 {strides = array<i32>} : memref<36x256xf32, #tpu.memory_space<vmem>>, vector<4x256xf32>,
    %c0_28 = arith.constant 0 : index
    %c0_29 = arith.constant 0 : index
    %c1_30 = arith.constant 1 : index
    %17 = vector.load %arg7[%c0_28, %c0_29, %c1_30] : memref<4x18x18xf32, #tpu.memory_space<vmem>>, vector<4x16x16xf32>
    %18 = vector.shape_cast %17 : vector<4x16x16xf32> to vector<4x256xf32>
    %c4 = arith.constant 4 : index
    %c0_31 = arith.constant 0 : index
    %19 = vector.load %arg8[%c4, %c0_31] : memref<36x256xf32, #tpu.memory_space<vmem>>, vector<4x256xf32>
    tpu.vector_store %arg8[%c4, %c0_31], %18 {strides = array<i32>} : memref<36x256xf32, #tpu.memory_space<vmem>>, vector<4x256xf32>,
    %c0_32 = arith.constant 0 : index
    %c0_33 = arith.constant 0 : index
    %c2_34 = arith.constant 2 : index
    %20 = vector.load %arg7[%c0_32, %c0_33, %c2_34] : memref<4x18x18xf32, #tpu.memory_space<vmem>>, vector<4x16x16xf32>
    %21 = vector.shape_cast %20 : vector<4x16x16xf32> to vector<4x256xf32>
    %c8 = arith.constant 8 : index
    %c0_35 = arith.constant 0 : index
    %22 = vector.load %arg8[%c8, %c0_35] : memref<36x256xf32, #tpu.memory_space<vmem>>, vector<4x256xf32>
    tpu.vector_store %arg8[%c8, %c0_35], %21 {strides = array<i32>} : memref<36x256xf32, #tpu.memory_space<vmem>>, vector<4x256xf32>,
    %c0_36 = arith.constant 0 : index
    %c1_37 = arith.constant 1 : index
    %c0_38 = arith.constant 0 : index
    %23 = vector.load %arg7[%c0_36, %c1_37, %c0_38] : memref<4x18x18xf32, #tpu.memory_space<vmem>>, vector<4x16x16xf32>
    %24 = vector.shape_cast %23 : vector<4x16x16xf32> to vector<4x256xf32>
    %c12 = arith.constant 12 : index
    %c0_39 = arith.constant 0 : index
    %25 = vector.load %arg8[%c12, %c0_39] : memref<36x256xf32, #tpu.memory_space<vmem>>, vector<4x256xf32>
    tpu.vector_store %arg8[%c12, %c0_39], %24 {strides = array<i32>} : memref<36x256xf32, #tpu.memory_space<vmem>>, vector<4x256xf32>,
    %c0_40 = arith.constant 0 : index
    %c1_41 = arith.constant 1 : index
    %c1_42 = arith.constant 1 : index
    %26 = vector.load %arg7[%c0_40, %c1_41, %c1_42] : memref<4x18x18xf32, #tpu.memory_space<vmem>>, vector<4x16x16xf32>
    %27 = vector.shape_cast %26 : vector<4x16x16xf32> to vector<4x256xf32>
    %c16 = arith.constant 16 : index
    %c0_43 = arith.constant 0 : index
    %28 = vector.load %arg8[%c16, %c0_43] : memref<36x256xf32, #tpu.memory_space<vmem>>, vector<4x256xf32>
    tpu.vector_store %arg8[%c16, %c0_43], %27 {strides = array<i32>} : memref<36x256xf32, #tpu.memory_space<vmem>>, vector<4x256xf32>,
    %c0_44 = arith.constant 0 : index
    %c1_45 = arith.constant 1 : index
    %c2_46 = arith.constant 2 : index
    %29 = vector.load %arg7[%c0_44, %c1_45, %c2_46] : memref<4x18x18xf32, #tpu.memory_space<vmem>>, vector<4x16x16xf32>
    %30 = vector.shape_cast %29 : vector<4x16x16xf32> to vector<4x256xf32>
    %c20 = arith.constant 20 : index
    %c0_47 = arith.constant 0 : index
    %31 = vector.load %arg8[%c20, %c0_47] : memref<36x256xf32, #tpu.memory_space<vmem>>, vector<4x256xf32>
    tpu.vector_store %arg8[%c20, %c0_47], %30 {strides = array<i32>} : memref<36x256xf32, #tpu.memory_space<vmem>>, vector<4x256xf32>,
    %c0_48 = arith.constant 0 : index
    %c2_49 = arith.constant 2 : index
    %c0_50 = arith.constant 0 : index
    %32 = vector.load %arg7[%c0_48, %c2_49, %c0_50] : memref<4x18x18xf32, #tpu.memory_space<vmem>>, vector<4x16x16xf32>
    %33 = vector.shape_cast %32 : vector<4x16x16xf32> to vector<4x256xf32>
    %c24 = arith.constant 24 : index
    %c0_51 = arith.constant 0 : index
    %34 = vector.load %arg8[%c24, %c0_51] : memref<36x256xf32, #tpu.memory_space<vmem>>, vector<4x256xf32>
    tpu.vector_store %arg8[%c24, %c0_51], %33 {strides = array<i32>} : memref<36x256xf32, #tpu.memory_space<vmem>>, vector<4x256xf32>,
    %c0_52 = arith.constant 0 : index
    %c2_53 = arith.constant 2 : index
    %c1_54 = arith.constant 1 : index
    %35 = vector.load %arg7[%c0_52, %c2_53, %c1_54] : memref<4x18x18xf32, #tpu.memory_space<vmem>>, vector<4x16x16xf32>
    %36 = vector.shape_cast %35 : vector<4x16x16xf32> to vector<4x256xf32>
    %c28 = arith.constant 28 : index
    %c0_55 = arith.constant 0 : index
    %37 = vector.load %arg8[%c28, %c0_55] : memref<36x256xf32, #tpu.memory_space<vmem>>, vector<4x256xf32>
    tpu.vector_store %arg8[%c28, %c0_55], %36 {strides = array<i32>} : memref<36x256xf32, #tpu.memory_space<vmem>>, vector<4x256xf32>,
    %c0_56 = arith.constant 0 : index
    %c2_57 = arith.constant 2 : index
    %c2_58 = arith.constant 2 : index
    %38 = vector.load %arg7[%c0_56, %c2_57, %c2_58] : memref<4x18x18xf32, #tpu.memory_space<vmem>>, vector<4x16x16xf32>
    %39 = vector.shape_cast %38 : vector<4x16x16xf32> to vector<4x256xf32>
    %c32 = arith.constant 32 : index
    %c0_59 = arith.constant 0 : index
    %40 = vector.load %arg8[%c32, %c0_59] : memref<36x256xf32, #tpu.memory_space<vmem>>, vector<4x256xf32>
    tpu.vector_store %arg8[%c32, %c0_59], %39 {strides = array<i32>} : memref<36x256xf32, #tpu.memory_space<vmem>>, vector<4x256xf32>,
    %c0_60 = arith.constant 0 : index
    %c0_61 = arith.constant 0 : index
    %41 = vector.load %arg8[%c0_60, %c0_61] : memref<36x256xf32, #tpu.memory_space<vmem>>, vector<36x256xf32>
    %cst = arith.constant dense<0.000000e+00> : vector<4x256xf32>
    %42 = tpu.matmul %12, %41, %cst {dimension_numbers = #tpu.dot_dimension_numbers<[1], [0], [0], [1], [0, 0, 1, 1], [], []>} : vector<4x36xf32>, vector<36x256xf32>, vector<4x256xf32> -> vector<4x256xf32>
    %43 = vector.broadcast %13 : vector<4x1xf32> to vector<4x256xf32>
    %44 = arith.addf %42, %43 : vector<4x256xf32>
    %cst_62 = arith.constant dense<0.000000e+00> : vector<4xf32>
    %45 = vector.multi_reduction <add>, %44, %cst_62 [1] : vector<4x256xf32> to vector<4xf32>
    %46 = vector.shape_cast %45 : vector<4xf32> to vector<4x1xf32>
    %47 = arith.mulf %44, %44 : vector<4x256xf32>
    %cst_63 = arith.constant dense<0.000000e+00> : vector<4xf32>
    %48 = vector.multi_reduction <add>, %47, %cst_63 [1] : vector<4x256xf32> to vector<4xf32>
    %49 = vector.shape_cast %48 : vector<4xf32> to vector<4x1xf32>
    %cst_64 = arith.constant 3.906250e-03 : f32
    %50 = vector.broadcast %cst_64 : f32 to vector<4x1xf32>
    %51 = arith.mulf %46, %50 : vector<4x1xf32>
    %cst_65 = arith.constant 3.906250e-03 : f32
    %52 = vector.broadcast %cst_65 : f32 to vector<4x1xf32>
    %53 = arith.mulf %49, %52 : vector<4x1xf32>
    %54 = arith.mulf %51, %51 : vector<4x1xf32>
    %55 = arith.subf %53, %54 : vector<4x1xf32>
    %56 = vector.broadcast %51 : vector<4x1xf32> to vector<4x256xf32>
    %57 = arith.subf %44, %56 : vector<4x256xf32>
    %cst_66 = arith.constant 9.99999974E-6 : f32
    %58 = vector.broadcast %cst_66 : f32 to vector<4x1xf32>
    %59 = arith.addf %55, %58 : vector<4x1xf32>
    %60 = math.rsqrt %59 : vector<4x1xf32>
    %61 = vector.broadcast %60 : vector<4x1xf32> to vector<4x256xf32>
    %62 = arith.mulf %57, %61 : vector<4x256xf32>
    %cst_67 = arith.constant 0.000000e+00 : f32
    %63 = vector.broadcast %cst_67 : f32 to vector<4x256xf32>
    %64 = arith.maximumf %62, %63 : vector<4x256xf32>
    %65 = vector.shape_cast %64 : vector<4x256xf32> to vector<4x16x16xf32>
    %c0_68 = arith.constant 0 : index
    %c1_69 = arith.constant 1 : index
    %c1_70 = arith.constant 1 : index
    %66 = vector.load %arg7[%c0_68, %c1_69, %c1_70] : memref<4x18x18xf32, #tpu.memory_space<vmem>>, vector<4x16x16xf32>
    tpu.vector_store %arg7[%c0_68, %c1_69, %c1_70], %65 {strides = array<i32>} : memref<4x18x18xf32, #tpu.memory_space<vmem>>, vector<4x16x16xf32>,
    %67 = vector.extract_strided_slice %65 {offsets = [0, 0, 1], sizes = [4, 16, 1], strides = [1, 1, 1]} : vector<4x16x16xf32> to vector<4x16x1xf32>
    %c0_71 = arith.constant 0 : index
    %c1_72 = arith.constant 1 : index
    %c0_73 = arith.constant 0 : index
    %68 = vector.load %arg7[%c0_71, %c1_72, %c0_73] : memref<4x18x18xf32, #tpu.memory_space<vmem>>, vector<4x16x1xf32>
    tpu.vector_store %arg7[%c0_71, %c1_72, %c0_73], %67 {strides = array<i32>} : memref<4x18x18xf32, #tpu.memory_space<vmem>>, vector<4x16x1xf32>,
    %69 = vector.extract_strided_slice %65 {offsets = [0, 0, 14], sizes = [4, 16, 1], strides = [1, 1, 1]} : vector<4x16x16xf32> to vector<4x16x1xf32>
    %c0_74 = arith.constant 0 : index
    %c1_75 = arith.constant 1 : index
    %c17_76 = arith.constant 17 : index
    %70 = vector.load %arg7[%c0_74, %c1_75, %c17_76] : memref<4x18x18xf32, #tpu.memory_space<vmem>>, vector<4x16x1xf32>
    tpu.vector_store %arg7[%c0_74, %c1_75, %c17_76], %69 {strides = array<i32>} : memref<4x18x18xf32, #tpu.memory_space<vmem>>, vector<4x16x1xf32>,
    %c0_77 = arith.constant 0 : index
    %c2_78 = arith.constant 2 : index
    %c0_79 = arith.constant 0 : index
    %71 = vector.load %arg7[%c0_77, %c2_78, %c0_79] : memref<4x18x18xf32, #tpu.memory_space<vmem>>, vector<4x1x18xf32>
    %c0_80 = arith.constant 0 : index
    %c0_81 = arith.constant 0 : index
    %c0_82 = arith.constant 0 : index
    %72 = vector.load %arg7[%c0_80, %c0_81, %c0_82] : memref<4x18x18xf32, #tpu.memory_space<vmem>>, vector<4x1x18xf32>
    tpu.vector_store %arg7[%c0_80, %c0_81, %c0_82], %71 {strides = array<i32>} : memref<4x18x18xf32, #tpu.memory_space<vmem>>, vector<4x1x18xf32>,
    %c0_83 = arith.constant 0 : index
    %c15_84 = arith.constant 15 : index
    %c0_85 = arith.constant 0 : index
    %73 = vector.load %arg7[%c0_83, %c15_84, %c0_85] : memref<4x18x18xf32, #tpu.memory_space<vmem>>, vector<4x1x18xf32>
    %c0_86 = arith.constant 0 : index
    %c17_87 = arith.constant 17 : index
    %c0_88 = arith.constant 0 : index
    %74 = vector.load %arg7[%c0_86, %c17_87, %c0_88] : memref<4x18x18xf32, #tpu.memory_space<vmem>>, vector<4x1x18xf32>
    tpu.vector_store %arg7[%c0_86, %c17_87, %c0_88], %73 {strides = array<i32>} : memref<4x18x18xf32, #tpu.memory_space<vmem>>, vector<4x1x18xf32>,
    %c0_89 = arith.constant 0 : index
    %c0_90 = arith.constant 0 : index
    %75 = vector.load %arg4[%c0_89, %c0_90] : memref<4x36xf32, #tpu.memory_space<vmem>>, vector<4x36xf32>
    %c0_91 = arith.constant 0 : index
    %c0_92 = arith.constant 0 : index
    %76 = vector.load %arg5[%c0_91, %c0_92] : memref<4x1xf32, #tpu.memory_space<vmem>>, vector<4x1xf32>
    %c0_93 = arith.constant 0 : index
    %c0_94 = arith.constant 0 : index
    %c0_95 = arith.constant 0 : index
    %77 = vector.load %arg7[%c0_93, %c0_94, %c0_95] : memref<4x18x18xf32, #tpu.memory_space<vmem>>, vector<4x16x16xf32>
    %78 = vector.shape_cast %77 : vector<4x16x16xf32> to vector<4x256xf32>
    %c0_96 = arith.constant 0 : index
    %c0_97 = arith.constant 0 : index
    %79 = vector.load %arg8[%c0_96, %c0_97] : memref<36x256xf32, #tpu.memory_space<vmem>>, vector<4x256xf32>
    tpu.vector_store %arg8[%c0_96, %c0_97], %78 {strides = array<i32>} : memref<36x256xf32, #tpu.memory_space<vmem>>, vector<4x256xf32>,
    %c0_98 = arith.constant 0 : index
    %c0_99 = arith.constant 0 : index
    %c1_100 = arith.constant 1 : index
    %80 = vector.load %arg7[%c0_98, %c0_99, %c1_100] : memref<4x18x18xf32, #tpu.memory_space<vmem>>, vector<4x16x16xf32>
    %81 = vector.shape_cast %80 : vector<4x16x16xf32> to vector<4x256xf32>
    %c4_101 = arith.constant 4 : index
    %c0_102 = arith.constant 0 : index
    %82 = vector.load %arg8[%c4_101, %c0_102] : memref<36x256xf32, #tpu.memory_space<vmem>>, vector<4x256xf32>
    tpu.vector_store %arg8[%c4_101, %c0_102], %81 {strides = array<i32>} : memref<36x256xf32, #tpu.memory_space<vmem>>, vector<4x256xf32>,
    %c0_103 = arith.constant 0 : index
    %c0_104 = arith.constant 0 : index
    %c2_105 = arith.constant 2 : index
    %83 = vector.load %arg7[%c0_103, %c0_104, %c2_105] : memref<4x18x18xf32, #tpu.memory_space<vmem>>, vector<4x16x16xf32>
    %84 = vector.shape_cast %83 : vector<4x16x16xf32> to vector<4x256xf32>
    %c8_106 = arith.constant 8 : index
    %c0_107 = arith.constant 0 : index
    %85 = vector.load %arg8[%c8_106, %c0_107] : memref<36x256xf32, #tpu.memory_space<vmem>>, vector<4x256xf32>
    tpu.vector_store %arg8[%c8_106, %c0_107], %84 {strides = array<i32>} : memref<36x256xf32, #tpu.memory_space<vmem>>, vector<4x256xf32>,
    %c0_108 = arith.constant 0 : index
    %c1_109 = arith.constant 1 : index
    %c0_110 = arith.constant 0 : index
    %86 = vector.load %arg7[%c0_108, %c1_109, %c0_110] : memref<4x18x18xf32, #tpu.memory_space<vmem>>, vector<4x16x16xf32>
    %87 = vector.shape_cast %86 : vector<4x16x16xf32> to vector<4x256xf32>
    %c12_111 = arith.constant 12 : index
    %c0_112 = arith.constant 0 : index
    %88 = vector.load %arg8[%c12_111, %c0_112] : memref<36x256xf32, #tpu.memory_space<vmem>>, vector<4x256xf32>
    tpu.vector_store %arg8[%c12_111, %c0_112], %87 {strides = array<i32>} : memref<36x256xf32, #tpu.memory_space<vmem>>, vector<4x256xf32>,
    %c0_113 = arith.constant 0 : index
    %c1_114 = arith.constant 1 : index
    %c1_115 = arith.constant 1 : index
    %89 = vector.load %arg7[%c0_113, %c1_114, %c1_115] : memref<4x18x18xf32, #tpu.memory_space<vmem>>, vector<4x16x16xf32>
    %90 = vector.shape_cast %89 : vector<4x16x16xf32> to vector<4x256xf32>
    %c16_116 = arith.constant 16 : index
    %c0_117 = arith.constant 0 : index
    %91 = vector.load %arg8[%c16_116, %c0_117] : memref<36x256xf32, #tpu.memory_space<vmem>>, vector<4x256xf32>
    tpu.vector_store %arg8[%c16_116, %c0_117], %90 {strides = array<i32>} : memref<36x256xf32, #tpu.memory_space<vmem>>, vector<4x256xf32>,
    %c0_118 = arith.constant 0 : index
    %c1_119 = arith.constant 1 : index
    %c2_120 = arith.constant 2 : index
    %92 = vector.load %arg7[%c0_118, %c1_119, %c2_120] : memref<4x18x18xf32, #tpu.memory_space<vmem>>, vector<4x16x16xf32>
    %93 = vector.shape_cast %92 : vector<4x16x16xf32> to vector<4x256xf32>
    %c20_121 = arith.constant 20 : index
    %c0_122 = arith.constant 0 : index
    %94 = vector.load %arg8[%c20_121, %c0_122] : memref<36x256xf32, #tpu.memory_space<vmem>>, vector<4x256xf32>
    tpu.vector_store %arg8[%c20_121, %c0_122], %93 {strides = array<i32>} : memref<36x256xf32, #tpu.memory_space<vmem>>, vector<4x256xf32>,
    %c0_123 = arith.constant 0 : index
    %c2_124 = arith.constant 2 : index
    %c0_125 = arith.constant 0 : index
    %95 = vector.load %arg7[%c0_123, %c2_124, %c0_125] : memref<4x18x18xf32, #tpu.memory_space<vmem>>, vector<4x16x16xf32>
    %96 = vector.shape_cast %95 : vector<4x16x16xf32> to vector<4x256xf32>
    %c24_126 = arith.constant 24 : index
    %c0_127 = arith.constant 0 : index
    %97 = vector.load %arg8[%c24_126, %c0_127] : memref<36x256xf32, #tpu.memory_space<vmem>>, vector<4x256xf32>
    tpu.vector_store %arg8[%c24_126, %c0_127], %96 {strides = array<i32>} : memref<36x256xf32, #tpu.memory_space<vmem>>, vector<4x256xf32>,
    %c0_128 = arith.constant 0 : index
    %c2_129 = arith.constant 2 : index
    %c1_130 = arith.constant 1 : index
    %98 = vector.load %arg7[%c0_128, %c2_129, %c1_130] : memref<4x18x18xf32, #tpu.memory_space<vmem>>, vector<4x16x16xf32>
    %99 = vector.shape_cast %98 : vector<4x16x16xf32> to vector<4x256xf32>
    %c28_131 = arith.constant 28 : index
    %c0_132 = arith.constant 0 : index
    %100 = vector.load %arg8[%c28_131, %c0_132] : memref<36x256xf32, #tpu.memory_space<vmem>>, vector<4x256xf32>
    tpu.vector_store %arg8[%c28_131, %c0_132], %99 {strides = array<i32>} : memref<36x256xf32, #tpu.memory_space<vmem>>, vector<4x256xf32>,
    %c0_133 = arith.constant 0 : index
    %c2_134 = arith.constant 2 : index
    %c2_135 = arith.constant 2 : index
    %101 = vector.load %arg7[%c0_133, %c2_134, %c2_135] : memref<4x18x18xf32, #tpu.memory_space<vmem>>, vector<4x16x16xf32>
    %102 = vector.shape_cast %101 : vector<4x16x16xf32> to vector<4x256xf32>
    %c32_136 = arith.constant 32 : index
    %c0_137 = arith.constant 0 : index
    %103 = vector.load %arg8[%c32_136, %c0_137] : memref<36x256xf32, #tpu.memory_space<vmem>>, vector<4x256xf32>
    tpu.vector_store %arg8[%c32_136, %c0_137], %102 {strides = array<i32>} : memref<36x256xf32, #tpu.memory_space<vmem>>, vector<4x256xf32>,
    %c0_138 = arith.constant 0 : index
    %c0_139 = arith.constant 0 : index
    %104 = vector.load %arg8[%c0_138, %c0_139] : memref<36x256xf32, #tpu.memory_space<vmem>>, vector<36x256xf32>
    %cst_140 = arith.constant dense<0.000000e+00> : vector<4x256xf32>
    %105 = tpu.matmul %75, %104, %cst_140 {dimension_numbers = #tpu.dot_dimension_numbers<[1], [0], [0], [1], [0, 0, 1, 1], [], []>} : vector<4x36xf32>, vector<36x256xf32>, vector<4x256xf32> -> vector<4x256xf32>
    %106 = vector.broadcast %76 : vector<4x1xf32> to vector<4x256xf32>
    %107 = arith.addf %105, %106 : vector<4x256xf32>
    %cst_141 = arith.constant dense<0.000000e+00> : vector<4xf32>
    %108 = vector.multi_reduction <add>, %107, %cst_141 [1] : vector<4x256xf32> to vector<4xf32>
    %109 = vector.shape_cast %108 : vector<4xf32> to vector<4x1xf32>
    %110 = arith.mulf %107, %107 : vector<4x256xf32>
    %cst_142 = arith.constant dense<0.000000e+00> : vector<4xf32>
    %111 = vector.multi_reduction <add>, %110, %cst_142 [1] : vector<4x256xf32> to vector<4xf32>
    %112 = vector.shape_cast %111 : vector<4xf32> to vector<4x1xf32>
    %cst_143 = arith.constant 3.906250e-03 : f32
    %113 = vector.broadcast %cst_143 : f32 to vector<4x1xf32>
    %114 = arith.mulf %109, %113 : vector<4x1xf32>
    %cst_144 = arith.constant 3.906250e-03 : f32
    %115 = vector.broadcast %cst_144 : f32 to vector<4x1xf32>
    %116 = arith.mulf %112, %115 : vector<4x1xf32>
    %117 = arith.mulf %114, %114 : vector<4x1xf32>
    %118 = arith.subf %116, %117 : vector<4x1xf32>
    %119 = vector.broadcast %114 : vector<4x1xf32> to vector<4x256xf32>
    %120 = arith.subf %107, %119 : vector<4x256xf32>
    %cst_145 = arith.constant 9.99999974E-6 : f32
    %121 = vector.broadcast %cst_145 : f32 to vector<4x1xf32>
    %122 = arith.addf %118, %121 : vector<4x1xf32>
    %123 = math.rsqrt %122 : vector<4x1xf32>
    %124 = vector.broadcast %123 : vector<4x1xf32> to vector<4x256xf32>
    %125 = arith.mulf %120, %124 : vector<4x256xf32>
    %126 = arith.addf %1, %125 : vector<4x256xf32>
    %c0_146 = arith.constant 0 : index
    %c0_147 = arith.constant 0 : index
    %c0_148 = arith.constant 0 : index
    %127 = vector.load %arg6[%c0_146, %c0_147, %c0_148] : memref<1x4x256xf32, #tpu.memory_space<vmem>>, vector<1x4x256xf32>
    %128 = vector.shape_cast %127 : vector<1x4x256xf32> to vector<4x256xf32>
    %129 = vector.shape_cast %126 : vector<4x256xf32> to vector<1x4x256xf32>
    tpu.vector_store %arg6[%c0_146, %c0_147, %c0_148], %129 {strides = array<i32>} : memref<1x4x256xf32, #tpu.memory_space<vmem>>, vector<1x4x256xf32>,
    return
  }
  func.func @transform_0(%arg0: i32) -> (i32, i32, i32) {
    %c0_i32 = arith.constant 0 : i32
    %c0_i32_0 = arith.constant 0 : i32
    %c0_i32_1 = arith.constant 0 : i32
    return %arg0, %c0_i32, %c0_i32_0 : i32, i32, i32
  }
  func.func @transform_1(%arg0: i32) -> (i32, i32) {
    %c0_i32 = arith.constant 0 : i32
    %c0_i32_0 = arith.constant 0 : i32
    %c0_i32_1 = arith.constant 0 : i32
    return %c0_i32, %c0_i32_0 : i32, i32
  }
  func.func @transform_2(%arg0: i32) -> (i32, i32) {
    %c0_i32 = arith.constant 0 : i32
    %c0_i32_0 = arith.constant 0 : i32
    %c0_i32_1 = arith.constant 0 : i32
    return %c0_i32, %c0_i32_0 : i32, i32
  }
  func.func @transform_3(%arg0: i32) -> (i32, i32) {
    %c0_i32 = arith.constant 0 : i32
    %c0_i32_0 = arith.constant 0 : i32
    %c0_i32_1 = arith.constant 0 : i32
    return %c0_i32, %c0_i32_0 : i32, i32
  }
  func.func @transform_4(%arg0: i32) -> (i32, i32) {
    %c0_i32 = arith.constant 0 : i32
    %c0_i32_0 = arith.constant 0 : i32
    %c0_i32_1 = arith.constant 0 : i32
    return %c0_i32, %c0_i32_0 : i32, i32
  }
  func.func @transform_5(%arg0: i32) -> (i32, i32, i32) {
    %c0_i32 = arith.constant 0 : i32
    %c0_i32_0 = arith.constant 0 : i32
    %c0_i32_1 = arith.constant 0 : i32
    return %arg0, %c0_i32, %c0_i32_0 : i32, i32, i32
  }
}

</mosaic_0001>

<llo_original>
// kernel: tpu_custom_call.1
$region0: #{tpu_custom_call.1}
  #allocation0 [shape = 'u32[]', space=smem, size = 0x4, offset = 0x4, fixed_abs, tag = 'smem constant byte address 0x4 - core index']
  #allocation1 [shape = 'u32[144,128]{1,0:T(1,128)}', space=vmem, size = 0x12000, scoped, tag = 'internal scratch']
  #allocation2 [shape = 'f32[4,18,18]{2,1,0:T(8,128)}', space=vmem, size = 0xc000, scoped, tag = 'scratch operand']
  #allocation3 [shape = 'f32[36,256]{1,0:T(8,128)}', space=vmem, size = 0xa000, scoped, tag = 'scratch operand']
  %s0 = inlined_call_operand.hbm [shape: f32[2,4,256], index: 0, kind: input, shape index: {}]
  %s1 = inlined_call_operand.vmem [shape: f32[4,36], index: 1, kind: input, shape index: {}]
  %s2 = inlined_call_operand.vmem [shape: f32[4,1], index: 2, kind: input, shape index: {}]
  %s3 = inlined_call_operand.vmem [shape: f32[4,36], index: 3, kind: input, shape index: {}]
  %s4 = inlined_call_operand.vmem [shape: f32[4,1], index: 4, kind: input, shape index: {}]
  %s5 = inlined_call_operand.hbm [shape: f32[2,4,256], index: 5, kind: output, shape index: {}]
  %s6 = sld [smem:[#allocation0]]
  $region57: #{tpu_custom_call.1} parent=0
    _
  %s8 = ssub.s32 1, %s6
  %s9 = scalar_select 0, %s8, %s6
  $region1: #{tpu_custom_call.1} parent=0
    #allocation4 [shape = 'u8[8192]{0}', space=vmem, size = 0x2000, scoped, tag = 'input window, operand 0']
    #allocation5 [shape = 's32[2]{0}', space=sflag, size = 0x8, scoped, tag = 'scoped memory for tpu_custom_call.1']
    #allocation6 [shape = 's32[2]{0}', space=sflag, size = 0x8, scoped, tag = 'scoped memory for tpu_custom_call.1']
    #allocation7 [shape = 'u8[8192]{0}', space=vmem, size = 0x2000, scoped, tag = 'output window, operand 0']
    %10 = vsyncpa [#allocation5], 0
    %s11 = scalar_lea.sflag [#allocation5], 1
    %12 = vsyncpa %s11, 0
    %13 = vsyncpa [#allocation6], 0
    %s14 = scalar_lea.sflag [#allocation6], 1
    %15 = vsyncpa %s14, 0
    loop: start=0, step=1, limit=4
    $region2: #{tpu_custom_call.1} parent=1 // loop_pre_header
      _
    $region3: #{tpu_custom_call.1} parent=1 // loop_header
      %s17 = sphi 0, %s21
      %p18 = scmp.ge.s32.totalorder %s17, 4
      %s27 = sphi 0, %s29
      %s30 = sphi 0, %s27
      %s31 = sphi 0, %s30
      %s47 = sphi 0, %s31
      %s51 = sphi 0, %s51
      %s53 = sphi 0, %s51
      %s54 = sphi 0, %s53
      %s68 = sphi 0, %s54
      %s72 = sphi 0, %s72
      %s74 = sphi 0, %s72
      %s75 = sphi 0, %s74
      %s89 = sphi 0, %s75
      %s93 = sphi 0, %s93
      %s95 = sphi 0, %s93
      %s96 = sphi 0, %s95
      %s110 = sphi 0, %s96
      %s114 = sphi 0, %s114
      %s116 = sphi 0, %s114
      %s117 = sphi 0, %s116
      %s131 = sphi 0, %s117
      %s137 = sphi 0, %s139
      %s140 = sphi 0, %s137
      %s141 = sphi 0, %s140
      %s157 = sphi 0, %s141
    $region4: #{tpu_custom_call.1} parent=1 // loop_header_branch
      %20 = sbr.rel (%p18) target = $region8
    $region5: #{tpu_custom_call.1} parent=1 // loop_body
      %s22 = ssub.s32 %s17, 1
      %s23 = ssub.s32 %s17, 2
      %s24 = sadd.s32 %s17, 1
      %s25 = ssub.s32 %s17, %s24
      %p26 = scmp.eq.s32.totalorder %s25, 0
      %s28 = sadd.s32 %s27, 1
      %s29 = scalar_select %p26, %s27, %s28
      %p32 = pneg %p26
      %p33 = scmp.eq.s32.totalorder %s17, 1
      %p34 = por %p32, %p33
      %p35 = scmp.ne.s32.totalorder %s27, %s30
      %p36 = scmp.eq.s32.totalorder %s17, 0
      %p37 = por %p35, %p36
      %p38 = scmp.ne.s32.totalorder %s27, %s30
      %p39 = scmp.eq.s32.totalorder %s22, 1
      %p40 = por %p38, %p39
      %p41 = scmp.ne.s32.totalorder %s30, %s31
      %p42 = scmp.eq.s32.totalorder %s22, 0
      %p43 = por %p41, %p42
      %p44 = scmp.ne.s32.totalorder %s30, %s31
      %p45 = scmp.eq.s32.totalorder %s23, 1
      %p46 = por %p44, %p45
      %p48 = scmp.ne.s32.totalorder %s31, %s47
      %p49 = scmp.eq.s32.totalorder %s23, 0
      %p50 = por %p48, %p49
      %s52 = sadd.s32 %s51, 1
      %p55 = scmp.eq.s32.totalorder %s17, 1
      %p56 = scmp.ne.s32.totalorder %s51, %s53
      %p57 = scmp.eq.s32.totalorder %s17, 0
      %p58 = por %p56, %p57
      %p59 = scmp.ne.s32.totalorder %s51, %s53
      %p60 = scmp.eq.s32.totalorder %s22, 1
      %p61 = por %p59, %p60
      %p62 = scmp.ne.s32.totalorder %s53, %s54
      %p63 = scmp.eq.s32.totalorder %s22, 0
      %p64 = por %p62, %p63
      %p65 = scmp.ne.s32.totalorder %s53, %s54
      %p66 = scmp.eq.s32.totalorder %s23, 1
      %p67 = por %p65, %p66
      %p69 = scmp.ne.s32.totalorder %s54, %s68
      %p70 = scmp.eq.s32.totalorder %s23, 0
      %p71 = por %p69, %p70
      %s73 = sadd.s32 %s72, 1
      %p76 = scmp.eq.s32.totalorder %s17, 1
      %p77 = scmp.ne.s32.totalorder %s72, %s74
      %p78 = scmp.eq.s32.totalorder %s17, 0
      %p79 = por %p77, %p78
      %p80 = scmp.ne.s32.totalorder %s72, %s74
      %p81 = scmp.eq.s32.totalorder %s22, 1
      %p82 = por %p80, %p81
      %p83 = scmp.ne.s32.totalorder %s74, %s75
      %p84 = scmp.eq.s32.totalorder %s22, 0
      %p85 = por %p83, %p84
      %p86 = scmp.ne.s32.totalorder %s74, %s75
      %p87 = scmp.eq.s32.totalorder %s23, 1
      %p88 = por %p86, %p87
      %p90 = scmp.ne.s32.totalorder %s75, %s89
      %p91 = scmp.eq.s32.totalorder %s23, 0
      %p92 = por %p90, %p91
      %s94 = sadd.s32 %s93, 1
      %p97 = scmp.eq.s32.totalorder %s17, 1
      %p98 = scmp.ne.s32.totalorder %s93, %s95
      %p99 = scmp.eq.s32.totalorder %s17, 0
      %p100 = por %p98, %p99
      %p101 = scmp.ne.s32.totalorder %s93, %s95
      %p102 = scmp.eq.s32.totalorder %s22, 1
      %p103 = por %p101, %p102
      %p104 = scmp.ne.s32.totalorder %s95, %s96
      %p105 = scmp.eq.s32.totalorder %s22, 0
      %p106 = por %p104, %p105
      %p107 = scmp.ne.s32.totalorder %s95, %s96
      %p108 = scmp.eq.s32.totalorder %s23, 1
      %p109 = por %p107, %p108
      %p111 = scmp.ne.s32.totalorder %s96, %s110
      %p112 = scmp.eq.s32.totalorder %s23, 0
      %p113 = por %p111, %p112
      %s115 = sadd.s32 %s114, 1
      %p118 = scmp.eq.s32.totalorder %s17, 1
      %p119 = scmp.ne.s32.totalorder %s114, %s116
      %p120 = scmp.eq.s32.totalorder %s17, 0
      %p121 = por %p119, %p120
      %p122 = scmp.ne.s32.totalorder %s114, %s116
      %p123 = scmp.eq.s32.totalorder %s22, 1
      %p124 = por %p122, %p123
      %p125 = scmp.ne.s32.totalorder %s116, %s117
      %p126 = scmp.eq.s32.totalorder %s22, 0
      %p127 = por %p125, %p126
      %p128 = scmp.ne.s32.totalorder %s116, %s117
      %p129 = scmp.eq.s32.totalorder %s23, 1
      %p130 = por %p128, %p129
      %p132 = scmp.ne.s32.totalorder %s117, %s131
      %p133 = scmp.eq.s32.totalorder %s23, 0
      %p134 = por %p132, %p133
      %s135 = ssub.s32 %s17, %s24
      %p136 = scmp.eq.s32.totalorder %s135, 0
      %s138 = sadd.s32 %s137, 1
      %s139 = scalar_select %p136, %s137, %s138
      %p142 = pneg %p136
      %p143 = scmp.eq.s32.totalorder %s17, 1
      %p144 = por %p142, %p143
      %p145 = scmp.ne.s32.totalorder %s137, %s140
      %p146 = scmp.eq.s32.totalorder %s17, 0
      %p147 = por %p145, %p146
      %p148 = scmp.ne.s32.totalorder %s137, %s140
      %p149 = scmp.eq.s32.totalorder %s22, 1
      %p150 = por %p148, %p149
      %p151 = scmp.ne.s32.totalorder %s140, %s141
      %p152 = scmp.eq.s32.totalorder %s22, 0
      %p153 = por %p151, %p152
      %p154 = scmp.ne.s32.totalorder %s140, %s141
      %p155 = scmp.eq.s32.totalorder %s23, 1
      %p156 = por %p154, %p155
      %p158 = scmp.ne.s32.totalorder %s141, %s157
      %p159 = scmp.eq.s32.totalorder %s23, 0
      %p160 = por %p158, %p159
      %p161 = scmp.le.s32.totalorder 1, %s17
      %p162 = scmp.lt.s32.totalorder %s17, 3
      %p163 = pnand %p161, %p162
      %p164 = pneg %p163
      // Predicated region
      $region9: #{tpu_custom_call.1} parent=5 // pred_check
        _
      $region10: #{tpu_custom_call.1} parent=5 // pred_check_branch
        %166 = sbr.rel (%p163) target = $region12
      $region11: #{tpu_custom_call.1} parent=5 // pred_region
        %s167 = ssub.s32 %s17, 1
        // Predicated region
        $region13: #{tpu_custom_call.1} parent=11 // pred_check
          %p168 = pneg %p64
        $region14: #{tpu_custom_call.1} parent=11 // pred_check_branch
          %170 = sbr.rel (%p168) target = $region16
        $region15: #{tpu_custom_call.1} parent=11 // pred_region
          _
        $region16: #{tpu_custom_call.1} parent=11 // pred_fallthru
          _
        // Predicated region
        $region17: #{tpu_custom_call.1} parent=11 // pred_check
          %p171 = pneg %p85
        $region18: #{tpu_custom_call.1} parent=11 // pred_check_branch
          %173 = sbr.rel (%p171) target = $region20
        $region19: #{tpu_custom_call.1} parent=11 // pred_region
          _
        $region20: #{tpu_custom_call.1} parent=11 // pred_fallthru
          _
        // Predicated region
        $region21: #{tpu_custom_call.1} parent=11 // pred_check
          %p174 = pneg %p106
        $region22: #{tpu_custom_call.1} parent=11 // pred_check_branch
          %176 = sbr.rel (%p174) target = $region24
        $region23: #{tpu_custom_call.1} parent=11 // pred_region
          _
        $region24: #{tpu_custom_call.1} parent=11 // pred_fallthru
          _
        // Predicated region
        $region25: #{tpu_custom_call.1} parent=11 // pred_check
          %p177 = pneg %p127
        $region26: #{tpu_custom_call.1} parent=11 // pred_check_branch
          %179 = sbr.rel (%p177) target = $region28
        $region27: #{tpu_custom_call.1} parent=11 // pred_region
          _
        $region28: #{tpu_custom_call.1} parent=11 // pred_fallthru
          _
      $region12: #{tpu_custom_call.1} parent=5 // pred_fallthru
        _
      %p180 = scmp.lt.s32.totalorder %s17, 2
      // Predicated region
      $region29: #{tpu_custom_call.1} parent=5 // pred_check
        %p181 = pneg %p180
      $region30: #{tpu_custom_call.1} parent=5 // pred_check_branch
        %183 = sbr.rel (%p181) target = $region32
      $region31: #{tpu_custom_call.1} parent=5 // pred_region
        // Predicated region
        $region33: #{tpu_custom_call.1} parent=31 // pred_check
          %p184 = pneg %p37
        $region34: #{tpu_custom_call.1} parent=31 // pred_check_branch
          %186 = sbr.rel (%p184) target = $region36
        $region35: #{tpu_custom_call.1} parent=31 // pred_region
          %s187 = sand.u32 %s27, 1
          %s188 = scalar_lea.sflag [#allocation5], %s187
          %s189 = sand.u32 %s27, 1
          %s190 = smul.addr %s189, 8
          %s191 = scalar_lea.vmem [#allocation4], %s190
          %s193 = ssub.s32 128, 128
          %194 = vsyncadd %s188, %s193
          %s195 = smul.addr %s17, 2
          %s196 = smul.addr %s195, 64
          %s197 = scalar_lea.hbm %s0, %s196
          %s199 = sshll.u32 %s191, 4
          %s200 = int_to_ptr.vmem [resolvable:$true] %s199
          %202 = dma.hbm_to_vmem [thread:$0]  %s197, 128, %s200, %s188
        $region36: #{tpu_custom_call.1} parent=31 // pred_fallthru
          _
      $region32: #{tpu_custom_call.1} parent=5 // pred_fallthru
        _
      %p203 = scmp.le.s32.totalorder 1, %s17
      %p204 = scmp.lt.s32.totalorder %s17, 3
      %p205 = pnand %p203, %p204
      %p206 = pneg %p205
      // Predicated region
      $region37: #{tpu_custom_call.1} parent=5 // pred_check
        _
      $region38: #{tpu_custom_call.1} parent=5 // pred_check_branch
        %208 = sbr.rel (%p205) target = $region40
      $region39: #{tpu_custom_call.1} parent=5 // pred_region
        %s209 = ssub.s32 %s17, 1
        %s210 = sand.u32 %s30, 1
        %s211 = scalar_lea.sflag [#allocation5], %s210
        %s212 = sand.u32 %s30, 1
        %s213 = smul.addr %s212, 8
        %s214 = scalar_lea.vmem [#allocation4], %s213
        // Predicated region
        $region41: #{tpu_custom_call.1} parent=39 // pred_check
          %p215 = pneg %p43
        $region42: #{tpu_custom_call.1} parent=39 // pred_check_branch
          %217 = sbr.rel (%p215) target = $region44
        $region43: #{tpu_custom_call.1} parent=39 // pred_region
          %218 = dma.done %s211, 128
        $region44: #{tpu_custom_call.1} parent=39 // pred_fallthru
          _
        %s219 = sand.u32 %s30, 1
        %s220 = scalar_lea.sflag [#allocation5], %s219
        %s221 = sand.u32 %s30, 1
        %s222 = smul.addr %s221, 8
        %s223 = scalar_lea.vmem [#allocation4], %s222
        %p224 = pneg %p43
        %p225 = pneg %p40
        %p226 = pneg %p64
        %p227 = pneg %p61
        %p228 = pneg %p85
        %p229 = pneg %p82
        %p230 = pneg %p106
        %p231 = pneg %p103
        %p232 = pneg %p127
        %p233 = pneg %p124
        %p234 = pneg %p153
        %p235 = pneg %p150
        %s236 = sand.u32 %s140, 1
        %s237 = scalar_lea.sflag [#allocation6], %s236
        %s238 = sand.u32 %s140, 1
        %s239 = smul.addr %s238, 8
        %s240 = scalar_lea.vmem [#allocation7], %s239
        %v241 = vld [vmem:[%s214] sm:$0xff]
        %v243 = vrot.slane %v241, 4
        %245 = vrot.lane.b32.xlu0 %v241, 112
        %v246 = vpop.permute.xlu0 %245
        %v247 = vrot.slane %v246, 4
        %249 = vrot.lane.b32.xlu0 %v241, 96
        %v250 = vpop.permute.xlu0 %249
        %v251 = vrot.slane %v250, 4
        %253 = vrot.lane.b32.xlu0 %v241, 80
        %v254 = vpop.permute.xlu0 %253
        %v255 = vrot.slane %v254, 4
        %257 = vrot.lane.b32.xlu0 %v241, 64
        %v258 = vpop.permute.xlu0 %257
        %v259 = vrot.slane %v258, 4
        %261 = vrot.lane.b32.xlu0 %v241, 48
        %v262 = vpop.permute.xlu0 %261
        %v263 = vrot.slane %v262, 4
        %265 = vrot.lane.b32.xlu0 %v241, 32
        %v266 = vpop.permute.xlu0 %265
        %v267 = vrot.slane %v266, 4
        %269 = vrot.lane.b32.xlu0 %v241, 16
        %v270 = vpop.permute.xlu0 %269
        %v271 = vrot.slane %v270, 4
        %v280 = vcombine.low %v241, %v250
        %v282 = vunpack.c.l.s4 1983009808
        %v283 = vunpack.c.0.s8 %v282
        %v284 = vlaneseq
        %v285 = vshrl.u32 %v284, 7
        %v286 = vsub.s32 %v283, %v285
        %v287 = vrot.slane %v280, %v286
        %v288 = vcombine.low %v246, %v254
        %v290 = vunpack.c.l.s4 1983009808
        %v291 = vunpack.c.0.s8 %v290
        %v292 = vlaneseq
        %v293 = vshrl.u32 %v292, 7
        %v294 = vsub.s32 %v291, %v293
        %v295 = vrot.slane %v288, %v294
        %v296 = vcombine.low %v287, %v295
        %v297 = vcombine.high %v287, %v295
        %v299 = vunpack.c.l.s4 1934713408
        %v300 = vunpack.c.0.s8 %v299
        %v301 = vlaneseq
        %v302 = vshrl.u32 %v301, 7
        %v303 = vsub.s32 %v300, %v302
        %v304 = vrot.slane %v296, %v303
        %v306 = vunpack.c.l.s4 1934713408
        %v307 = vunpack.c.0.s8 %v306
        %v308 = vlaneseq
        %v309 = vshrl.u32 %v308, 7
        %v310 = vsub.s32 %v307, %v309
        %v311 = vrot.slane %v297, %v310
        %v312 = vcombine.high %v304, 0.0
        %v313 = vcombine.high %v311, 0.0
        %v314 = vcombine.low %v258, %v266
        %v316 = vunpack.c.l.s4 1983009808
        %v317 = vunpack.c.0.s8 %v316
        %v318 = vlaneseq
        %v319 = vshrl.u32 %v318, 7
        %v320 = vsub.s32 %v317, %v319
        %v321 = vrot.slane %v314, %v320
        %v322 = vcombine.low %v262, %v270
        %v324 = vunpack.c.l.s4 1983009808
        %v325 = vunpack.c.0.s8 %v324
        %v326 = vlaneseq
        %v327 = vshrl.u32 %v326, 7
        %v328 = vsub.s32 %v325, %v327
        %v329 = vrot.slane %v322, %v328
        %v330 = vcombine.low %v321, %v329
        %v331 = vcombine.high %v321, %v329
        %v333 = vunpack.c.l.s4 1934713408
        %v334 = vunpack.c.0.s8 %v333
        %v335 = vlaneseq
        %v336 = vshrl.u32 %v335, 7
        %v337 = vsub.s32 %v334, %v336
        %v338 = vrot.slane %v330, %v337
        %v340 = vunpack.c.l.s4 1934713408
        %v341 = vunpack.c.0.s8 %v340
        %v342 = vlaneseq
        %v343 = vshrl.u32 %v342, 7
        %v344 = vsub.s32 %v341, %v343
        %v345 = vrot.slane %v331, %v344
        %v346 = vcombine.high %v338, 0.0
        %v347 = vcombine.high %v345, 0.0
        %v348 = vcombine.low %v243, %v251
        %v350 = vunpack.c.l.s4 1983009808
        %v351 = vunpack.c.0.s8 %v350
        %v352 = vlaneseq
        %v353 = vshrl.u32 %v352, 7
        %v354 = vsub.s32 %v351, %v353
        %v355 = vrot.slane %v348, %v354
        %v356 = vcombine.low %v247, %v255
        %v358 = vunpack.c.l.s4 1983009808
        %v359 = vunpack.c.0.s8 %v358
        %v360 = vlaneseq
        %v361 = vshrl.u32 %v360, 7
        %v362 = vsub.s32 %v359, %v361
        %v363 = vrot.slane %v356, %v362
        %v364 = vcombine.low %v355, %v363
        %v365 = vcombine.high %v355, %v363
        %v367 = vunpack.c.l.s4 1934713408
        %v368 = vunpack.c.0.s8 %v367
        %v369 = vlaneseq
        %v370 = vshrl.u32 %v369, 7
        %v371 = vsub.s32 %v368, %v370
        %v372 = vrot.slane %v364, %v371
        %v374 = vunpack.c.l.s4 1934713408
        %v375 = vunpack.c.0.s8 %v374
        %v376 = vlaneseq
        %v377 = vshrl.u32 %v376, 7
        %v378 = vsub.s32 %v375, %v377
        %v379 = vrot.slane %v365, %v378
        %v380 = vcombine.high %v372, 0.0
        %v381 = vcombine.high %v379, 0.0
        %v382 = vcombine.low %v259, %v267
        %v384 = vunpack.c.l.s4 1983009808
        %v385 = vunpack.c.0.s8 %v384
        %v386 = vlaneseq
        %v387 = vshrl.u32 %v386, 7
        %v388 = vsub.s32 %v385, %v387
        %v389 = vrot.slane %v382, %v388
        %v390 = vcombine.low %v263, %v271
        %v392 = vunpack.c.l.s4 1983009808
        %v393 = vunpack.c.0.s8 %v392
        %v394 = vlaneseq
        %v395 = vshrl.u32 %v394, 7
        %v396 = vsub.s32 %v393, %v395
        %v397 = vrot.slane %v390, %v396
        %v398 = vcombine.low %v389, %v397
        %v399 = vcombine.high %v389, %v397
        %v401 = vunpack.c.l.s4 1934713408
        %v402 = vunpack.c.0.s8 %v401
        %v403 = vlaneseq
        %v404 = vshrl.u32 %v403, 7
        %v405 = vsub.s32 %v402, %v404
        %v406 = vrot.slane %v398, %v405
        %v408 = vunpack.c.l.s4 1934713408
        %v409 = vunpack.c.0.s8 %v408
        %v410 = vlaneseq
        %v411 = vshrl.u32 %v410, 7
        %v412 = vsub.s32 %v409, %v411
        %v413 = vrot.slane %v399, %v412
        %v414 = vcombine.high %v406, 0.0
        %v415 = vcombine.high %v413, 0.0
        %v432 = vcombine.low %v304, %v338
        %v433 = vcombine.low %v372, %v406
        %v434 = vcombine.low %v312, %v346
        %v435 = vcombine.low %v380, %v414
        %v436 = vcombine.low %v311, %v345
        %v437 = vcombine.low %v379, %v413
        %v438 = vcombine.low %v313, %v347
        %v439 = vcombine.low %v381, %v415
        %440 = vrot.lane.b32.xlu0 %v432, 1
        %v441 = vpop.permute.xlu0 %440
        %442 = vrot.lane.b32.xlu0 %v433, 1
        %v443 = vpop.permute.xlu0 %442
        %444 = vrot.lane.b32.xlu0 %v434, 1
        %v445 = vpop.permute.xlu0 %444
        %446 = vrot.lane.b32.xlu0 %v435, 1
        %v447 = vpop.permute.xlu0 %446
        %448 = vrot.lane.b32.xlu0 %v436, 1
        %v449 = vpop.permute.xlu0 %448
        %450 = vrot.lane.b32.xlu0 %v437, 1
        %v451 = vpop.permute.xlu0 %450
        %452 = vrot.lane.b32.xlu0 %v438, 1
        %v453 = vpop.permute.xlu0 %452
        %454 = vrot.lane.b32.xlu0 %v439, 1
        %v455 = vpop.permute.xlu0 %454
        %vm464 = vcmask 138248
        %465 = vst.msk [vmem:[#allocation2 + $0x1] sm:$0xff] %vm464, %v441
        %466 = vst.msk [vmem:[#allocation2 + $0x9] sm:$0xff] %vm464, %v443
        %467 = vst.msk [vmem:[#allocation2 + $0x19] sm:$0xff] %vm464, %v445
        %468 = vst.msk [vmem:[#allocation2 + $0x21] sm:$0xff] %vm464, %v447
        %469 = vst.msk [vmem:[#allocation2 + $0x31] sm:$0xff] %vm464, %v449
        %470 = vst.msk [vmem:[#allocation2 + $0x39] sm:$0xff] %vm464, %v451
        %471 = vst.msk [vmem:[#allocation2 + $0x49] sm:$0xff] %vm464, %v453
        %472 = vst.msk [vmem:[#allocation2 + $0x51] sm:$0xff] %vm464, %v455
        %473 = vrot.lane.b32.xlu0 %v432, 127
        %v474 = vpop.permute.xlu0 %473
        %475 = vrot.lane.b32.xlu0 %v433, 127
        %v476 = vpop.permute.xlu0 %475
        %477 = vrot.lane.b32.xlu0 %v434, 127
        %v478 = vpop.permute.xlu0 %477
        %479 = vrot.lane.b32.xlu0 %v435, 127
        %v480 = vpop.permute.xlu0 %479
        %481 = vrot.lane.b32.xlu0 %v436, 127
        %v482 = vpop.permute.xlu0 %481
        %483 = vrot.lane.b32.xlu0 %v437, 127
        %v484 = vpop.permute.xlu0 %483
        %485 = vrot.lane.b32.xlu0 %v438, 127
        %v486 = vpop.permute.xlu0 %485
        %487 = vrot.lane.b32.xlu0 %v439, 127
        %v488 = vpop.permute.xlu0 %487
        %vm497 = vcmask 7168
        %498 = vst.msk [vmem:[#allocation2 + $0x1] sm:$0xff] %vm497, %v474
        %499 = vst.msk [vmem:[#allocation2 + $0x9] sm:$0xff] %vm497, %v476
        %500 = vst.msk [vmem:[#allocation2 + $0x19] sm:$0xff] %vm497, %v478
        %501 = vst.msk [vmem:[#allocation2 + $0x21] sm:$0xff] %vm497, %v480
        %502 = vst.msk [vmem:[#allocation2 + $0x31] sm:$0xff] %vm497, %v482
        %503 = vst.msk [vmem:[#allocation2 + $0x39] sm:$0xff] %vm497, %v484
        %504 = vst.msk [vmem:[#allocation2 + $0x49] sm:$0xff] %vm497, %v486
        %505 = vst.msk [vmem:[#allocation2 + $0x51] sm:$0xff] %vm497, %v488
        %506 = vrot.lane.b32.xlu0 %v432, 3
        %v507 = vpop.permute.xlu0 %506
        %508 = vrot.lane.b32.xlu0 %v433, 3
        %v509 = vpop.permute.xlu0 %508
        %510 = vrot.lane.b32.xlu0 %v434, 3
        %v511 = vpop.permute.xlu0 %510
        %512 = vrot.lane.b32.xlu0 %v435, 3
        %v513 = vpop.permute.xlu0 %512
        %514 = vrot.lane.b32.xlu0 %v436, 3
        %v515 = vpop.permute.xlu0 %514
        %516 = vrot.lane.b32.xlu0 %v437, 3
        %v517 = vpop.permute.xlu0 %516
        %518 = vrot.lane.b32.xlu0 %v438, 3
        %v519 = vpop.permute.xlu0 %518
        %520 = vrot.lane.b32.xlu0 %v439, 3
        %v521 = vpop.permute.xlu0 %520
        %vm530 = vcmask 146568
        %531 = vst.msk [vmem:[#allocation2 + $0x1] sm:$0xff] %vm530, %v507
        %532 = vst.msk [vmem:[#allocation2 + $0x9] sm:$0xff] %vm530, %v509
        %533 = vst.msk [vmem:[#allocation2 + $0x19] sm:$0xff] %vm530, %v511
        %534 = vst.msk [vmem:[#allocation2 + $0x21] sm:$0xff] %vm530, %v513
        %535 = vst.msk [vmem:[#allocation2 + $0x31] sm:$0xff] %vm530, %v515
        %536 = vst.msk [vmem:[#allocation2 + $0x39] sm:$0xff] %vm530, %v517
        %537 = vst.msk [vmem:[#allocation2 + $0x49] sm:$0xff] %vm530, %v519
        %538 = vst.msk [vmem:[#allocation2 + $0x51] sm:$0xff] %vm530, %v521
        %v539 = vld [vmem:[#allocation2 + $0x2] sm:$0x1]
        %v540 = vld [vmem:[#allocation2 + $0x1a] sm:$0x1]
        %v541 = vld [vmem:[#allocation2 + $0x32] sm:$0x1]
        %v542 = vld [vmem:[#allocation2 + $0x4a] sm:$0x1]
        %vm543 = vcmask 139264
        %544 = vst.msk [vmem:[#allocation2] sm:$0x1] %vm543, %v539
        %545 = vst.msk [vmem:[#allocation2 + $0x18] sm:$0x1] %vm543, %v540
        %546 = vst.msk [vmem:[#allocation2 + $0x30] sm:$0x1] %vm543, %v541
        %547 = vst.msk [vmem:[#allocation2 + $0x48] sm:$0x1] %vm543, %v542
        %v548 = vld [vmem:[#allocation2 + $0xf] sm:$0x1]
        %v549 = vld [vmem:[#allocation2 + $0x27] sm:$0x1]
        %v550 = vld [vmem:[#allocation2 + $0x3f] sm:$0x1]
        %v551 = vld [vmem:[#allocation2 + $0x57] sm:$0x1]
        %552 = vst.msk [vmem:[#allocation2 + $0x11] sm:$0x1] %vm543, %v548
        %553 = vst.msk [vmem:[#allocation2 + $0x29] sm:$0x1] %vm543, %v549
        %554 = vst.msk [vmem:[#allocation2 + $0x41] sm:$0x1] %vm543, %v550
        %555 = vst.msk [vmem:[#allocation2 + $0x59] sm:$0x1] %vm543, %v551
        %v556 = vld [vmem:[%s1] sm:$0xf]
        %v557 = vld [vmem:[%s2] sm:$0xf]
        %v558 = vld [vmem:[#allocation2] sm:$0xff]
        %v559 = vld [vmem:[#allocation2 + $0x8] sm:$0xff]
        %v560 = vld [vmem:[#allocation2 + $0x18] sm:$0xff]
        %v561 = vld [vmem:[#allocation2 + $0x20] sm:$0xff]
        %v562 = vld [vmem:[#allocation2 + $0x30] sm:$0xff]
        %v563 = vld [vmem:[#allocation2 + $0x38] sm:$0xff]
        %v564 = vld [vmem:[#allocation2 + $0x48] sm:$0xff]
        %v565 = vld [vmem:[#allocation2 + $0x50] sm:$0xff]
        %v566 = vcombine.low %v558, %v562
        %v567 = vcombine.high %v558, %v562
        %v569 = vunpack.c.l.s4 1983009808
        %v570 = vunpack.c.0.s8 %v569
        %v571 = vlaneseq
        %v572 = vshrl.u32 %v571, 7
        %v573 = vsub.s32 %v570, %v572
        %v574 = vrot.slane %v566, %v573
        %v576 = vunpack.c.l.s4 1983009808
        %v577 = vunpack.c.0.s8 %v576
        %v578 = vlaneseq
        %v579 = vshrl.u32 %v578, 7
        %v580 = vsub.s32 %v577, %v579
        %v581 = vrot.slane %v567, %v580
        %v582 = vcombine.low %v560, %v564
        %v583 = vcombine.high %v560, %v564
        %v585 = vunpack.c.l.s4 1983009808
        %v586 = vunpack.c.0.s8 %v585
        %v587 = vlaneseq
        %v588 = vshrl.u32 %v587, 7
        %v589 = vsub.s32 %v586, %v588
        %v590 = vrot.slane %v582, %v589
        %v592 = vunpack.c.l.s4 1983009808
        %v593 = vunpack.c.0.s8 %v592
        %v594 = vlaneseq
        %v595 = vshrl.u32 %v594, 7
        %v596 = vsub.s32 %v593, %v595
        %v597 = vrot.slane %v583, %v596
        %v598 = vcombine.low %v574, %v590
        %v599 = vcombine.high %v574, %v590
        %v601 = vunpack.c.l.s4 1934713408
        %v602 = vunpack.c.0.s8 %v601
        %v603 = vlaneseq
        %v604 = vshrl.u32 %v603, 7
        %v605 = vsub.s32 %v602, %v604
        %v606 = vrot.slane %v598, %v605
        %v608 = vunpack.c.l.s4 1934713408
        %v609 = vunpack.c.0.s8 %v608
        %v610 = vlaneseq
        %v611 = vshrl.u32 %v610, 7
        %v612 = vsub.s32 %v609, %v611
        %v613 = vrot.slane %v599, %v612
        %v614 = vcombine.low %v581, %v597
        %v615 = vcombine.high %v581, %v597
        %v617 = vunpack.c.l.s4 1934713408
        %v618 = vunpack.c.0.s8 %v617
        %v619 = vlaneseq
        %v620 = vshrl.u32 %v619, 7
        %v621 = vsub.s32 %v618, %v620
        %v622 = vrot.slane %v614, %v621
        %v624 = vunpack.c.l.s4 1934713408
        %v625 = vunpack.c.0.s8 %v624
        %v626 = vlaneseq
        %v627 = vshrl.u32 %v626, 7
        %v628 = vsub.s32 %v625, %v627
        %v629 = vrot.slane %v615, %v628
        %v630 = vcombine.high %v606, 0.0
        %v631 = vcombine.high %v613, 0.0
        %v632 = vcombine.high %v622, 0.0
        %v633 = vcombine.high %v629, 0.0
        %v634 = vcombine.low %v559, %v563
        %v635 = vcombine.high %v559, %v563
        %v637 = vunpack.c.l.s4 1983009808
        %v638 = vunpack.c.0.s8 %v637
        %v639 = vlaneseq
        %v640 = vshrl.u32 %v639, 7
        %v641 = vsub.s32 %v638, %v640
        %v642 = vrot.slane %v634, %v641
        %v644 = vunpack.c.l.s4 1983009808
        %v645 = vunpack.c.0.s8 %v644
        %v646 = vlaneseq
        %v647 = vshrl.u32 %v646, 7
        %v648 = vsub.s32 %v645, %v647
        %v649 = vrot.slane %v635, %v648
        %v650 = vcombine.low %v561, %v565
        %v651 = vcombine.high %v561, %v565
        %v653 = vunpack.c.l.s4 1983009808
        %v654 = vunpack.c.0.s8 %v653
        %v655 = vlaneseq
        %v656 = vshrl.u32 %v655, 7
        %v657 = vsub.s32 %v654, %v656
        %v658 = vrot.slane %v650, %v657
        %v660 = vunpack.c.l.s4 1983009808
        %v661 = vunpack.c.0.s8 %v660
        %v662 = vlaneseq
        %v663 = vshrl.u32 %v662, 7
        %v664 = vsub.s32 %v661, %v663
        %v665 = vrot.slane %v651, %v664
        %v666 = vcombine.low %v642, %v658
        %v667 = vcombine.high %v642, %v658
        %v669 = vunpack.c.l.s4 1934713408
        %v670 = vunpack.c.0.s8 %v669
        %v671 = vlaneseq
        %v672 = vshrl.u32 %v671, 7
        %v673 = vsub.s32 %v670, %v672
        %v674 = vrot.slane %v666, %v673
        %v676 = vunpack.c.l.s4 1934713408
        %v677 = vunpack.c.0.s8 %v676
        %v678 = vlaneseq
        %v679 = vshrl.u32 %v678, 7
        %v680 = vsub.s32 %v677, %v679
        %v681 = vrot.slane %v667, %v680
        %v682 = vcombine.low %v649, %v665
        %v683 = vcombine.high %v649, %v665
        %v685 = vunpack.c.l.s4 1934713408
        %v686 = vunpack.c.0.s8 %v685
        %v687 = vlaneseq
        %v688 = vshrl.u32 %v687, 7
        %v689 = vsub.s32 %v686, %v688
        %v690 = vrot.slane %v682, %v689
        %v692 = vunpack.c.l.s4 1934713408
        %v693 = vunpack.c.0.s8 %v692
        %v694 = vlaneseq
        %v695 = vshrl.u32 %v694, 7
        %v696 = vsub.s32 %v693, %v695
        %v697 = vrot.slane %v683, %v696
        %v698 = vcombine.high %v674, 0.0
        %v699 = vcombine.high %v681, 0.0
        %v700 = vcombine.high %v690, 0.0
        %v701 = vcombine.high %v697, 0.0
        %703 = vrot.lane.b32.xlu0 %v630, 16
        %v704 = vpop.permute.xlu0 %703
        %707 = vrot.lane.b32.xlu0 %v613, 32
        %v708 = vpop.permute.xlu0 %707
        %711 = vrot.lane.b32.xlu0 %v631, 48
        %v712 = vpop.permute.xlu0 %711
        %715 = vrot.lane.b32.xlu0 %v622, 64
        %v716 = vpop.permute.xlu0 %715
        %719 = vrot.lane.b32.xlu0 %v632, 80
        %v720 = vpop.permute.xlu0 %719
        %723 = vrot.lane.b32.xlu0 %v629, 96
        %v724 = vpop.permute.xlu0 %723
        %727 = vrot.lane.b32.xlu0 %v633, 112
        %v728 = vpop.permute.xlu0 %727
        %731 = vrot.lane.b32.xlu0 %v698, 16
        %v732 = vpop.permute.xlu0 %731
        %735 = vrot.lane.b32.xlu0 %v681, 32
        %v736 = vpop.permute.xlu0 %735
        %739 = vrot.lane.b32.xlu0 %v699, 48
        %v740 = vpop.permute.xlu0 %739
        %743 = vrot.lane.b32.xlu0 %v690, 64
        %v744 = vpop.permute.xlu0 %743
        %747 = vrot.lane.b32.xlu0 %v700, 80
        %v748 = vpop.permute.xlu0 %747
        %751 = vrot.lane.b32.xlu0 %v697, 96
        %v752 = vpop.permute.xlu0 %751
        %755 = vrot.lane.b32.xlu0 %v701, 112
        %v756 = vpop.permute.xlu0 %755
        %vm758 = vcmask 130048
        %v759 = vsel %vm758, %v606, %v704
        %vm760 = vcmask 261120
        %v761 = vsel %vm760, %v759, %v708
        %vm762 = vcmask 392192
        %v763 = vsel %vm762, %v761, %v712
        %vm764 = vcmask 523264
        %v765 = vsel %vm764, %v763, %v716
        %vm766 = vcmask 654336
        %v767 = vsel %vm766, %v765, %v720
        %vm768 = vcmask 785408
        %v769 = vsel %vm768, %v767, %v724
        %vm770 = vcmask 916480
        %v771 = vsel %vm770, %v769, %v728
        %v772 = vsel %vm758, %v674, %v732
        %v773 = vsel %vm760, %v772, %v736
        %v774 = vsel %vm762, %v773, %v740
        %v775 = vsel %vm764, %v774, %v744
        %v776 = vsel %vm766, %v775, %v748
        %v777 = vsel %vm768, %v776, %v752
        %v778 = vsel %vm770, %v777, %v756
        %779 = vst [vmem:[#allocation3] sm:$0xf] %v771
        %780 = vst [vmem:[#allocation3 + $0x8] sm:$0xf] %v778
        %v781 = vld [vmem:[#allocation2] sm:$0xff]
        %v782 = vld [vmem:[#allocation2 + $0x8] sm:$0xff]
        %v783 = vld [vmem:[#allocation2 + $0x18] sm:$0xff]
        %v784 = vld [vmem:[#allocation2 + $0x20] sm:$0xff]
        %v785 = vld [vmem:[#allocation2 + $0x30] sm:$0xff]
        %v786 = vld [vmem:[#allocation2 + $0x38] sm:$0xff]
        %v787 = vld [vmem:[#allocation2 + $0x48] sm:$0xff]
        %v788 = vld [vmem:[#allocation2 + $0x50] sm:$0xff]
        %797 = vrot.lane.b32.xlu0 %v781, 127
        %v798 = vpop.permute.xlu0 %797
        %799 = vrot.lane.b32.xlu0 %v782, 127
        %v800 = vpop.permute.xlu0 %799
        %801 = vrot.lane.b32.xlu0 %v783, 127
        %v802 = vpop.permute.xlu0 %801
        %803 = vrot.lane.b32.xlu0 %v784, 127
        %v804 = vpop.permute.xlu0 %803
        %805 = vrot.lane.b32.xlu0 %v785, 127
        %v806 = vpop.permute.xlu0 %805
        %807 = vrot.lane.b32.xlu0 %v786, 127
        %v808 = vpop.permute.xlu0 %807
        %809 = vrot.lane.b32.xlu0 %v787, 127
        %v810 = vpop.permute.xlu0 %809
        %811 = vrot.lane.b32.xlu0 %v788, 127
        %v812 = vpop.permute.xlu0 %811
        %v821 = vcombine.low %v798, %v806
        %v822 = vcombine.high %v798, %v806
        %v824 = vunpack.c.l.s4 1983009808
        %v825 = vunpack.c.0.s8 %v824
        %v826 = vlaneseq
        %v827 = vshrl.u32 %v826, 7
        %v828 = vsub.s32 %v825, %v827
        %v829 = vrot.slane %v821, %v828
        %v831 = vunpack.c.l.s4 1983009808
        %v832 = vunpack.c.0.s8 %v831
        %v833 = vlaneseq
        %v834 = vshrl.u32 %v833, 7
        %v835 = vsub.s32 %v832, %v834
        %v836 = vrot.slane %v822, %v835
        %v837 = vcombine.low %v802, %v810
        %v838 = vcombine.high %v802, %v810
        %v840 = vunpack.c.l.s4 1983009808
        %v841 = vunpack.c.0.s8 %v840
        %v842 = vlaneseq
        %v843 = vshrl.u32 %v842, 7
        %v844 = vsub.s32 %v841, %v843
        %v845 = vrot.slane %v837, %v844
        %v847 = vunpack.c.l.s4 1983009808
        %v848 = vunpack.c.0.s8 %v847
        %v849 = vlaneseq
        %v850 = vshrl.u32 %v849, 7
        %v851 = vsub.s32 %v848, %v850
        %v852 = vrot.slane %v838, %v851
        %v853 = vcombine.low %v829, %v845
        %v854 = vcombine.high %v829, %v845
        %v856 = vunpack.c.l.s4 1934713408
        %v857 = vunpack.c.0.s8 %v856
        %v858 = vlaneseq
        %v859 = vshrl.u32 %v858, 7
        %v860 = vsub.s32 %v857, %v859
        %v861 = vrot.slane %v853, %v860
        %v863 = vunpack.c.l.s4 1934713408
        %v864 = vunpack.c.0.s8 %v863
        %v865 = vlaneseq
        %v866 = vshrl.u32 %v865, 7
        %v867 = vsub.s32 %v864, %v866
        %v868 = vrot.slane %v854, %v867
        %v869 = vcombine.low %v836, %v852
        %v870 = vcombine.high %v836, %v852
        %v872 = vunpack.c.l.s4 1934713408
        %v873 = vunpack.c.0.s8 %v872
        %v874 = vlaneseq
        %v875 = vshrl.u32 %v874, 7
        %v876 = vsub.s32 %v873, %v875
        %v877 = vrot.slane %v869, %v876
        %v879 = vunpack.c.l.s4 1934713408
        %v880 = vunpack.c.0.s8 %v879
        %v881 = vlaneseq
        %v882 = vshrl.u32 %v881, 7
        %v883 = vsub.s32 %v880, %v882
        %v884 = vrot.slane %v870, %v883
        %v885 = vcombine.high %v861, 0.0
        %v886 = vcombine.high %v868, 0.0
        %v887 = vcombine.high %v877, 0.0
        %v888 = vcombine.high %v884, 0.0
        %v889 = vcombine.low %v800, %v808
        %v890 = vcombine.high %v800, %v808
        %v892 = vunpack.c.l.s4 1983009808
        %v893 = vunpack.c.0.s8 %v892
        %v894 = vlaneseq
        %v895 = vshrl.u32 %v894, 7
        %v896 = vsub.s32 %v893, %v895
        %v897 = vrot.slane %v889, %v896
        %v899 = vunpack.c.l.s4 1983009808
        %v900 = vunpack.c.0.s8 %v899
        %v901 = vlaneseq
        %v902 = vshrl.u32 %v901, 7
        %v903 = vsub.s32 %v900, %v902
        %v904 = vrot.slane %v890, %v903
        %v905 = vcombine.low %v804, %v812
        %v906 = vcombine.high %v804, %v812
        %v908 = vunpack.c.l.s4 1983009808
        %v909 = vunpack.c.0.s8 %v908
        %v910 = vlaneseq
        %v911 = vshrl.u32 %v910, 7
        %v912 = vsub.s32 %v909, %v911
        %v913 = vrot.slane %v905, %v912
        %v915 = vunpack.c.l.s4 1983009808
        %v916 = vunpack.c.0.s8 %v915
        %v917 = vlaneseq
        %v918 = vshrl.u32 %v917, 7
        %v919 = vsub.s32 %v916, %v918
        %v920 = vrot.slane %v906, %v919
        %v921 = vcombine.low %v897, %v913
        %v922 = vcombine.high %v897, %v913
        %v924 = vunpack.c.l.s4 1934713408
        %v925 = vunpack.c.0.s8 %v924
        %v926 = vlaneseq
        %v927 = vshrl.u32 %v926, 7
        %v928 = vsub.s32 %v925, %v927
        %v929 = vrot.slane %v921, %v928
        %v931 = vunpack.c.l.s4 1934713408
        %v932 = vunpack.c.0.s8 %v931
        %v933 = vlaneseq
        %v934 = vshrl.u32 %v933, 7
        %v935 = vsub.s32 %v932, %v934
        %v936 = vrot.slane %v922, %v935
        %v937 = vcombine.low %v904, %v920
        %v938 = vcombine.high %v904, %v920
        %v940 = vunpack.c.l.s4 1934713408
        %v941 = vunpack.c.0.s8 %v940
        %v942 = vlaneseq
        %v943 = vshrl.u32 %v942, 7
        %v944 = vsub.s32 %v941, %v943
        %v945 = vrot.slane %v937, %v944
        %v947 = vunpack.c.l.s4 1934713408
        %v948 = vunpack.c.0.s8 %v947
        %v949 = vlaneseq
        %v950 = vshrl.u32 %v949, 7
        %v951 = vsub.s32 %v948, %v950
        %v952 = vrot.slane %v938, %v951
        %v953 = vcombine.high %v929, 0.0
        %v954 = vcombine.high %v936, 0.0
        %v955 = vcombine.high %v945, 0.0
        %v956 = vcombine.high %v952, 0.0
        %958 = vrot.lane.b32.xlu0 %v885, 16
        %v959 = vpop.permute.xlu0 %958
        %962 = vrot.lane.b32.xlu0 %v868, 32
        %v963 = vpop.permute.xlu0 %962
        %966 = vrot.lane.b32.xlu0 %v886, 48
        %v967 = vpop.permute.xlu0 %966
        %970 = vrot.lane.b32.xlu0 %v877, 64
        %v971 = vpop.permute.xlu0 %970
        %974 = vrot.lane.b32.xlu0 %v887, 80
        %v975 = vpop.permute.xlu0 %974
        %978 = vrot.lane.b32.xlu0 %v884, 96
        %v979 = vpop.permute.xlu0 %978
        %982 = vrot.lane.b32.xlu0 %v888, 112
        %v983 = vpop.permute.xlu0 %982
        %986 = vrot.lane.b32.xlu0 %v953, 16
        %v987 = vpop.permute.xlu0 %986
        %990 = vrot.lane.b32.xlu0 %v936, 32
        %v991 = vpop.permute.xlu0 %990
        %994 = vrot.lane.b32.xlu0 %v954, 48
        %v995 = vpop.permute.xlu0 %994
        %998 = vrot.lane.b32.xlu0 %v945, 64
        %v999 = vpop.permute.xlu0 %998
        %1002 = vrot.lane.b32.xlu0 %v955, 80
        %v1003 = vpop.permute.xlu0 %1002
        %1006 = vrot.lane.b32.xlu0 %v952, 96
        %v1007 = vpop.permute.xlu0 %1006
        %1010 = vrot.lane.b32.xlu0 %v956, 112
        %v1011 = vpop.permute.xlu0 %1010
        %v1013 = vsel %vm758, %v861, %v959
        %v1014 = vsel %vm760, %v1013, %v963
        %v1015 = vsel %vm762, %v1014, %v967
        %v1016 = vsel %vm764, %v1015, %v971
        %v1017 = vsel %vm766, %v1016, %v975
        %v1018 = vsel %vm768, %v1017, %v979
        %v1019 = vsel %vm770, %v1018, %v983
        %v1020 = vsel %vm758, %v929, %v987
        %v1021 = vsel %vm760, %v1020, %v991
        %v1022 = vsel %vm762, %v1021, %v995
        %v1023 = vsel %vm764, %v1022, %v999
        %v1024 = vsel %vm766, %v1023, %v1003
        %v1025 = vsel %vm768, %v1024, %v1007
        %v1026 = vsel %vm770, %v1025, %v1011
        %v1029 = vrot.slane %v1019, 4
        %v1030 = vrot.slane %v1026, 4
        %1033 = vst [vmem:[#allocation3] sm:$0xf0] %v1029
        %1034 = vst [vmem:[#allocation3 + $0x8] sm:$0xf0] %v1030
        %v1035 = vld [vmem:[#allocation2] sm:$0xff]
        %v1036 = vld [vmem:[#allocation2 + $0x8] sm:$0xff]
        %v1037 = vld [vmem:[#allocation2 + $0x18] sm:$0xff]
        %v1038 = vld [vmem:[#allocation2 + $0x20] sm:$0xff]
        %v1039 = vld [vmem:[#allocation2 + $0x30] sm:$0xff]
        %v1040 = vld [vmem:[#allocation2 + $0x38] sm:$0xff]
        %v1041 = vld [vmem:[#allocation2 + $0x48] sm:$0xff]
        %v1042 = vld [vmem:[#allocation2 + $0x50] sm:$0xff]
        %1051 = vrot.lane.b32.xlu0 %v1035, 126
        %v1052 = vpop.permute.xlu0 %1051
        %1053 = vrot.lane.b32.xlu0 %v1036, 126
        %v1054 = vpop.permute.xlu0 %1053
        %1055 = vrot.lane.b32.xlu0 %v1037, 126
        %v1056 = vpop.permute.xlu0 %1055
        %1057 = vrot.lane.b32.xlu0 %v1038, 126
        %v1058 = vpop.permute.xlu0 %1057
        %1059 = vrot.lane.b32.xlu0 %v1039, 126
        %v1060 = vpop.permute.xlu0 %1059
        %1061 = vrot.lane.b32.xlu0 %v1040, 126
        %v1062 = vpop.permute.xlu0 %1061
        %1063 = vrot.lane.b32.xlu0 %v1041, 126
        %v1064 = vpop.permute.xlu0 %1063
        %1065 = vrot.lane.b32.xlu0 %v1042, 126
        %v1066 = vpop.permute.xlu0 %1065
        %v1075 = vcombine.low %v1052, %v1060
        %v1076 = vcombine.high %v1052, %v1060
        %v1078 = vunpack.c.l.s4 1983009808
        %v1079 = vunpack.c.0.s8 %v1078
        %v1080 = vlaneseq
        %v1081 = vshrl.u32 %v1080, 7
        %v1082 = vsub.s32 %v1079, %v1081
        %v1083 = vrot.slane %v1075, %v1082
        %v1085 = vunpack.c.l.s4 1983009808
        %v1086 = vunpack.c.0.s8 %v1085
        %v1087 = vlaneseq
        %v1088 = vshrl.u32 %v1087, 7
        %v1089 = vsub.s32 %v1086, %v1088
        %v1090 = vrot.slane %v1076, %v1089
        %v1091 = vcombine.low %v1056, %v1064
        %v1092 = vcombine.high %v1056, %v1064
        %v1094 = vunpack.c.l.s4 1983009808
        %v1095 = vunpack.c.0.s8 %v1094
        %v1096 = vlaneseq
        %v1097 = vshrl.u32 %v1096, 7
        %v1098 = vsub.s32 %v1095, %v1097
        %v1099 = vrot.slane %v1091, %v1098
        %v1101 = vunpack.c.l.s4 1983009808
        %v1102 = vunpack.c.0.s8 %v1101
        %v1103 = vlaneseq
        %v1104 = vshrl.u32 %v1103, 7
        %v1105 = vsub.s32 %v1102, %v1104
        %v1106 = vrot.slane %v1092, %v1105
        %v1107 = vcombine.low %v1083, %v1099
        %v1108 = vcombine.high %v1083, %v1099
        %v1110 = vunpack.c.l.s4 1934713408
        %v1111 = vunpack.c.0.s8 %v1110
        %v1112 = vlaneseq
        %v1113 = vshrl.u32 %v1112, 7
        %v1114 = vsub.s32 %v1111, %v1113
        %v1115 = vrot.slane %v1107, %v1114
        %v1117 = vunpack.c.l.s4 1934713408
        %v1118 = vunpack.c.0.s8 %v1117
        %v1119 = vlaneseq
        %v1120 = vshrl.u32 %v1119, 7
        %v1121 = vsub.s32 %v1118, %v1120
        %v1122 = vrot.slane %v1108, %v1121
        %v1123 = vcombine.low %v1090, %v1106
        %v1124 = vcombine.high %v1090, %v1106
        %v1126 = vunpack.c.l.s4 1934713408
        %v1127 = vunpack.c.0.s8 %v1126
        %v1128 = vlaneseq
        %v1129 = vshrl.u32 %v1128, 7
        %v1130 = vsub.s32 %v1127, %v1129
        %v1131 = vrot.slane %v1123, %v1130
        %v1133 = vunpack.c.l.s4 1934713408
        %v1134 = vunpack.c.0.s8 %v1133
        %v1135 = vlaneseq
        %v1136 = vshrl.u32 %v1135, 7
        %v1137 = vsub.s32 %v1134, %v1136
        %v1138 = vrot.slane %v1124, %v1137
        %v1139 = vcombine.high %v1115, 0.0
        %v1140 = vcombine.high %v1122, 0.0
        %v1141 = vcombine.high %v1131, 0.0
        %v1142 = vcombine.high %v1138, 0.0
        %v1143 = vcombine.low %v1054, %v1062
        %v1144 = vcombine.high %v1054, %v1062
        %v1146 = vunpack.c.l.s4 1983009808
        %v1147 = vunpack.c.0.s8 %v1146
        %v1148 = vlaneseq
        %v1149 = vshrl.u32 %v1148, 7
        %v1150 = vsub.s32 %v1147, %v1149
        %v1151 = vrot.slane %v1143, %v1150
        %v1153 = vunpack.c.l.s4 1983009808
        %v1154 = vunpack.c.0.s8 %v1153
        %v1155 = vlaneseq
        %v1156 = vshrl.u32 %v1155, 7
        %v1157 = vsub.s32 %v1154, %v1156
        %v1158 = vrot.slane %v1144, %v1157
        %v1159 = vcombine.low %v1058, %v1066
        %v1160 = vcombine.high %v1058, %v1066
        %v1162 = vunpack.c.l.s4 1983009808
        %v1163 = vunpack.c.0.s8 %v1162
        %v1164 = vlaneseq
        %v1165 = vshrl.u32 %v1164, 7
        %v1166 = vsub.s32 %v1163, %v1165
        %v1167 = vrot.slane %v1159, %v1166
        %v1169 = vunpack.c.l.s4 1983009808
        %v1170 = vunpack.c.0.s8 %v1169
        %v1171 = vlaneseq
        %v1172 = vshrl.u32 %v1171, 7
        %v1173 = vsub.s32 %v1170, %v1172
        %v1174 = vrot.slane %v1160, %v1173
        %v1175 = vcombine.low %v1151, %v1167
        %v1176 = vcombine.high %v1151, %v1167
        %v1178 = vunpack.c.l.s4 1934713408
        %v1179 = vunpack.c.0.s8 %v1178
        %v1180 = vlaneseq
        %v1181 = vshrl.u32 %v1180, 7
        %v1182 = vsub.s32 %v1179, %v1181
        %v1183 = vrot.slane %v1175, %v1182
        %v1185 = vunpack.c.l.s4 1934713408
        %v1186 = vunpack.c.0.s8 %v1185
        %v1187 = vlaneseq
        %v1188 = vshrl.u32 %v1187, 7
        %v1189 = vsub.s32 %v1186, %v1188
        %v1190 = vrot.slane %v1176, %v1189
        %v1191 = vcombine.low %v1158, %v1174
        %v1192 = vcombine.high %v1158, %v1174
        %v1194 = vunpack.c.l.s4 1934713408
        %v1195 = vunpack.c.0.s8 %v1194
        %v1196 = vlaneseq
        %v1197 = vshrl.u32 %v1196, 7
        %v1198 = vsub.s32 %v1195, %v1197
        %v1199 = vrot.slane %v1191, %v1198
        %v1201 = vunpack.c.l.s4 1934713408
        %v1202 = vunpack.c.0.s8 %v1201
        %v1203 = vlaneseq
        %v1204 = vshrl.u32 %v1203, 7
        %v1205 = vsub.s32 %v1202, %v1204
        %v1206 = vrot.slane %v1192, %v1205
        %v1207 = vcombine.high %v1183, 0.0
        %v1208 = vcombine.high %v1190, 0.0
        %v1209 = vcombine.high %v1199, 0.0
        %v1210 = vcombine.high %v1206, 0.0
        %1212 = vrot.lane.b32.xlu0 %v1139, 16
        %v1213 = vpop.permute.xlu0 %1212
        %1216 = vrot.lane.b32.xlu0 %v1122, 32
        %v1217 = vpop.permute.xlu0 %1216
        %1220 = vrot.lane.b32.xlu0 %v1140, 48
        %v1221 = vpop.permute.xlu0 %1220
        %1224 = vrot.lane.b32.xlu0 %v1131, 64
        %v1225 = vpop.permute.xlu0 %1224
        %1228 = vrot.lane.b32.xlu0 %v1141, 80
        %v1229 = vpop.permute.xlu0 %1228
        %1232 = vrot.lane.b32.xlu0 %v1138, 96
        %v1233 = vpop.permute.xlu0 %1232
        %1236 = vrot.lane.b32.xlu0 %v1142, 112
        %v1237 = vpop.permute.xlu0 %1236
        %1240 = vrot.lane.b32.xlu0 %v1207, 16
        %v1241 = vpop.permute.xlu0 %1240
        %1244 = vrot.lane.b32.xlu0 %v1190, 32
        %v1245 = vpop.permute.xlu0 %1244
        %1248 = vrot.lane.b32.xlu0 %v1208, 48
        %v1249 = vpop.permute.xlu0 %1248
        %1252 = vrot.lane.b32.xlu0 %v1199, 64
        %v1253 = vpop.permute.xlu0 %1252
        %1256 = vrot.lane.b32.xlu0 %v1209, 80
        %v1257 = vpop.permute.xlu0 %1256
        %1260 = vrot.lane.b32.xlu0 %v1206, 96
        %v1261 = vpop.permute.xlu0 %1260
        %1264 = vrot.lane.b32.xlu0 %v1210, 112
        %v1265 = vpop.permute.xlu0 %1264
        %v1267 = vsel %vm758, %v1115, %v1213
        %v1268 = vsel %vm760, %v1267, %v1217
        %v1269 = vsel %vm762, %v1268, %v1221
        %v1270 = vsel %vm764, %v1269, %v1225
        %v1271 = vsel %vm766, %v1270, %v1229
        %v1272 = vsel %vm768, %v1271, %v1233
        %v1273 = vsel %vm770, %v1272, %v1237
        %v1274 = vsel %vm758, %v1183, %v1241
        %v1275 = vsel %vm760, %v1274, %v1245
        %v1276 = vsel %vm762, %v1275, %v1249
        %v1277 = vsel %vm764, %v1276, %v1253
        %v1278 = vsel %vm766, %v1277, %v1257
        %v1279 = vsel %vm768, %v1278, %v1261
        %v1280 = vsel %vm770, %v1279, %v1265
        %1281 = vst [vmem:[#allocation3 + $0x10] sm:$0xf] %v1273
        %1282 = vst [vmem:[#allocation3 + $0x18] sm:$0xf] %v1280
        %v1283 = vld [vmem:[#allocation2 + $0x1] sm:$0xff]
        %v1284 = vld [vmem:[#allocation2 + $0x9] sm:$0xff]
        %v1285 = vld [vmem:[#allocation2 + $0x19] sm:$0xff]
        %v1286 = vld [vmem:[#allocation2 + $0x21] sm:$0xff]
        %v1287 = vld [vmem:[#allocation2 + $0x31] sm:$0xff]
        %v1288 = vld [vmem:[#allocation2 + $0x39] sm:$0xff]
        %v1289 = vld [vmem:[#allocation2 + $0x49] sm:$0xff]
        %v1290 = vld [vmem:[#allocation2 + $0x51] sm:$0xff]
        %v1291 = vcombine.low %v1283, %v1287
        %v1292 = vcombine.high %v1283, %v1287
        %v1294 = vunpack.c.l.s4 1983009808
        %v1295 = vunpack.c.0.s8 %v1294
        %v1296 = vlaneseq
        %v1297 = vshrl.u32 %v1296, 7
        %v1298 = vsub.s32 %v1295, %v1297
        %v1299 = vrot.slane %v1291, %v1298
        %v1301 = vunpack.c.l.s4 1983009808
        %v1302 = vunpack.c.0.s8 %v1301
        %v1303 = vlaneseq
        %v1304 = vshrl.u32 %v1303, 7
        %v1305 = vsub.s32 %v1302, %v1304
        %v1306 = vrot.slane %v1292, %v1305
        %v1307 = vcombine.low %v1285, %v1289
        %v1308 = vcombine.high %v1285, %v1289
        %v1310 = vunpack.c.l.s4 1983009808
        %v1311 = vunpack.c.0.s8 %v1310
        %v1312 = vlaneseq
        %v1313 = vshrl.u32 %v1312, 7
        %v1314 = vsub.s32 %v1311, %v1313
        %v1315 = vrot.slane %v1307, %v1314
        %v1317 = vunpack.c.l.s4 1983009808
        %v1318 = vunpack.c.0.s8 %v1317
        %v1319 = vlaneseq
        %v1320 = vshrl.u32 %v1319, 7
        %v1321 = vsub.s32 %v1318, %v1320
        %v1322 = vrot.slane %v1308, %v1321
        %v1323 = vcombine.low %v1299, %v1315
        %v1324 = vcombine.high %v1299, %v1315
        %v1326 = vunpack.c.l.s4 1934713408
        %v1327 = vunpack.c.0.s8 %v1326
        %v1328 = vlaneseq
        %v1329 = vshrl.u32 %v1328, 7
        %v1330 = vsub.s32 %v1327, %v1329
        %v1331 = vrot.slane %v1323, %v1330
        %v1333 = vunpack.c.l.s4 1934713408
        %v1334 = vunpack.c.0.s8 %v1333
        %v1335 = vlaneseq
        %v1336 = vshrl.u32 %v1335, 7
        %v1337 = vsub.s32 %v1334, %v1336
        %v1338 = vrot.slane %v1324, %v1337
        %v1339 = vcombine.low %v1306, %v1322
        %v1340 = vcombine.high %v1306, %v1322
        %v1342 = vunpack.c.l.s4 1934713408
        %v1343 = vunpack.c.0.s8 %v1342
        %v1344 = vlaneseq
        %v1345 = vshrl.u32 %v1344, 7
        %v1346 = vsub.s32 %v1343, %v1345
        %v1347 = vrot.slane %v1339, %v1346
        %v1349 = vunpack.c.l.s4 1934713408
        %v1350 = vunpack.c.0.s8 %v1349
        %v1351 = vlaneseq
        %v1352 = vshrl.u32 %v1351, 7
        %v1353 = vsub.s32 %v1350, %v1352
        %v1354 = vrot.slane %v1340, %v1353
        %v1355 = vcombine.high %v1331, 0.0
        %v1356 = vcombine.high %v1338, 0.0
        %v1357 = vcombine.high %v1347, 0.0
        %v1358 = vcombine.high %v1354, 0.0
        %v1359 = vcombine.low %v1284, %v1288
        %v1360 = vcombine.high %v1284, %v1288
        %v1362 = vunpack.c.l.s4 1983009808
        %v1363 = vunpack.c.0.s8 %v1362
        %v1364 = vlaneseq
        %v1365 = vshrl.u32 %v1364, 7
        %v1366 = vsub.s32 %v1363, %v1365
        %v1367 = vrot.slane %v1359, %v1366
        %v1369 = vunpack.c.l.s4 1983009808
        %v1370 = vunpack.c.0.s8 %v1369
        %v1371 = vlaneseq
        %v1372 = vshrl.u32 %v1371, 7
        %v1373 = vsub.s32 %v1370, %v1372
        %v1374 = vrot.slane %v1360, %v1373
        %v1375 = vcombine.low %v1286, %v1290
        %v1376 = vcombine.high %v1286, %v1290
        %v1378 = vunpack.c.l.s4 1983009808
        %v1379 = vunpack.c.0.s8 %v1378
        %v1380 = vlaneseq
        %v1381 = vshrl.u32 %v1380, 7
        %v1382 = vsub.s32 %v1379, %v1381
        %v1383 = vrot.slane %v1375, %v1382
        %v1385 = vunpack.c.l.s4 1983009808
        %v1386 = vunpack.c.0.s8 %v1385
        %v1387 = vlaneseq
        %v1388 = vshrl.u32 %v1387, 7
        %v1389 = vsub.s32 %v1386, %v1388
        %v1390 = vrot.slane %v1376, %v1389
        %v1391 = vcombine.low %v1367, %v1383
        %v1392 = vcombine.high %v1367, %v1383
        %v1394 = vunpack.c.l.s4 1934713408
        %v1395 = vunpack.c.0.s8 %v1394
        %v1396 = vlaneseq
        %v1397 = vshrl.u32 %v1396, 7
        %v1398 = vsub.s32 %v1395, %v1397
        %v1399 = vrot.slane %v1391, %v1398
        %v1401 = vunpack.c.l.s4 1934713408
        %v1402 = vunpack.c.0.s8 %v1401
        %v1403 = vlaneseq
        %v1404 = vshrl.u32 %v1403, 7
        %v1405 = vsub.s32 %v1402, %v1404
        %v1406 = vrot.slane %v1392, %v1405
        %v1407 = vcombine.low %v1374, %v1390
        %v1408 = vcombine.high %v1374, %v1390
        %v1410 = vunpack.c.l.s4 1934713408
        %v1411 = vunpack.c.0.s8 %v1410
        %v1412 = vlaneseq
        %v1413 = vshrl.u32 %v1412, 7
        %v1414 = vsub.s32 %v1411, %v1413
        %v1415 = vrot.slane %v1407, %v1414
        %v1417 = vunpack.c.l.s4 1934713408
        %v1418 = vunpack.c.0.s8 %v1417
        %v1419 = vlaneseq
        %v1420 = vshrl.u32 %v1419, 7
        %v1421 = vsub.s32 %v1418, %v1420
        %v1422 = vrot.slane %v1408, %v1421
        %v1423 = vcombine.high %v1399, 0.0
        %v1424 = vcombine.high %v1406, 0.0
        %v1425 = vcombine.high %v1415, 0.0
        %v1426 = vcombine.high %v1422, 0.0
        %1428 = vrot.lane.b32.xlu0 %v1355, 16
        %v1429 = vpop.permute.xlu0 %1428
        %1432 = vrot.lane.b32.xlu0 %v1338, 32
        %v1433 = vpop.permute.xlu0 %1432
        %1436 = vrot.lane.b32.xlu0 %v1356, 48
        %v1437 = vpop.permute.xlu0 %1436
        %1440 = vrot.lane.b32.xlu0 %v1347, 64
        %v1441 = vpop.permute.xlu0 %1440
        %1444 = vrot.lane.b32.xlu0 %v1357, 80
        %v1445 = vpop.permute.xlu0 %1444
        %1448 = vrot.lane.b32.xlu0 %v1354, 96
        %v1449 = vpop.permute.xlu0 %1448
        %1452 = vrot.lane.b32.xlu0 %v1358, 112
        %v1453 = vpop.permute.xlu0 %1452
        %1456 = vrot.lane.b32.xlu0 %v1423, 16
        %v1457 = vpop.permute.xlu0 %1456
        %1460 = vrot.lane.b32.xlu0 %v1406, 32
        %v1461 = vpop.permute.xlu0 %1460
        %1464 = vrot.lane.b32.xlu0 %v1424, 48
        %v1465 = vpop.permute.xlu0 %1464
        %1468 = vrot.lane.b32.xlu0 %v1415, 64
        %v1469 = vpop.permute.xlu0 %1468
        %1472 = vrot.lane.b32.xlu0 %v1425, 80
        %v1473 = vpop.permute.xlu0 %1472
        %1476 = vrot.lane.b32.xlu0 %v1422, 96
        %v1477 = vpop.permute.xlu0 %1476
        %1480 = vrot.lane.b32.xlu0 %v1426, 112
        %v1481 = vpop.permute.xlu0 %1480
        %v1483 = vsel %vm758, %v1331, %v1429
        %v1484 = vsel %vm760, %v1483, %v1433
        %v1485 = vsel %vm762, %v1484, %v1437
        %v1486 = vsel %vm764, %v1485, %v1441
        %v1487 = vsel %vm766, %v1486, %v1445
        %v1488 = vsel %vm768, %v1487, %v1449
        %v1489 = vsel %vm770, %v1488, %v1453
        %v1490 = vsel %vm758, %v1399, %v1457
        %v1491 = vsel %vm760, %v1490, %v1461
        %v1492 = vsel %vm762, %v1491, %v1465
        %v1493 = vsel %vm764, %v1492, %v1469
        %v1494 = vsel %vm766, %v1493, %v1473
        %v1495 = vsel %vm768, %v1494, %v1477
        %v1496 = vsel %vm770, %v1495, %v1481
        %v1499 = vrot.slane %v1489, 4
        %v1500 = vrot.slane %v1496, 4
        %1503 = vst [vmem:[#allocation3 + $0x10] sm:$0xf0] %v1499
        %1504 = vst [vmem:[#allocation3 + $0x18] sm:$0xf0] %v1500
        %v1505 = vld [vmem:[#allocation2 + $0x1] sm:$0xff]
        %v1506 = vld [vmem:[#allocation2 + $0x9] sm:$0xff]
        %v1507 = vld [vmem:[#allocation2 + $0x19] sm:$0xff]
        %v1508 = vld [vmem:[#allocation2 + $0x21] sm:$0xff]
        %v1509 = vld [vmem:[#allocation2 + $0x31] sm:$0xff]
        %v1510 = vld [vmem:[#allocation2 + $0x39] sm:$0xff]
        %v1511 = vld [vmem:[#allocation2 + $0x49] sm:$0xff]
        %v1512 = vld [vmem:[#allocation2 + $0x51] sm:$0xff]
        %1521 = vrot.lane.b32.xlu0 %v1505, 127
        %v1522 = vpop.permute.xlu0 %1521
        %1523 = vrot.lane.b32.xlu0 %v1506, 127
        %v1524 = vpop.permute.xlu0 %1523
        %1525 = vrot.lane.b32.xlu0 %v1507, 127
        %v1526 = vpop.permute.xlu0 %1525
        %1527 = vrot.lane.b32.xlu0 %v1508, 127
        %v1528 = vpop.permute.xlu0 %1527
        %1529 = vrot.lane.b32.xlu0 %v1509, 127
        %v1530 = vpop.permute.xlu0 %1529
        %1531 = vrot.lane.b32.xlu0 %v1510, 127
        %v1532 = vpop.permute.xlu0 %1531
        %1533 = vrot.lane.b32.xlu0 %v1511, 127
        %v1534 = vpop.permute.xlu0 %1533
        %1535 = vrot.lane.b32.xlu0 %v1512, 127
        %v1536 = vpop.permute.xlu0 %1535
        %v1545 = vcombine.low %v1522, %v1530
        %v1546 = vcombine.high %v1522, %v1530
        %v1548 = vunpack.c.l.s4 1983009808
        %v1549 = vunpack.c.0.s8 %v1548
        %v1550 = vlaneseq
        %v1551 = vshrl.u32 %v1550, 7
        %v1552 = vsub.s32 %v1549, %v1551
        %v1553 = vrot.slane %v1545, %v1552
        %v1555 = vunpack.c.l.s4 1983009808
        %v1556 = vunpack.c.0.s8 %v1555
        %v1557 = vlaneseq
        %v1558 = vshrl.u32 %v1557, 7
        %v1559 = vsub.s32 %v1556, %v1558
        %v1560 = vrot.slane %v1546, %v1559
        %v1561 = vcombine.low %v1526, %v1534
        %v1562 = vcombine.high %v1526, %v1534
        %v1564 = vunpack.c.l.s4 1983009808
        %v1565 = vunpack.c.0.s8 %v1564
        %v1566 = vlaneseq
        %v1567 = vshrl.u32 %v1566, 7
        %v1568 = vsub.s32 %v1565, %v1567
        %v1569 = vrot.slane %v1561, %v1568
        %v1571 = vunpack.c.l.s4 1983009808
        %v1572 = vunpack.c.0.s8 %v1571
        %v1573 = vlaneseq
        %v1574 = vshrl.u32 %v1573, 7
        %v1575 = vsub.s32 %v1572, %v1574
        %v1576 = vrot.slane %v1562, %v1575
        %v1577 = vcombine.low %v1553, %v1569
        %v1578 = vcombine.high %v1553, %v1569
        %v1580 = vunpack.c.l.s4 1934713408
        %v1581 = vunpack.c.0.s8 %v1580
        %v1582 = vlaneseq
        %v1583 = vshrl.u32 %v1582, 7
        %v1584 = vsub.s32 %v1581, %v1583
        %v1585 = vrot.slane %v1577, %v1584
        %v1587 = vunpack.c.l.s4 1934713408
        %v1588 = vunpack.c.0.s8 %v1587
        %v1589 = vlaneseq
        %v1590 = vshrl.u32 %v1589, 7
        %v1591 = vsub.s32 %v1588, %v1590
        %v1592 = vrot.slane %v1578, %v1591
        %v1593 = vcombine.low %v1560, %v1576
        %v1594 = vcombine.high %v1560, %v1576
        %v1596 = vunpack.c.l.s4 1934713408
        %v1597 = vunpack.c.0.s8 %v1596
        %v1598 = vlaneseq
        %v1599 = vshrl.u32 %v1598, 7
        %v1600 = vsub.s32 %v1597, %v1599
        %v1601 = vrot.slane %v1593, %v1600
        %v1603 = vunpack.c.l.s4 1934713408
        %v1604 = vunpack.c.0.s8 %v1603
        %v1605 = vlaneseq
        %v1606 = vshrl.u32 %v1605, 7
        %v1607 = vsub.s32 %v1604, %v1606
        %v1608 = vrot.slane %v1594, %v1607
        %v1609 = vcombine.high %v1585, 0.0
        %v1610 = vcombine.high %v1592, 0.0
        %v1611 = vcombine.high %v1601, 0.0
        %v1612 = vcombine.high %v1608, 0.0
        %v1613 = vcombine.low %v1524, %v1532
        %v1614 = vcombine.high %v1524, %v1532
        %v1616 = vunpack.c.l.s4 1983009808
        %v1617 = vunpack.c.0.s8 %v1616
        %v1618 = vlaneseq
        %v1619 = vshrl.u32 %v1618, 7
        %v1620 = vsub.s32 %v1617, %v1619
        %v1621 = vrot.slane %v1613, %v1620
        %v1623 = vunpack.c.l.s4 1983009808
        %v1624 = vunpack.c.0.s8 %v1623
        %v1625 = vlaneseq
        %v1626 = vshrl.u32 %v1625, 7
        %v1627 = vsub.s32 %v1624, %v1626
        %v1628 = vrot.slane %v1614, %v1627
        %v1629 = vcombine.low %v1528, %v1536
        %v1630 = vcombine.high %v1528, %v1536
        %v1632 = vunpack.c.l.s4 1983009808
        %v1633 = vunpack.c.0.s8 %v1632
        %v1634 = vlaneseq
        %v1635 = vshrl.u32 %v1634, 7
        %v1636 = vsub.s32 %v1633, %v1635
        %v1637 = vrot.slane %v1629, %v1636
        %v1639 = vunpack.c.l.s4 1983009808
        %v1640 = vunpack.c.0.s8 %v1639
        %v1641 = vlaneseq
        %v1642 = vshrl.u32 %v1641, 7
        %v1643 = vsub.s32 %v1640, %v1642
        %v1644 = vrot.slane %v1630, %v1643
        %v1645 = vcombine.low %v1621, %v1637
        %v1646 = vcombine.high %v1621, %v1637
        %v1648 = vunpack.c.l.s4 1934713408
        %v1649 = vunpack.c.0.s8 %v1648
        %v1650 = vlaneseq
        %v1651 = vshrl.u32 %v1650, 7
        %v1652 = vsub.s32 %v1649, %v1651
        %v1653 = vrot.slane %v1645, %v1652
        %v1655 = vunpack.c.l.s4 1934713408
        %v1656 = vunpack.c.0.s8 %v1655
        %v1657 = vlaneseq
        %v1658 = vshrl.u32 %v1657, 7
        %v1659 = vsub.s32 %v1656, %v1658
        %v1660 = vrot.slane %v1646, %v1659
        %v1661 = vcombine.low %v1628, %v1644
        %v1662 = vcombine.high %v1628, %v1644
        %v1664 = vunpack.c.l.s4 1934713408
        %v1665 = vunpack.c.0.s8 %v1664
        %v1666 = vlaneseq
        %v1667 = vshrl.u32 %v1666, 7
        %v1668 = vsub.s32 %v1665, %v1667
        %v1669 = vrot.slane %v1661, %v1668
        %v1671 = vunpack.c.l.s4 1934713408
        %v1672 = vunpack.c.0.s8 %v1671
        %v1673 = vlaneseq
        %v1674 = vshrl.u32 %v1673, 7
        %v1675 = vsub.s32 %v1672, %v1674
        %v1676 = vrot.slane %v1662, %v1675
        %v1677 = vcombine.high %v1653, 0.0
        %v1678 = vcombine.high %v1660, 0.0
        %v1679 = vcombine.high %v1669, 0.0
        %v1680 = vcombine.high %v1676, 0.0
        %1682 = vrot.lane.b32.xlu0 %v1609, 16
        %v1683 = vpop.permute.xlu0 %1682
        %1686 = vrot.lane.b32.xlu0 %v1592, 32
        %v1687 = vpop.permute.xlu0 %1686
        %1690 = vrot.lane.b32.xlu0 %v1610, 48
        %v1691 = vpop.permute.xlu0 %1690
        %1694 = vrot.lane.b32.xlu0 %v1601, 64
        %v1695 = vpop.permute.xlu0 %1694
        %1698 = vrot.lane.b32.xlu0 %v1611, 80
        %v1699 = vpop.permute.xlu0 %1698
        %1702 = vrot.lane.b32.xlu0 %v1608, 96
        %v1703 = vpop.permute.xlu0 %1702
        %1706 = vrot.lane.b32.xlu0 %v1612, 112
        %v1707 = vpop.permute.xlu0 %1706
        %1710 = vrot.lane.b32.xlu0 %v1677, 16
        %v1711 = vpop.permute.xlu0 %1710
        %1714 = vrot.lane.b32.xlu0 %v1660, 32
        %v1715 = vpop.permute.xlu0 %1714
        %1718 = vrot.lane.b32.xlu0 %v1678, 48
        %v1719 = vpop.permute.xlu0 %1718
        %1722 = vrot.lane.b32.xlu0 %v1669, 64
        %v1723 = vpop.permute.xlu0 %1722
        %1726 = vrot.lane.b32.xlu0 %v1679, 80
        %v1727 = vpop.permute.xlu0 %1726
        %1730 = vrot.lane.b32.xlu0 %v1676, 96
        %v1731 = vpop.permute.xlu0 %1730
        %1734 = vrot.lane.b32.xlu0 %v1680, 112
        %v1735 = vpop.permute.xlu0 %1734
        %v1737 = vsel %vm758, %v1585, %v1683
        %v1738 = vsel %vm760, %v1737, %v1687
        %v1739 = vsel %vm762, %v1738, %v1691
        %v1740 = vsel %vm764, %v1739, %v1695
        %v1741 = vsel %vm766, %v1740, %v1699
        %v1742 = vsel %vm768, %v1741, %v1703
        %v1743 = vsel %vm770, %v1742, %v1707
        %v1744 = vsel %vm758, %v1653, %v1711
        %v1745 = vsel %vm760, %v1744, %v1715
        %v1746 = vsel %vm762, %v1745, %v1719
        %v1747 = vsel %vm764, %v1746, %v1723
        %v1748 = vsel %vm766, %v1747, %v1727
        %v1749 = vsel %vm768, %v1748, %v1731
        %v1750 = vsel %vm770, %v1749, %v1735
        %1751 = vst [vmem:[#allocation3 + $0x20] sm:$0xf] %v1743
        %1752 = vst [vmem:[#allocation3 + $0x28] sm:$0xf] %v1750
        %v1753 = vld [vmem:[#allocation2 + $0x1] sm:$0xff]
        %v1754 = vld [vmem:[#allocation2 + $0x9] sm:$0xff]
        %v1755 = vld [vmem:[#allocation2 + $0x19] sm:$0xff]
        %v1756 = vld [vmem:[#allocation2 + $0x21] sm:$0xff]
        %v1757 = vld [vmem:[#allocation2 + $0x31] sm:$0xff]
        %v1758 = vld [vmem:[#allocation2 + $0x39] sm:$0xff]
        %v1759 = vld [vmem:[#allocation2 + $0x49] sm:$0xff]
        %v1760 = vld [vmem:[#allocation2 + $0x51] sm:$0xff]
        %1769 = vrot.lane.b32.xlu0 %v1753, 126
        %v1770 = vpop.permute.xlu0 %1769
        %1771 = vrot.lane.b32.xlu0 %v1754, 126
        %v1772 = vpop.permute.xlu0 %1771
        %1773 = vrot.lane.b32.xlu0 %v1755, 126
        %v1774 = vpop.permute.xlu0 %1773
        %1775 = vrot.lane.b32.xlu0 %v1756, 126
        %v1776 = vpop.permute.xlu0 %1775
        %1777 = vrot.lane.b32.xlu0 %v1757, 126
        %v1778 = vpop.permute.xlu0 %1777
        %1779 = vrot.lane.b32.xlu0 %v1758, 126
        %v1780 = vpop.permute.xlu0 %1779
        %1781 = vrot.lane.b32.xlu0 %v1759, 126
        %v1782 = vpop.permute.xlu0 %1781
        %1783 = vrot.lane.b32.xlu0 %v1760, 126
        %v1784 = vpop.permute.xlu0 %1783
        %v1793 = vcombine.low %v1770, %v1778
        %v1794 = vcombine.high %v1770, %v1778
        %v1796 = vunpack.c.l.s4 1983009808
        %v1797 = vunpack.c.0.s8 %v1796
        %v1798 = vlaneseq
        %v1799 = vshrl.u32 %v1798, 7
        %v1800 = vsub.s32 %v1797, %v1799
        %v1801 = vrot.slane %v1793, %v1800
        %v1803 = vunpack.c.l.s4 1983009808
        %v1804 = vunpack.c.0.s8 %v1803
        %v1805 = vlaneseq
        %v1806 = vshrl.u32 %v1805, 7
        %v1807 = vsub.s32 %v1804, %v1806
        %v1808 = vrot.slane %v1794, %v1807
        %v1809 = vcombine.low %v1774, %v1782
        %v1810 = vcombine.high %v1774, %v1782
        %v1812 = vunpack.c.l.s4 1983009808
        %v1813 = vunpack.c.0.s8 %v1812
        %v1814 = vlaneseq
        %v1815 = vshrl.u32 %v1814, 7
        %v1816 = vsub.s32 %v1813, %v1815
        %v1817 = vrot.slane %v1809, %v1816
        %v1819 = vunpack.c.l.s4 1983009808
        %v1820 = vunpack.c.0.s8 %v1819
        %v1821 = vlaneseq
        %v1822 = vshrl.u32 %v1821, 7
        %v1823 = vsub.s32 %v1820, %v1822
        %v1824 = vrot.slane %v1810, %v1823
        %v1825 = vcombine.low %v1801, %v1817
        %v1826 = vcombine.high %v1801, %v1817
        %v1828 = vunpack.c.l.s4 1934713408
        %v1829 = vunpack.c.0.s8 %v1828
        %v1830 = vlaneseq
        %v1831 = vshrl.u32 %v1830, 7
        %v1832 = vsub.s32 %v1829, %v1831
        %v1833 = vrot.slane %v1825, %v1832
        %v1835 = vunpack.c.l.s4 1934713408
        %v1836 = vunpack.c.0.s8 %v1835
        %v1837 = vlaneseq
        %v1838 = vshrl.u32 %v1837, 7
        %v1839 = vsub.s32 %v1836, %v1838
        %v1840 = vrot.slane %v1826, %v1839
        %v1841 = vcombine.low %v1808, %v1824
        %v1842 = vcombine.high %v1808, %v1824
        %v1844 = vunpack.c.l.s4 1934713408
        %v1845 = vunpack.c.0.s8 %v1844
        %v1846 = vlaneseq
        %v1847 = vshrl.u32 %v1846, 7
        %v1848 = vsub.s32 %v1845, %v1847
        %v1849 = vrot.slane %v1841, %v1848
        %v1851 = vunpack.c.l.s4 1934713408
        %v1852 = vunpack.c.0.s8 %v1851
        %v1853 = vlaneseq
        %v1854 = vshrl.u32 %v1853, 7
        %v1855 = vsub.s32 %v1852, %v1854
        %v1856 = vrot.slane %v1842, %v1855
        %v1857 = vcombine.high %v1833, 0.0
        %v1858 = vcombine.high %v1840, 0.0
        %v1859 = vcombine.high %v1849, 0.0
        %v1860 = vcombine.high %v1856, 0.0
        %v1861 = vcombine.low %v1772, %v1780
        %v1862 = vcombine.high %v1772, %v1780
        %v1864 = vunpack.c.l.s4 1983009808
        %v1865 = vunpack.c.0.s8 %v1864
        %v1866 = vlaneseq
        %v1867 = vshrl.u32 %v1866, 7
        %v1868 = vsub.s32 %v1865, %v1867
        %v1869 = vrot.slane %v1861, %v1868
        %v1871 = vunpack.c.l.s4 1983009808
        %v1872 = vunpack.c.0.s8 %v1871
        %v1873 = vlaneseq
        %v1874 = vshrl.u32 %v1873, 7
        %v1875 = vsub.s32 %v1872, %v1874
        %v1876 = vrot.slane %v1862, %v1875
        %v1877 = vcombine.low %v1776, %v1784
        %v1878 = vcombine.high %v1776, %v1784
        %v1880 = vunpack.c.l.s4 1983009808
        %v1881 = vunpack.c.0.s8 %v1880
        %v1882 = vlaneseq
        %v1883 = vshrl.u32 %v1882, 7
        %v1884 = vsub.s32 %v1881, %v1883
        %v1885 = vrot.slane %v1877, %v1884
        %v1887 = vunpack.c.l.s4 1983009808
        %v1888 = vunpack.c.0.s8 %v1887
        %v1889 = vlaneseq
        %v1890 = vshrl.u32 %v1889, 7
        %v1891 = vsub.s32 %v1888, %v1890
        %v1892 = vrot.slane %v1878, %v1891
        %v1893 = vcombine.low %v1869, %v1885
        %v1894 = vcombine.high %v1869, %v1885
        %v1896 = vunpack.c.l.s4 1934713408
        %v1897 = vunpack.c.0.s8 %v1896
        %v1898 = vlaneseq
        %v1899 = vshrl.u32 %v1898, 7
        %v1900 = vsub.s32 %v1897, %v1899
        %v1901 = vrot.slane %v1893, %v1900
        %v1903 = vunpack.c.l.s4 1934713408
        %v1904 = vunpack.c.0.s8 %v1903
        %v1905 = vlaneseq
        %v1906 = vshrl.u32 %v1905, 7
        %v1907 = vsub.s32 %v1904, %v1906
        %v1908 = vrot.slane %v1894, %v1907
        %v1909 = vcombine.low %v1876, %v1892
        %v1910 = vcombine.high %v1876, %v1892
        %v1912 = vunpack.c.l.s4 1934713408
        %v1913 = vunpack.c.0.s8 %v1912
        %v1914 = vlaneseq
        %v1915 = vshrl.u32 %v1914, 7
        %v1916 = vsub.s32 %v1913, %v1915
        %v1917 = vrot.slane %v1909, %v1916
        %v1919 = vunpack.c.l.s4 1934713408
        %v1920 = vunpack.c.0.s8 %v1919
        %v1921 = vlaneseq
        %v1922 = vshrl.u32 %v1921, 7
        %v1923 = vsub.s32 %v1920, %v1922
        %v1924 = vrot.slane %v1910, %v1923
        %v1925 = vcombine.high %v1901, 0.0
        %v1926 = vcombine.high %v1908, 0.0
        %v1927 = vcombine.high %v1917, 0.0
        %v1928 = vcombine.high %v1924, 0.0
        %1930 = vrot.lane.b32.xlu0 %v1857, 16
        %v1931 = vpop.permute.xlu0 %1930
        %1934 = vrot.lane.b32.xlu0 %v1840, 32
        %v1935 = vpop.permute.xlu0 %1934
        %1938 = vrot.lane.b32.xlu0 %v1858, 48
        %v1939 = vpop.permute.xlu0 %1938
        %1942 = vrot.lane.b32.xlu0 %v1849, 64
        %v1943 = vpop.permute.xlu0 %1942
        %1946 = vrot.lane.b32.xlu0 %v1859, 80
        %v1947 = vpop.permute.xlu0 %1946
        %1950 = vrot.lane.b32.xlu0 %v1856, 96
        %v1951 = vpop.permute.xlu0 %1950
        %1954 = vrot.lane.b32.xlu0 %v1860, 112
        %v1955 = vpop.permute.xlu0 %1954
        %1958 = vrot.lane.b32.xlu0 %v1925, 16
        %v1959 = vpop.permute.xlu0 %1958
        %1962 = vrot.lane.b32.xlu0 %v1908, 32
        %v1963 = vpop.permute.xlu0 %1962
        %1966 = vrot.lane.b32.xlu0 %v1926, 48
        %v1967 = vpop.permute.xlu0 %1966
        %1970 = vrot.lane.b32.xlu0 %v1917, 64
        %v1971 = vpop.permute.xlu0 %1970
        %1974 = vrot.lane.b32.xlu0 %v1927, 80
        %v1975 = vpop.permute.xlu0 %1974
        %1978 = vrot.lane.b32.xlu0 %v1924, 96
        %v1979 = vpop.permute.xlu0 %1978
        %1982 = vrot.lane.b32.xlu0 %v1928, 112
        %v1983 = vpop.permute.xlu0 %1982
        %v1985 = vsel %vm758, %v1833, %v1931
        %v1986 = vsel %vm760, %v1985, %v1935
        %v1987 = vsel %vm762, %v1986, %v1939
        %v1988 = vsel %vm764, %v1987, %v1943
        %v1989 = vsel %vm766, %v1988, %v1947
        %v1990 = vsel %vm768, %v1989, %v1951
        %v1991 = vsel %vm770, %v1990, %v1955
        %v1992 = vsel %vm758, %v1901, %v1959
        %v1993 = vsel %vm760, %v1992, %v1963
        %v1994 = vsel %vm762, %v1993, %v1967
        %v1995 = vsel %vm764, %v1994, %v1971
        %v1996 = vsel %vm766, %v1995, %v1975
        %v1997 = vsel %vm768, %v1996, %v1979
        %v1998 = vsel %vm770, %v1997, %v1983
        %v2001 = vrot.slane %v1991, 4
        %v2002 = vrot.slane %v1998, 4
        %2005 = vst [vmem:[#allocation3 + $0x20] sm:$0xf0] %v2001
        %2006 = vst [vmem:[#allocation3 + $0x28] sm:$0xf0] %v2002
        %v2007 = vld [vmem:[#allocation2 + $0x2] sm:$0xff]
        %v2008 = vld [vmem:[#allocation2 + $0xa] sm:$0xff]
        %v2009 = vld [vmem:[#allocation2 + $0x1a] sm:$0xff]
        %v2010 = vld [vmem:[#allocation2 + $0x22] sm:$0xff]
        %v2011 = vld [vmem:[#allocation2 + $0x32] sm:$0xff]
        %v2012 = vld [vmem:[#allocation2 + $0x3a] sm:$0xff]
        %v2013 = vld [vmem:[#allocation2 + $0x4a] sm:$0xff]
        %v2014 = vld [vmem:[#allocation2 + $0x52] sm:$0xff]
        %v2015 = vcombine.low %v2007, %v2011
        %v2016 = vcombine.high %v2007, %v2011
        %v2018 = vunpack.c.l.s4 1983009808
        %v2019 = vunpack.c.0.s8 %v2018
        %v2020 = vlaneseq
        %v2021 = vshrl.u32 %v2020, 7
        %v2022 = vsub.s32 %v2019, %v2021
        %v2023 = vrot.slane %v2015, %v2022
        %v2025 = vunpack.c.l.s4 1983009808
        %v2026 = vunpack.c.0.s8 %v2025
        %v2027 = vlaneseq
        %v2028 = vshrl.u32 %v2027, 7
        %v2029 = vsub.s32 %v2026, %v2028
        %v2030 = vrot.slane %v2016, %v2029
        %v2031 = vcombine.low %v2009, %v2013
        %v2032 = vcombine.high %v2009, %v2013
        %v2034 = vunpack.c.l.s4 1983009808
        %v2035 = vunpack.c.0.s8 %v2034
        %v2036 = vlaneseq
        %v2037 = vshrl.u32 %v2036, 7
        %v2038 = vsub.s32 %v2035, %v2037
        %v2039 = vrot.slane %v2031, %v2038
        %v2041 = vunpack.c.l.s4 1983009808
        %v2042 = vunpack.c.0.s8 %v2041
        %v2043 = vlaneseq
        %v2044 = vshrl.u32 %v2043, 7
        %v2045 = vsub.s32 %v2042, %v2044
        %v2046 = vrot.slane %v2032, %v2045
        %v2047 = vcombine.low %v2023, %v2039
        %v2048 = vcombine.high %v2023, %v2039
        %v2050 = vunpack.c.l.s4 1934713408
        %v2051 = vunpack.c.0.s8 %v2050
        %v2052 = vlaneseq
        %v2053 = vshrl.u32 %v2052, 7
        %v2054 = vsub.s32 %v2051, %v2053
        %v2055 = vrot.slane %v2047, %v2054
        %v2057 = vunpack.c.l.s4 1934713408
        %v2058 = vunpack.c.0.s8 %v2057
        %v2059 = vlaneseq
        %v2060 = vshrl.u32 %v2059, 7
        %v2061 = vsub.s32 %v2058, %v2060
        %v2062 = vrot.slane %v2048, %v2061
        %v2063 = vcombine.low %v2030, %v2046
        %v2064 = vcombine.high %v2030, %v2046
        %v2066 = vunpack.c.l.s4 1934713408
        %v2067 = vunpack.c.0.s8 %v2066
        %v2068 = vlaneseq
        %v2069 = vshrl.u32 %v2068, 7
        %v2070 = vsub.s32 %v2067, %v2069
        %v2071 = vrot.slane %v2063, %v2070
        %v2073 = vunpack.c.l.s4 1934713408
        %v2074 = vunpack.c.0.s8 %v2073
        %v2075 = vlaneseq
        %v2076 = vshrl.u32 %v2075, 7
        %v2077 = vsub.s32 %v2074, %v2076
        %v2078 = vrot.slane %v2064, %v2077
        %v2079 = vcombine.high %v2055, 0.0
        %v2080 = vcombine.high %v2062, 0.0
        %v2081 = vcombine.high %v2071, 0.0
        %v2082 = vcombine.high %v2078, 0.0
        %v2083 = vcombine.low %v2008, %v2012
        %v2084 = vcombine.high %v2008, %v2012
        %v2086 = vunpack.c.l.s4 1983009808
        %v2087 = vunpack.c.0.s8 %v2086
        %v2088 = vlaneseq
        %v2089 = vshrl.u32 %v2088, 7
        %v2090 = vsub.s32 %v2087, %v2089
        %v2091 = vrot.slane %v2083, %v2090
        %v2093 = vunpack.c.l.s4 1983009808
        %v2094 = vunpack.c.0.s8 %v2093
        %v2095 = vlaneseq
        %v2096 = vshrl.u32 %v2095, 7
        %v2097 = vsub.s32 %v2094, %v2096
        %v2098 = vrot.slane %v2084, %v2097
        %v2099 = vcombine.low %v2010, %v2014
        %v2100 = vcombine.high %v2010, %v2014
        %v2102 = vunpack.c.l.s4 1983009808
        %v2103 = vunpack.c.0.s8 %v2102
        %v2104 = vlaneseq
        %v2105 = vshrl.u32 %v2104, 7
        %v2106 = vsub.s32 %v2103, %v2105
        %v2107 = vrot.slane %v2099, %v2106
        %v2109 = vunpack.c.l.s4 1983009808
        %v2110 = vunpack.c.0.s8 %v2109
        %v2111 = vlaneseq
        %v2112 = vshrl.u32 %v2111, 7
        %v2113 = vsub.s32 %v2110, %v2112
        %v2114 = vrot.slane %v2100, %v2113
        %v2115 = vcombine.low %v2091, %v2107
        %v2116 = vcombine.high %v2091, %v2107
        %v2118 = vunpack.c.l.s4 1934713408
        %v2119 = vunpack.c.0.s8 %v2118
        %v2120 = vlaneseq
        %v2121 = vshrl.u32 %v2120, 7
        %v2122 = vsub.s32 %v2119, %v2121
        %v2123 = vrot.slane %v2115, %v2122
        %v2125 = vunpack.c.l.s4 1934713408
        %v2126 = vunpack.c.0.s8 %v2125
        %v2127 = vlaneseq
        %v2128 = vshrl.u32 %v2127, 7
        %v2129 = vsub.s32 %v2126, %v2128
        %v2130 = vrot.slane %v2116, %v2129
        %v2131 = vcombine.low %v2098, %v2114
        %v2132 = vcombine.high %v2098, %v2114
        %v2134 = vunpack.c.l.s4 1934713408
        %v2135 = vunpack.c.0.s8 %v2134
        %v2136 = vlaneseq
        %v2137 = vshrl.u32 %v2136, 7
        %v2138 = vsub.s32 %v2135, %v2137
        %v2139 = vrot.slane %v2131, %v2138
        %v2141 = vunpack.c.l.s4 1934713408
        %v2142 = vunpack.c.0.s8 %v2141
        %v2143 = vlaneseq
        %v2144 = vshrl.u32 %v2143, 7
        %v2145 = vsub.s32 %v2142, %v2144
        %v2146 = vrot.slane %v2132, %v2145
        %v2147 = vcombine.high %v2123, 0.0
        %v2148 = vcombine.high %v2130, 0.0
        %v2149 = vcombine.high %v2139, 0.0
        %v2150 = vcombine.high %v2146, 0.0
        %2152 = vrot.lane.b32.xlu0 %v2079, 16
        %v2153 = vpop.permute.xlu0 %2152
        %2156 = vrot.lane.b32.xlu0 %v2062, 32
        %v2157 = vpop.permute.xlu0 %2156
        %2160 = vrot.lane.b32.xlu0 %v2080, 48
        %v2161 = vpop.permute.xlu0 %2160
        %2164 = vrot.lane.b32.xlu0 %v2071, 64
        %v2165 = vpop.permute.xlu0 %2164
        %2168 = vrot.lane.b32.xlu0 %v2081, 80
        %v2169 = vpop.permute.xlu0 %2168
        %2172 = vrot.lane.b32.xlu0 %v2078, 96
        %v2173 = vpop.permute.xlu0 %2172
        %2176 = vrot.lane.b32.xlu0 %v2082, 112
        %v2177 = vpop.permute.xlu0 %2176
        %2180 = vrot.lane.b32.xlu0 %v2147, 16
        %v2181 = vpop.permute.xlu0 %2180
        %2184 = vrot.lane.b32.xlu0 %v2130, 32
        %v2185 = vpop.permute.xlu0 %2184
        %2188 = vrot.lane.b32.xlu0 %v2148, 48
        %v2189 = vpop.permute.xlu0 %2188
        %2192 = vrot.lane.b32.xlu0 %v2139, 64
        %v2193 = vpop.permute.xlu0 %2192
        %2196 = vrot.lane.b32.xlu0 %v2149, 80
        %v2197 = vpop.permute.xlu0 %2196
        %2200 = vrot.lane.b32.xlu0 %v2146, 96
        %v2201 = vpop.permute.xlu0 %2200
        %2204 = vrot.lane.b32.xlu0 %v2150, 112
        %v2205 = vpop.permute.xlu0 %2204
        %v2207 = vsel %vm758, %v2055, %v2153
        %v2208 = vsel %vm760, %v2207, %v2157
        %v2209 = vsel %vm762, %v2208, %v2161
        %v2210 = vsel %vm764, %v2209, %v2165
        %v2211 = vsel %vm766, %v2210, %v2169
        %v2212 = vsel %vm768, %v2211, %v2173
        %v2213 = vsel %vm770, %v2212, %v2177
        %v2214 = vsel %vm758, %v2123, %v2181
        %v2215 = vsel %vm760, %v2214, %v2185
        %v2216 = vsel %vm762, %v2215, %v2189
        %v2217 = vsel %vm764, %v2216, %v2193
        %v2218 = vsel %vm766, %v2217, %v2197
        %v2219 = vsel %vm768, %v2218, %v2201
        %v2220 = vsel %vm770, %v2219, %v2205
        %2221 = vst [vmem:[#allocation3 + $0x30] sm:$0xf] %v2213
        %2222 = vst [vmem:[#allocation3 + $0x38] sm:$0xf] %v2220
        %v2223 = vld [vmem:[#allocation2 + $0x2] sm:$0xff]
        %v2224 = vld [vmem:[#allocation2 + $0xa] sm:$0xff]
        %v2225 = vld [vmem:[#allocation2 + $0x1a] sm:$0xff]
        %v2226 = vld [vmem:[#allocation2 + $0x22] sm:$0xff]
        %v2227 = vld [vmem:[#allocation2 + $0x32] sm:$0xff]
        %v2228 = vld [vmem:[#allocation2 + $0x3a] sm:$0xff]
        %v2229 = vld [vmem:[#allocation2 + $0x4a] sm:$0xff]
        %v2230 = vld [vmem:[#allocation2 + $0x52] sm:$0xff]
        %2239 = vrot.lane.b32.xlu0 %v2223, 127
        %v2240 = vpop.permute.xlu0 %2239
        %2241 = vrot.lane.b32.xlu0 %v2224, 127
        %v2242 = vpop.permute.xlu0 %2241
        %2243 = vrot.lane.b32.xlu0 %v2225, 127
        %v2244 = vpop.permute.xlu0 %2243
        %2245 = vrot.lane.b32.xlu0 %v2226, 127
        %v2246 = vpop.permute.xlu0 %2245
        %2247 = vrot.lane.b32.xlu0 %v2227, 127
        %v2248 = vpop.permute.xlu0 %2247
        %2249 = vrot.lane.b32.xlu0 %v2228, 127
        %v2250 = vpop.permute.xlu0 %2249
        %2251 = vrot.lane.b32.xlu0 %v2229, 127
        %v2252 = vpop.permute.xlu0 %2251
        %2253 = vrot.lane.b32.xlu0 %v2230, 127
        %v2254 = vpop.permute.xlu0 %2253
        %v2263 = vcombine.low %v2240, %v2248
        %v2264 = vcombine.high %v2240, %v2248
        %v2266 = vunpack.c.l.s4 1983009808
        %v2267 = vunpack.c.0.s8 %v2266
        %v2268 = vlaneseq
        %v2269 = vshrl.u32 %v2268, 7
        %v2270 = vsub.s32 %v2267, %v2269
        %v2271 = vrot.slane %v2263, %v2270
        %v2273 = vunpack.c.l.s4 1983009808
        %v2274 = vunpack.c.0.s8 %v2273
        %v2275 = vlaneseq
        %v2276 = vshrl.u32 %v2275, 7
        %v2277 = vsub.s32 %v2274, %v2276
        %v2278 = vrot.slane %v2264, %v2277
        %v2279 = vcombine.low %v2244, %v2252
        %v2280 = vcombine.high %v2244, %v2252
        %v2282 = vunpack.c.l.s4 1983009808
        %v2283 = vunpack.c.0.s8 %v2282
        %v2284 = vlaneseq
        %v2285 = vshrl.u32 %v2284, 7
        %v2286 = vsub.s32 %v2283, %v2285
        %v2287 = vrot.slane %v2279, %v2286
        %v2289 = vunpack.c.l.s4 1983009808
        %v2290 = vunpack.c.0.s8 %v2289
        %v2291 = vlaneseq
        %v2292 = vshrl.u32 %v2291, 7
        %v2293 = vsub.s32 %v2290, %v2292
        %v2294 = vrot.slane %v2280, %v2293
        %v2295 = vcombine.low %v2271, %v2287
        %v2296 = vcombine.high %v2271, %v2287
        %v2298 = vunpack.c.l.s4 1934713408
        %v2299 = vunpack.c.0.s8 %v2298
        %v2300 = vlaneseq
        %v2301 = vshrl.u32 %v2300, 7
        %v2302 = vsub.s32 %v2299, %v2301
        %v2303 = vrot.slane %v2295, %v2302
        %v2305 = vunpack.c.l.s4 1934713408
        %v2306 = vunpack.c.0.s8 %v2305
        %v2307 = vlaneseq
        %v2308 = vshrl.u32 %v2307, 7
        %v2309 = vsub.s32 %v2306, %v2308
        %v2310 = vrot.slane %v2296, %v2309
        %v2311 = vcombine.low %v2278, %v2294
        %v2312 = vcombine.high %v2278, %v2294
        %v2314 = vunpack.c.l.s4 1934713408
        %v2315 = vunpack.c.0.s8 %v2314
        %v2316 = vlaneseq
        %v2317 = vshrl.u32 %v2316, 7
        %v2318 = vsub.s32 %v2315, %v2317
        %v2319 = vrot.slane %v2311, %v2318
        %v2321 = vunpack.c.l.s4 1934713408
        %v2322 = vunpack.c.0.s8 %v2321
        %v2323 = vlaneseq
        %v2324 = vshrl.u32 %v2323, 7
        %v2325 = vsub.s32 %v2322, %v2324
        %v2326 = vrot.slane %v2312, %v2325
        %v2327 = vcombine.high %v2303, 0.0
        %v2328 = vcombine.high %v2310, 0.0
        %v2329 = vcombine.high %v2319, 0.0
        %v2330 = vcombine.high %v2326, 0.0
        %v2331 = vcombine.low %v2242, %v2250
        %v2332 = vcombine.high %v2242, %v2250
        %v2334 = vunpack.c.l.s4 1983009808
        %v2335 = vunpack.c.0.s8 %v2334
        %v2336 = vlaneseq
        %v2337 = vshrl.u32 %v2336, 7
        %v2338 = vsub.s32 %v2335, %v2337
        %v2339 = vrot.slane %v2331, %v2338
        %v2341 = vunpack.c.l.s4 1983009808
        %v2342 = vunpack.c.0.s8 %v2341
        %v2343 = vlaneseq
        %v2344 = vshrl.u32 %v2343, 7
        %v2345 = vsub.s32 %v2342, %v2344
        %v2346 = vrot.slane %v2332, %v2345
        %v2347 = vcombine.low %v2246, %v2254
        %v2348 = vcombine.high %v2246, %v2254
        %v2350 = vunpack.c.l.s4 1983009808
        %v2351 = vunpack.c.0.s8 %v2350
        %v2352 = vlaneseq
        %v2353 = vshrl.u32 %v2352, 7
        %v2354 = vsub.s32 %v2351, %v2353
        %v2355 = vrot.slane %v2347, %v2354
        %v2357 = vunpack.c.l.s4 1983009808
        %v2358 = vunpack.c.0.s8 %v2357
        %v2359 = vlaneseq
        %v2360 = vshrl.u32 %v2359, 7
        %v2361 = vsub.s32 %v2358, %v2360
        %v2362 = vrot.slane %v2348, %v2361
        %v2363 = vcombine.low %v2339, %v2355
        %v2364 = vcombine.high %v2339, %v2355
        %v2366 = vunpack.c.l.s4 1934713408
        %v2367 = vunpack.c.0.s8 %v2366
        %v2368 = vlaneseq
        %v2369 = vshrl.u32 %v2368, 7
        %v2370 = vsub.s32 %v2367, %v2369
        %v2371 = vrot.slane %v2363, %v2370
        %v2373 = vunpack.c.l.s4 1934713408
        %v2374 = vunpack.c.0.s8 %v2373
        %v2375 = vlaneseq
        %v2376 = vshrl.u32 %v2375, 7
        %v2377 = vsub.s32 %v2374, %v2376
        %v2378 = vrot.slane %v2364, %v2377
        %v2379 = vcombine.low %v2346, %v2362
        %v2380 = vcombine.high %v2346, %v2362
        %v2382 = vunpack.c.l.s4 1934713408
        %v2383 = vunpack.c.0.s8 %v2382
        %v2384 = vlaneseq
        %v2385 = vshrl.u32 %v2384, 7
        %v2386 = vsub.s32 %v2383, %v2385
        %v2387 = vrot.slane %v2379, %v2386
        %v2389 = vunpack.c.l.s4 1934713408
        %v2390 = vunpack.c.0.s8 %v2389
        %v2391 = vlaneseq
        %v2392 = vshrl.u32 %v2391, 7
        %v2393 = vsub.s32 %v2390, %v2392
        %v2394 = vrot.slane %v2380, %v2393
        %v2395 = vcombine.high %v2371, 0.0
        %v2396 = vcombine.high %v2378, 0.0
        %v2397 = vcombine.high %v2387, 0.0
        %v2398 = vcombine.high %v2394, 0.0
        %2400 = vrot.lane.b32.xlu0 %v2327, 16
        %v2401 = vpop.permute.xlu0 %2400
        %2404 = vrot.lane.b32.xlu0 %v2310, 32
        %v2405 = vpop.permute.xlu0 %2404
        %2408 = vrot.lane.b32.xlu0 %v2328, 48
        %v2409 = vpop.permute.xlu0 %2408
        %2412 = vrot.lane.b32.xlu0 %v2319, 64
        %v2413 = vpop.permute.xlu0 %2412
        %2416 = vrot.lane.b32.xlu0 %v2329, 80
        %v2417 = vpop.permute.xlu0 %2416
        %2420 = vrot.lane.b32.xlu0 %v2326, 96
        %v2421 = vpop.permute.xlu0 %2420
        %2424 = vrot.lane.b32.xlu0 %v2330, 112
        %v2425 = vpop.permute.xlu0 %2424
        %2428 = vrot.lane.b32.xlu0 %v2395, 16
        %v2429 = vpop.permute.xlu0 %2428
        %2432 = vrot.lane.b32.xlu0 %v2378, 32
        %v2433 = vpop.permute.xlu0 %2432
        %2436 = vrot.lane.b32.xlu0 %v2396, 48
        %v2437 = vpop.permute.xlu0 %2436
        %2440 = vrot.lane.b32.xlu0 %v2387, 64
        %v2441 = vpop.permute.xlu0 %2440
        %2444 = vrot.lane.b32.xlu0 %v2397, 80
        %v2445 = vpop.permute.xlu0 %2444
        %2448 = vrot.lane.b32.xlu0 %v2394, 96
        %v2449 = vpop.permute.xlu0 %2448
        %2452 = vrot.lane.b32.xlu0 %v2398, 112
        %v2453 = vpop.permute.xlu0 %2452
        %v2455 = vsel %vm758, %v2303, %v2401
        %v2456 = vsel %vm760, %v2455, %v2405
        %v2457 = vsel %vm762, %v2456, %v2409
        %v2458 = vsel %vm764, %v2457, %v2413
        %v2459 = vsel %vm766, %v2458, %v2417
        %v2460 = vsel %vm768, %v2459, %v2421
        %v2461 = vsel %vm770, %v2460, %v2425
        %v2462 = vsel %vm758, %v2371, %v2429
        %v2463 = vsel %vm760, %v2462, %v2433
        %v2464 = vsel %vm762, %v2463, %v2437
        %v2465 = vsel %vm764, %v2464, %v2441
        %v2466 = vsel %vm766, %v2465, %v2445
        %v2467 = vsel %vm768, %v2466, %v2449
        %v2468 = vsel %vm770, %v2467, %v2453
        %v2471 = vrot.slane %v2461, 4
        %v2472 = vrot.slane %v2468, 4
        %2475 = vst [vmem:[#allocation3 + $0x30] sm:$0xf0] %v2471
        %2476 = vst [vmem:[#allocation3 + $0x38] sm:$0xf0] %v2472
        %v2477 = vld [vmem:[#allocation2 + $0x2] sm:$0xff]
        %v2478 = vld [vmem:[#allocation2 + $0xa] sm:$0xff]
        %v2479 = vld [vmem:[#allocation2 + $0x1a] sm:$0xff]
        %v2480 = vld [vmem:[#allocation2 + $0x22] sm:$0xff]
        %v2481 = vld [vmem:[#allocation2 + $0x32] sm:$0xff]
        %v2482 = vld [vmem:[#allocation2 + $0x3a] sm:$0xff]
        %v2483 = vld [vmem:[#allocation2 + $0x4a] sm:$0xff]
        %v2484 = vld [vmem:[#allocation2 + $0x52] sm:$0xff]
        %2493 = vrot.lane.b32.xlu0 %v2477, 126
        %v2494 = vpop.permute.xlu0 %2493
        %2495 = vrot.lane.b32.xlu0 %v2478, 126
        %v2496 = vpop.permute.xlu0 %2495
        %2497 = vrot.lane.b32.xlu0 %v2479, 126
        %v2498 = vpop.permute.xlu0 %2497
        %2499 = vrot.lane.b32.xlu0 %v2480, 126
        %v2500 = vpop.permute.xlu0 %2499
        %2501 = vrot.lane.b32.xlu0 %v2481, 126
        %v2502 = vpop.permute.xlu0 %2501
        %2503 = vrot.lane.b32.xlu0 %v2482, 126
        %v2504 = vpop.permute.xlu0 %2503
        %2505 = vrot.lane.b32.xlu0 %v2483, 126
        %v2506 = vpop.permute.xlu0 %2505
        %2507 = vrot.lane.b32.xlu0 %v2484, 126
        %v2508 = vpop.permute.xlu0 %2507
        %v2517 = vcombine.low %v2494, %v2502
        %v2518 = vcombine.high %v2494, %v2502
        %v2520 = vunpack.c.l.s4 1983009808
        %v2521 = vunpack.c.0.s8 %v2520
        %v2522 = vlaneseq
        %v2523 = vshrl.u32 %v2522, 7
        %v2524 = vsub.s32 %v2521, %v2523
        %v2525 = vrot.slane %v2517, %v2524
        %v2527 = vunpack.c.l.s4 1983009808
        %v2528 = vunpack.c.0.s8 %v2527
        %v2529 = vlaneseq
        %v2530 = vshrl.u32 %v2529, 7
        %v2531 = vsub.s32 %v2528, %v2530
        %v2532 = vrot.slane %v2518, %v2531
        %v2533 = vcombine.low %v2498, %v2506
        %v2534 = vcombine.high %v2498, %v2506
        %v2536 = vunpack.c.l.s4 1983009808
        %v2537 = vunpack.c.0.s8 %v2536
        %v2538 = vlaneseq
        %v2539 = vshrl.u32 %v2538, 7
        %v2540 = vsub.s32 %v2537, %v2539
        %v2541 = vrot.slane %v2533, %v2540
        %v2543 = vunpack.c.l.s4 1983009808
        %v2544 = vunpack.c.0.s8 %v2543
        %v2545 = vlaneseq
        %v2546 = vshrl.u32 %v2545, 7
        %v2547 = vsub.s32 %v2544, %v2546
        %v2548 = vrot.slane %v2534, %v2547
        %v2549 = vcombine.low %v2525, %v2541
        %v2550 = vcombine.high %v2525, %v2541
        %v2552 = vunpack.c.l.s4 1934713408
        %v2553 = vunpack.c.0.s8 %v2552
        %v2554 = vlaneseq
        %v2555 = vshrl.u32 %v2554, 7
        %v2556 = vsub.s32 %v2553, %v2555
        %v2557 = vrot.slane %v2549, %v2556
        %v2559 = vunpack.c.l.s4 1934713408
        %v2560 = vunpack.c.0.s8 %v2559
        %v2561 = vlaneseq
        %v2562 = vshrl.u32 %v2561, 7
        %v2563 = vsub.s32 %v2560, %v2562
        %v2564 = vrot.slane %v2550, %v2563
        %v2565 = vcombine.low %v2532, %v2548
        %v2566 = vcombine.high %v2532, %v2548
        %v2568 = vunpack.c.l.s4 1934713408
        %v2569 = vunpack.c.0.s8 %v2568
        %v2570 = vlaneseq
        %v2571 = vshrl.u32 %v2570, 7
        %v2572 = vsub.s32 %v2569, %v2571
        %v2573 = vrot.slane %v2565, %v2572
        %v2575 = vunpack.c.l.s4 1934713408
        %v2576 = vunpack.c.0.s8 %v2575
        %v2577 = vlaneseq
        %v2578 = vshrl.u32 %v2577, 7
        %v2579 = vsub.s32 %v2576, %v2578
        %v2580 = vrot.slane %v2566, %v2579
        %v2581 = vcombine.high %v2557, 0.0
        %v2582 = vcombine.high %v2564, 0.0
        %v2583 = vcombine.high %v2573, 0.0
        %v2584 = vcombine.high %v2580, 0.0
        %v2585 = vcombine.low %v2496, %v2504
        %v2586 = vcombine.high %v2496, %v2504
        %v2588 = vunpack.c.l.s4 1983009808
        %v2589 = vunpack.c.0.s8 %v2588
        %v2590 = vlaneseq
        %v2591 = vshrl.u32 %v2590, 7
        %v2592 = vsub.s32 %v2589, %v2591
        %v2593 = vrot.slane %v2585, %v2592
        %v2595 = vunpack.c.l.s4 1983009808
        %v2596 = vunpack.c.0.s8 %v2595
        %v2597 = vlaneseq
        %v2598 = vshrl.u32 %v2597, 7
        %v2599 = vsub.s32 %v2596, %v2598
        %v2600 = vrot.slane %v2586, %v2599
        %v2601 = vcombine.low %v2500, %v2508
        %v2602 = vcombine.high %v2500, %v2508
        %v2604 = vunpack.c.l.s4 1983009808
        %v2605 = vunpack.c.0.s8 %v2604
        %v2606 = vlaneseq
        %v2607 = vshrl.u32 %v2606, 7
        %v2608 = vsub.s32 %v2605, %v2607
        %v2609 = vrot.slane %v2601, %v2608
        %v2611 = vunpack.c.l.s4 1983009808
        %v2612 = vunpack.c.0.s8 %v2611
        %v2613 = vlaneseq
        %v2614 = vshrl.u32 %v2613, 7
        %v2615 = vsub.s32 %v2612, %v2614
        %v2616 = vrot.slane %v2602, %v2615
        %v2617 = vcombine.low %v2593, %v2609
        %v2618 = vcombine.high %v2593, %v2609
        %v2620 = vunpack.c.l.s4 1934713408
        %v2621 = vunpack.c.0.s8 %v2620
        %v2622 = vlaneseq
        %v2623 = vshrl.u32 %v2622, 7
        %v2624 = vsub.s32 %v2621, %v2623
        %v2625 = vrot.slane %v2617, %v2624
        %v2627 = vunpack.c.l.s4 1934713408
        %v2628 = vunpack.c.0.s8 %v2627
        %v2629 = vlaneseq
        %v2630 = vshrl.u32 %v2629, 7
        %v2631 = vsub.s32 %v2628, %v2630
        %v2632 = vrot.slane %v2618, %v2631
        %v2633 = vcombine.low %v2600, %v2616
        %v2634 = vcombine.high %v2600, %v2616
        %v2636 = vunpack.c.l.s4 1934713408
        %v2637 = vunpack.c.0.s8 %v2636
        %v2638 = vlaneseq
        %v2639 = vshrl.u32 %v2638, 7
        %v2640 = vsub.s32 %v2637, %v2639
        %v2641 = vrot.slane %v2633, %v2640
        %v2643 = vunpack.c.l.s4 1934713408
        %v2644 = vunpack.c.0.s8 %v2643
        %v2645 = vlaneseq
        %v2646 = vshrl.u32 %v2645, 7
        %v2647 = vsub.s32 %v2644, %v2646
        %v2648 = vrot.slane %v2634, %v2647
        %v2649 = vcombine.high %v2625, 0.0
        %v2650 = vcombine.high %v2632, 0.0
        %v2651 = vcombine.high %v2641, 0.0
        %v2652 = vcombine.high %v2648, 0.0
        %2654 = vrot.lane.b32.xlu0 %v2581, 16
        %v2655 = vpop.permute.xlu0 %2654
        %2658 = vrot.lane.b32.xlu0 %v2564, 32
        %v2659 = vpop.permute.xlu0 %2658
        %2662 = vrot.lane.b32.xlu0 %v2582, 48
        %v2663 = vpop.permute.xlu0 %2662
        %2666 = vrot.lane.b32.xlu0 %v2573, 64
        %v2667 = vpop.permute.xlu0 %2666
        %2670 = vrot.lane.b32.xlu0 %v2583, 80
        %v2671 = vpop.permute.xlu0 %2670
        %2674 = vrot.lane.b32.xlu0 %v2580, 96
        %v2675 = vpop.permute.xlu0 %2674
        %2678 = vrot.lane.b32.xlu0 %v2584, 112
        %v2679 = vpop.permute.xlu0 %2678
        %2682 = vrot.lane.b32.xlu0 %v2649, 16
        %v2683 = vpop.permute.xlu0 %2682
        %2686 = vrot.lane.b32.xlu0 %v2632, 32
        %v2687 = vpop.permute.xlu0 %2686
        %2690 = vrot.lane.b32.xlu0 %v2650, 48
        %v2691 = vpop.permute.xlu0 %2690
        %2694 = vrot.lane.b32.xlu0 %v2641, 64
        %v2695 = vpop.permute.xlu0 %2694
        %2698 = vrot.lane.b32.xlu0 %v2651, 80
        %v2699 = vpop.permute.xlu0 %2698
        %2702 = vrot.lane.b32.xlu0 %v2648, 96
        %v2703 = vpop.permute.xlu0 %2702
        %2706 = vrot.lane.b32.xlu0 %v2652, 112
        %v2707 = vpop.permute.xlu0 %2706
        %v2709 = vsel %vm758, %v2557, %v2655
        %v2710 = vsel %vm760, %v2709, %v2659
        %v2711 = vsel %vm762, %v2710, %v2663
        %v2712 = vsel %vm764, %v2711, %v2667
        %v2713 = vsel %vm766, %v2712, %v2671
        %v2714 = vsel %vm768, %v2713, %v2675
        %v2715 = vsel %vm770, %v2714, %v2679
        %v2716 = vsel %vm758, %v2625, %v2683
        %v2717 = vsel %vm760, %v2716, %v2687
        %v2718 = vsel %vm762, %v2717, %v2691
        %v2719 = vsel %vm764, %v2718, %v2695
        %v2720 = vsel %vm766, %v2719, %v2699
        %v2721 = vsel %vm768, %v2720, %v2703
        %v2722 = vsel %vm770, %v2721, %v2707
        %2723 = vst [vmem:[#allocation3 + $0x40] sm:$0xf] %v2715
        %2724 = vst [vmem:[#allocation3 + $0x48] sm:$0xf] %v2722
        %v2725 = vld [vmem:[#allocation3] sm:$0xff]
        %v2726 = vld [vmem:[#allocation3 + $0x8] sm:$0xff]
        %v2727 = vld [vmem:[#allocation3 + $0x10] sm:$0xff]
        %v2728 = vld [vmem:[#allocation3 + $0x18] sm:$0xff]
        %v2729 = vld [vmem:[#allocation3 + $0x20] sm:$0xff]
        %v2730 = vld [vmem:[#allocation3 + $0x28] sm:$0xff]
        %v2731 = vld [vmem:[#allocation3 + $0x30] sm:$0xff]
        %v2732 = vld [vmem:[#allocation3 + $0x38] sm:$0xff]
        %v2733 = vld [vmem:[#allocation3 + $0x40] sm:$0xf]
        %v2734 = vld [vmem:[#allocation3 + $0x48] sm:$0xf]
        %2736 = vset.pattern.permute.xlu0 0
        %2737 = vperm.xlu0 %2736, %v557
        %v2738 = vpop.permute.xlu0 %2737
        %vm2740 = vcmask 293888
        %v2742 = vsel %vm2740, %v556, 0
        %vm2744 = vcmask 1043456
        %v2746 = vsel %vm2744, %v2733, 0
        %v2749 = vsel %vm2744, %v2734, 0
        %2751 = vmatprep.subr.mxu0 0.0
        %2752 = vmatpush1.msra.mxu0 0.0
        %2753 = vmatprep.subr.mxu0 0.0
        %2754 = vmatpush1.msra.mxu0 0.0
        %2755 = vmatprep.subr.mxu0 0.0
        %2756 = vmatpush1.msra.mxu0 0.0
        %2757 = vmatprep.subr.mxu0 0.0
        %2758 = vmatpush1.msra.mxu0 0.0
        %2759 = vmatprep.subr.mxu0 0.0
        %2760 = vmatpush1.msra.mxu0 0.0
        %2761 = vmatprep.subr.mxu0 0.0
        %2762 = vmatpush1.msra.mxu0 0.0
        %2763 = vmatprep.subr.mxu0 0.0
        %2764 = vmatpush1.msra.mxu0 0.0
        %2765 = vmatprep.subr.mxu0 0.0
        %2766 = vmatpush1.msra.mxu0 0.0
        %2767 = vmatprep.subr.mxu0 0.0
        %2768 = vmatpush1.msra.mxu0 0.0
        %2769 = vmatprep.subr.mxu0 0.0
        %2770 = vmatpush1.msra.mxu0 0.0
        %2771 = vmatprep.subr.mxu0 0.0
        %2772 = vmatpush1.msra.mxu0 0.0
        %2773 = vmatprep.subr.mxu0 %v2749
        %2774 = vmatpush1.msra.mxu0 %v2746
        %2775 = vmatprep.subr.mxu0 %v2732
        %2776 = vmatpush1.msra.mxu0 %v2731
        %2777 = vmatprep.subr.mxu0 %v2730
        %2778 = vmatpush1.msra.mxu0 %v2729
        %2779 = vmatprep.subr.mxu0 %v2728
        %2780 = vmatpush1.msra.mxu0 %v2727
        %2781 = vmatprep.subr.mxu0 %v2726
        %2782 = vmatpush1.msra.mxu0 %v2725
        %2783 = vmatprep.subr.mxu0 0.0
        %2784 = vmatpush2.msra.mxu0 0.0
        %2785 = vmatprep.subr.mxu0 0.0
        %2786 = vmatpush2.msra.mxu0 0.0
        %2787 = vmatprep.subr.mxu0 0.0
        %2788 = vmatpush2.msra.mxu0 0.0
        %2789 = vmatprep.subr.mxu0 0.0
        %2790 = vmatpush2.msra.mxu0 0.0
        %2791 = vmatprep.subr.mxu0 0.0
        %2792 = vmatpush2.msra.mxu0 0.0
        %2793 = vmatprep.subr.mxu0 0.0
        %2794 = vmatpush2.msra.mxu0 0.0
        %2795 = vmatprep.subr.mxu0 0.0
        %2796 = vmatpush2.msra.mxu0 0.0
        %2797 = vmatprep.subr.mxu0 0.0
        %2798 = vmatpush2.msra.mxu0 0.0
        %2799 = vmatprep.subr.mxu0 0.0
        %2800 = vmatpush2.msra.mxu0 0.0
        %2801 = vmatprep.subr.mxu0 0.0
        %2802 = vmatpush2.msra.mxu0 0.0
        %2803 = vmatprep.subr.mxu0 0.0
        %2804 = vmatpush2.msra.mxu0 0.0
        %2805 = vmatprep.subr.mxu0 0.0
        %2806 = vmatpush2.msra.mxu0 0.0
        %2807 = vmatprep.subr.mxu0 0.0
        %2808 = vmatpush2.msra.mxu0 0.0
        %2809 = vmatprep.subr.mxu0 0.0
        %2810 = vmatpush2.msra.mxu0 0.0
        %2811 = vmatprep.subr.mxu0 0.0
        %2812 = vmatpush2.msra.mxu0 0.0
        %2813 = vmatprep.subr.mxu0 0.0
        %2814 = vmatpush2.msra.mxu0 0.0
        %2815 = vmatprep.mubr.f32.mxu0 0.0
        %2816 = vmatmul.mubr.f32.gmra.mxu0 %v2742
        %v2817 = vpop.f32.mrf.mxu0
        %v2818 = vadd.f32 %v2738, %v2817
        %v2819 = vpop.f32.mrf.mxu0
        %v2820 = vadd.f32 %v2738, %v2819
        %2821 = vdwg.mxu0
        %v2822 = vsel %vm2744, %v2818, 0.0
        %v2823 = vsel %vm2744, %v2820, 0.0
        %v2824 = vadd.f32 %v2822, %v2823
        %2825 = vadd.xlane.f32.xlu0 %v2824
        %v2826 = vpop.xlane.xlu0 %2825
        %v2827 = vmul.f32 %v2818, %v2818
        %v2828 = vmul.f32 %v2820, %v2820
        %v2829 = vsel %vm2744, %v2827, 0.0
        %v2830 = vsel %vm2744, %v2828, 0.0
        %v2831 = vadd.f32 %v2829, %v2830
        %2832 = vadd.xlane.f32.xlu0 %v2831
        %v2833 = vpop.xlane.xlu0 %2832
        %v2834 = vmul.f32 %v2826, 0.00390625
        %v2835 = vmul.f32 %v2833, 0.00390625
        %v2836 = vmul.f32 %v2834, %v2834
        %v2837 = vsub.f32 %v2835, %v2836
        %v2838 = vsub.f32 %v2818, %v2834
        %v2839 = vsub.f32 %v2820, %v2834
        %v2840 = vadd.f32 %v2837, 1e-05
        %v2841 = vrsqrt.pop %v2840
        %v2842 = vmul.f32 %v2838, %v2841
        %v2843 = vmul.f32 %v2839, %v2841
        %v2844 = vmax.f32 %v2842, 0.0
        %v2845 = vmax.f32 %v2843, 0.0
        %2847 = vrot.lane.b32.xlu0 %v2844, 112
        %v2848 = vpop.permute.xlu0 %2847
        %2850 = vrot.lane.b32.xlu0 %v2844, 96
        %v2851 = vpop.permute.xlu0 %2850
        %2853 = vrot.lane.b32.xlu0 %v2844, 80
        %v2854 = vpop.permute.xlu0 %2853
        %2856 = vrot.lane.b32.xlu0 %v2844, 64
        %v2857 = vpop.permute.xlu0 %2856
        %2859 = vrot.lane.b32.xlu0 %v2844, 48
        %v2860 = vpop.permute.xlu0 %2859
        %2862 = vrot.lane.b32.xlu0 %v2844, 32
        %v2863 = vpop.permute.xlu0 %2862
        %2865 = vrot.lane.b32.xlu0 %v2844, 16
        %v2866 = vpop.permute.xlu0 %2865
        %2869 = vrot.lane.b32.xlu0 %v2845, 112
        %v2870 = vpop.permute.xlu0 %2869
        %2872 = vrot.lane.b32.xlu0 %v2845, 96
        %v2873 = vpop.permute.xlu0 %2872
        %2875 = vrot.lane.b32.xlu0 %v2845, 80
        %v2876 = vpop.permute.xlu0 %2875
        %2878 = vrot.lane.b32.xlu0 %v2845, 64
        %v2879 = vpop.permute.xlu0 %2878
        %2881 = vrot.lane.b32.xlu0 %v2845, 48
        %v2882 = vpop.permute.xlu0 %2881
        %2884 = vrot.lane.b32.xlu0 %v2845, 32
        %v2885 = vpop.permute.xlu0 %2884
        %2887 = vrot.lane.b32.xlu0 %v2845, 16
        %v2888 = vpop.permute.xlu0 %2887
        %v2890 = vcombine.low %v2844, %v2851
        %v2892 = vunpack.c.l.s4 1983009808
        %v2893 = vunpack.c.0.s8 %v2892
        %v2894 = vlaneseq
        %v2895 = vshrl.u32 %v2894, 7
        %v2896 = vsub.s32 %v2893, %v2895
        %v2897 = vrot.slane %v2890, %v2896
        %v2898 = vcombine.low %v2848, %v2854
        %v2900 = vunpack.c.l.s4 1983009808
        %v2901 = vunpack.c.0.s8 %v2900
        %v2902 = vlaneseq
        %v2903 = vshrl.u32 %v2902, 7
        %v2904 = vsub.s32 %v2901, %v2903
        %v2905 = vrot.slane %v2898, %v2904
        %v2906 = vcombine.low %v2857, %v2863
        %v2908 = vunpack.c.l.s4 1983009808
        %v2909 = vunpack.c.0.s8 %v2908
        %v2910 = vlaneseq
        %v2911 = vshrl.u32 %v2910, 7
        %v2912 = vsub.s32 %v2909, %v2911
        %v2913 = vrot.slane %v2906, %v2912
        %v2914 = vcombine.low %v2860, %v2866
        %v2916 = vunpack.c.l.s4 1983009808
        %v2917 = vunpack.c.0.s8 %v2916
        %v2918 = vlaneseq
        %v2919 = vshrl.u32 %v2918, 7
        %v2920 = vsub.s32 %v2917, %v2919
        %v2921 = vrot.slane %v2914, %v2920
        %v2922 = vcombine.low %v2897, %v2905
        %v2923 = vcombine.high %v2897, %v2905
        %v2925 = vunpack.c.l.s4 1934713408
        %v2926 = vunpack.c.0.s8 %v2925
        %v2927 = vlaneseq
        %v2928 = vshrl.u32 %v2927, 7
        %v2929 = vsub.s32 %v2926, %v2928
        %v2930 = vrot.slane %v2922, %v2929
        %v2932 = vunpack.c.l.s4 1934713408
        %v2933 = vunpack.c.0.s8 %v2932
        %v2934 = vlaneseq
        %v2935 = vshrl.u32 %v2934, 7
        %v2936 = vsub.s32 %v2933, %v2935
        %v2937 = vrot.slane %v2923, %v2936
        %v2938 = vcombine.low %v2913, %v2921
        %v2939 = vcombine.high %v2913, %v2921
        %v2941 = vunpack.c.l.s4 1934713408
        %v2942 = vunpack.c.0.s8 %v2941
        %v2943 = vlaneseq
        %v2944 = vshrl.u32 %v2943, 7
        %v2945 = vsub.s32 %v2942, %v2944
        %v2946 = vrot.slane %v2938, %v2945
        %v2948 = vunpack.c.l.s4 1934713408
        %v2949 = vunpack.c.0.s8 %v2948
        %v2950 = vlaneseq
        %v2951 = vshrl.u32 %v2950, 7
        %v2952 = vsub.s32 %v2949, %v2951
        %v2953 = vrot.slane %v2939, %v2952
        %v2954 = vcombine.low %v2930, %v2946
        %v2955 = vcombine.high %v2930, %v2946
        %v2956 = vcombine.low %v2937, %v2953
        %v2957 = vcombine.high %v2937, %v2953
        %v2958 = vcombine.low %v2845, %v2873
        %v2960 = vunpack.c.l.s4 1983009808
        %v2961 = vunpack.c.0.s8 %v2960
        %v2962 = vlaneseq
        %v2963 = vshrl.u32 %v2962, 7
        %v2964 = vsub.s32 %v2961, %v2963
        %v2965 = vrot.slane %v2958, %v2964
        %v2966 = vcombine.low %v2870, %v2876
        %v2968 = vunpack.c.l.s4 1983009808
        %v2969 = vunpack.c.0.s8 %v2968
        %v2970 = vlaneseq
        %v2971 = vshrl.u32 %v2970, 7
        %v2972 = vsub.s32 %v2969, %v2971
        %v2973 = vrot.slane %v2966, %v2972
        %v2974 = vcombine.low %v2879, %v2885
        %v2976 = vunpack.c.l.s4 1983009808
        %v2977 = vunpack.c.0.s8 %v2976
        %v2978 = vlaneseq
        %v2979 = vshrl.u32 %v2978, 7
        %v2980 = vsub.s32 %v2977, %v2979
        %v2981 = vrot.slane %v2974, %v2980
        %v2982 = vcombine.low %v2882, %v2888
        %v2984 = vunpack.c.l.s4 1983009808
        %v2985 = vunpack.c.0.s8 %v2984
        %v2986 = vlaneseq
        %v2987 = vshrl.u32 %v2986, 7
        %v2988 = vsub.s32 %v2985, %v2987
        %v2989 = vrot.slane %v2982, %v2988
        %v2990 = vcombine.low %v2965, %v2973
        %v2991 = vcombine.high %v2965, %v2973
        %v2993 = vunpack.c.l.s4 1934713408
        %v2994 = vunpack.c.0.s8 %v2993
        %v2995 = vlaneseq
        %v2996 = vshrl.u32 %v2995, 7
        %v2997 = vsub.s32 %v2994, %v2996
        %v2998 = vrot.slane %v2990, %v2997
        %v3000 = vunpack.c.l.s4 1934713408
        %v3001 = vunpack.c.0.s8 %v3000
        %v3002 = vlaneseq
        %v3003 = vshrl.u32 %v3002, 7
        %v3004 = vsub.s32 %v3001, %v3003
        %v3005 = vrot.slane %v2991, %v3004
        %v3006 = vcombine.low %v2981, %v2989
        %v3007 = vcombine.high %v2981, %v2989
        %v3009 = vunpack.c.l.s4 1934713408
        %v3010 = vunpack.c.0.s8 %v3009
        %v3011 = vlaneseq
        %v3012 = vshrl.u32 %v3011, 7
        %v3013 = vsub.s32 %v3010, %v3012
        %v3014 = vrot.slane %v3006, %v3013
        %v3016 = vunpack.c.l.s4 1934713408
        %v3017 = vunpack.c.0.s8 %v3016
        %v3018 = vlaneseq
        %v3019 = vshrl.u32 %v3018, 7
        %v3020 = vsub.s32 %v3017, %v3019
        %v3021 = vrot.slane %v3007, %v3020
        %v3022 = vcombine.low %v2998, %v3014
        %v3023 = vcombine.high %v2998, %v3014
        %v3024 = vcombine.low %v3005, %v3021
        %v3025 = vcombine.high %v3005, %v3021
        %3034 = vrot.lane.b32.xlu0 %v2954, 1
        %v3035 = vpop.permute.xlu0 %3034
        %3036 = vrot.lane.b32.xlu0 %v3022, 1
        %v3037 = vpop.permute.xlu0 %3036
        %3038 = vrot.lane.b32.xlu0 %v2955, 1
        %v3039 = vpop.permute.xlu0 %3038
        %3040 = vrot.lane.b32.xlu0 %v3023, 1
        %v3041 = vpop.permute.xlu0 %3040
        %3042 = vrot.lane.b32.xlu0 %v2956, 1
        %v3043 = vpop.permute.xlu0 %3042
        %3044 = vrot.lane.b32.xlu0 %v3024, 1
        %v3045 = vpop.permute.xlu0 %3044
        %3046 = vrot.lane.b32.xlu0 %v2957, 1
        %v3047 = vpop.permute.xlu0 %3046
        %3048 = vrot.lane.b32.xlu0 %v3025, 1
        %v3049 = vpop.permute.xlu0 %3048
        %3058 = vst.msk [vmem:[#allocation2 + $0x1] sm:$0xff] %vm464, %v3035
        %3059 = vst.msk [vmem:[#allocation2 + $0x9] sm:$0xff] %vm464, %v3037
        %3060 = vst.msk [vmem:[#allocation2 + $0x19] sm:$0xff] %vm464, %v3039
        %3061 = vst.msk [vmem:[#allocation2 + $0x21] sm:$0xff] %vm464, %v3041
        %3062 = vst.msk [vmem:[#allocation2 + $0x31] sm:$0xff] %vm464, %v3043
        %3063 = vst.msk [vmem:[#allocation2 + $0x39] sm:$0xff] %vm464, %v3045
        %3064 = vst.msk [vmem:[#allocation2 + $0x49] sm:$0xff] %vm464, %v3047
        %3065 = vst.msk [vmem:[#allocation2 + $0x51] sm:$0xff] %vm464, %v3049
        %3066 = vrot.lane.b32.xlu0 %v2954, 127
        %v3067 = vpop.permute.xlu0 %3066
        %3068 = vrot.lane.b32.xlu0 %v3022, 127
        %v3069 = vpop.permute.xlu0 %3068
        %3070 = vrot.lane.b32.xlu0 %v2955, 127
        %v3071 = vpop.permute.xlu0 %3070
        %3072 = vrot.lane.b32.xlu0 %v3023, 127
        %v3073 = vpop.permute.xlu0 %3072
        %3074 = vrot.lane.b32.xlu0 %v2956, 127
        %v3075 = vpop.permute.xlu0 %3074
        %3076 = vrot.lane.b32.xlu0 %v3024, 127
        %v3077 = vpop.permute.xlu0 %3076
        %3078 = vrot.lane.b32.xlu0 %v2957, 127
        %v3079 = vpop.permute.xlu0 %3078
        %3080 = vrot.lane.b32.xlu0 %v3025, 127
        %v3081 = vpop.permute.xlu0 %3080
        %3090 = vst.msk [vmem:[#allocation2 + $0x1] sm:$0xff] %vm497, %v3067
        %3091 = vst.msk [vmem:[#allocation2 + $0x9] sm:$0xff] %vm497, %v3069
        %3092 = vst.msk [vmem:[#allocation2 + $0x19] sm:$0xff] %vm497, %v3071
        %3093 = vst.msk [vmem:[#allocation2 + $0x21] sm:$0xff] %vm497, %v3073
        %3094 = vst.msk [vmem:[#allocation2 + $0x31] sm:$0xff] %vm497, %v3075
        %3095 = vst.msk [vmem:[#allocation2 + $0x39] sm:$0xff] %vm497, %v3077
        %3096 = vst.msk [vmem:[#allocation2 + $0x49] sm:$0xff] %vm497, %v3079
        %3097 = vst.msk [vmem:[#allocation2 + $0x51] sm:$0xff] %vm497, %v3081
        %3098 = vrot.lane.b32.xlu0 %v2954, 3
        %v3099 = vpop.permute.xlu0 %3098
        %3100 = vrot.lane.b32.xlu0 %v3022, 3
        %v3101 = vpop.permute.xlu0 %3100
        %3102 = vrot.lane.b32.xlu0 %v2955, 3
        %v3103 = vpop.permute.xlu0 %3102
        %3104 = vrot.lane.b32.xlu0 %v3023, 3
        %v3105 = vpop.permute.xlu0 %3104
        %3106 = vrot.lane.b32.xlu0 %v2956, 3
        %v3107 = vpop.permute.xlu0 %3106
        %3108 = vrot.lane.b32.xlu0 %v3024, 3
        %v3109 = vpop.permute.xlu0 %3108
        %3110 = vrot.lane.b32.xlu0 %v2957, 3
        %v3111 = vpop.permute.xlu0 %3110
        %3112 = vrot.lane.b32.xlu0 %v3025, 3
        %v3113 = vpop.permute.xlu0 %3112
        %3122 = vst.msk [vmem:[#allocation2 + $0x1] sm:$0xff] %vm530, %v3099
        %3123 = vst.msk [vmem:[#allocation2 + $0x9] sm:$0xff] %vm530, %v3101
        %3124 = vst.msk [vmem:[#allocation2 + $0x19] sm:$0xff] %vm530, %v3103
        %3125 = vst.msk [vmem:[#allocation2 + $0x21] sm:$0xff] %vm530, %v3105
        %3126 = vst.msk [vmem:[#allocation2 + $0x31] sm:$0xff] %vm530, %v3107
        %3127 = vst.msk [vmem:[#allocation2 + $0x39] sm:$0xff] %vm530, %v3109
        %3128 = vst.msk [vmem:[#allocation2 + $0x49] sm:$0xff] %vm530, %v3111
        %3129 = vst.msk [vmem:[#allocation2 + $0x51] sm:$0xff] %vm530, %v3113
        %v3130 = vld [vmem:[#allocation2 + $0x2] sm:$0x1]
        %v3131 = vld [vmem:[#allocation2 + $0x1a] sm:$0x1]
        %v3132 = vld [vmem:[#allocation2 + $0x32] sm:$0x1]
        %v3133 = vld [vmem:[#allocation2 + $0x4a] sm:$0x1]
        %3134 = vst.msk [vmem:[#allocation2] sm:$0x1] %vm543, %v3130
        %3135 = vst.msk [vmem:[#allocation2 + $0x18] sm:$0x1] %vm543, %v3131
        %3136 = vst.msk [vmem:[#allocation2 + $0x30] sm:$0x1] %vm543, %v3132
        %3137 = vst.msk [vmem:[#allocation2 + $0x48] sm:$0x1] %vm543, %v3133
        %v3138 = vld [vmem:[#allocation2 + $0xf] sm:$0x1]
        %v3139 = vld [vmem:[#allocation2 + $0x27] sm:$0x1]
        %v3140 = vld [vmem:[#allocation2 + $0x3f] sm:$0x1]
        %v3141 = vld [vmem:[#allocation2 + $0x57] sm:$0x1]
        %3142 = vst.msk [vmem:[#allocation2 + $0x11] sm:$0x1] %vm543, %v3138
        %3143 = vst.msk [vmem:[#allocation2 + $0x29] sm:$0x1] %vm543, %v3139
        %3144 = vst.msk [vmem:[#allocation2 + $0x41] sm:$0x1] %vm543, %v3140
        %3145 = vst.msk [vmem:[#allocation2 + $0x59] sm:$0x1] %vm543, %v3141
        %v3146 = vld [vmem:[%s3] sm:$0xf]
        %v3147 = vld [vmem:[%s4] sm:$0xf]
        %v3148 = vld [vmem:[#allocation2] sm:$0xff]
        %v3149 = vld [vmem:[#allocation2 + $0x8] sm:$0xff]
        %v3150 = vld [vmem:[#allocation2 + $0x18] sm:$0xff]
        %v3151 = vld [vmem:[#allocation2 + $0x20] sm:$0xff]
        %v3152 = vld [vmem:[#allocation2 + $0x30] sm:$0xff]
        %v3153 = vld [vmem:[#allocation2 + $0x38] sm:$0xff]
        %v3154 = vld [vmem:[#allocation2 + $0x48] sm:$0xff]
        %v3155 = vld [vmem:[#allocation2 + $0x50] sm:$0xff]
        %v3156 = vcombine.low %v3148, %v3152
        %v3157 = vcombine.high %v3148, %v3152
        %v3159 = vunpack.c.l.s4 1983009808
        %v3160 = vunpack.c.0.s8 %v3159
        %v3161 = vlaneseq
        %v3162 = vshrl.u32 %v3161, 7
        %v3163 = vsub.s32 %v3160, %v3162
        %v3164 = vrot.slane %v3156, %v3163
        %v3166 = vunpack.c.l.s4 1983009808
        %v3167 = vunpack.c.0.s8 %v3166
        %v3168 = vlaneseq
        %v3169 = vshrl.u32 %v3168, 7
        %v3170 = vsub.s32 %v3167, %v3169
        %v3171 = vrot.slane %v3157, %v3170
        %v3172 = vcombine.low %v3150, %v3154
        %v3173 = vcombine.high %v3150, %v3154
        %v3175 = vunpack.c.l.s4 1983009808
        %v3176 = vunpack.c.0.s8 %v3175
        %v3177 = vlaneseq
        %v3178 = vshrl.u32 %v3177, 7
        %v3179 = vsub.s32 %v3176, %v3178
        %v3180 = vrot.slane %v3172, %v3179
        %v3182 = vunpack.c.l.s4 1983009808
        %v3183 = vunpack.c.0.s8 %v3182
        %v3184 = vlaneseq
        %v3185 = vshrl.u32 %v3184, 7
        %v3186 = vsub.s32 %v3183, %v3185
        %v3187 = vrot.slane %v3173, %v3186
        %v3188 = vcombine.low %v3164, %v3180
        %v3189 = vcombine.high %v3164, %v3180
        %v3191 = vunpack.c.l.s4 1934713408
        %v3192 = vunpack.c.0.s8 %v3191
        %v3193 = vlaneseq
        %v3194 = vshrl.u32 %v3193, 7
        %v3195 = vsub.s32 %v3192, %v3194
        %v3196 = vrot.slane %v3188, %v3195
        %v3198 = vunpack.c.l.s4 1934713408
        %v3199 = vunpack.c.0.s8 %v3198
        %v3200 = vlaneseq
        %v3201 = vshrl.u32 %v3200, 7
        %v3202 = vsub.s32 %v3199, %v3201
        %v3203 = vrot.slane %v3189, %v3202
        %v3204 = vcombine.low %v3171, %v3187
        %v3205 = vcombine.high %v3171, %v3187
        %v3207 = vunpack.c.l.s4 1934713408
        %v3208 = vunpack.c.0.s8 %v3207
        %v3209 = vlaneseq
        %v3210 = vshrl.u32 %v3209, 7
        %v3211 = vsub.s32 %v3208, %v3210
        %v3212 = vrot.slane %v3204, %v3211
        %v3214 = vunpack.c.l.s4 1934713408
        %v3215 = vunpack.c.0.s8 %v3214
        %v3216 = vlaneseq
        %v3217 = vshrl.u32 %v3216, 7
        %v3218 = vsub.s32 %v3215, %v3217
        %v3219 = vrot.slane %v3205, %v3218
        %v3220 = vcombine.high %v3196, 0.0
        %v3221 = vcombine.high %v3203, 0.0
        %v3222 = vcombine.high %v3212, 0.0
        %v3223 = vcombine.high %v3219, 0.0
        %v3224 = vcombine.low %v3149, %v3153
        %v3225 = vcombine.high %v3149, %v3153
        %v3227 = vunpack.c.l.s4 1983009808
        %v3228 = vunpack.c.0.s8 %v3227
        %v3229 = vlaneseq
        %v3230 = vshrl.u32 %v3229, 7
        %v3231 = vsub.s32 %v3228, %v3230
        %v3232 = vrot.slane %v3224, %v3231
        %v3234 = vunpack.c.l.s4 1983009808
        %v3235 = vunpack.c.0.s8 %v3234
        %v3236 = vlaneseq
        %v3237 = vshrl.u32 %v3236, 7
        %v3238 = vsub.s32 %v3235, %v3237
        %v3239 = vrot.slane %v3225, %v3238
        %v3240 = vcombine.low %v3151, %v3155
        %v3241 = vcombine.high %v3151, %v3155
        %v3243 = vunpack.c.l.s4 1983009808
        %v3244 = vunpack.c.0.s8 %v3243
        %v3245 = vlaneseq
        %v3246 = vshrl.u32 %v3245, 7
        %v3247 = vsub.s32 %v3244, %v3246
        %v3248 = vrot.slane %v3240, %v3247
        %v3250 = vunpack.c.l.s4 1983009808
        %v3251 = vunpack.c.0.s8 %v3250
        %v3252 = vlaneseq
        %v3253 = vshrl.u32 %v3252, 7
        %v3254 = vsub.s32 %v3251, %v3253
        %v3255 = vrot.slane %v3241, %v3254
        %v3256 = vcombine.low %v3232, %v3248
        %v3257 = vcombine.high %v3232, %v3248
        %v3259 = vunpack.c.l.s4 1934713408
        %v3260 = vunpack.c.0.s8 %v3259
        %v3261 = vlaneseq
        %v3262 = vshrl.u32 %v3261, 7
        %v3263 = vsub.s32 %v3260, %v3262
        %v3264 = vrot.slane %v3256, %v3263
        %v3266 = vunpack.c.l.s4 1934713408
        %v3267 = vunpack.c.0.s8 %v3266
        %v3268 = vlaneseq
        %v3269 = vshrl.u32 %v3268, 7
        %v3270 = vsub.s32 %v3267, %v3269
        %v3271 = vrot.slane %v3257, %v3270
        %v3272 = vcombine.low %v3239, %v3255
        %v3273 = vcombine.high %v3239, %v3255
        %v3275 = vunpack.c.l.s4 1934713408
        %v3276 = vunpack.c.0.s8 %v3275
        %v3277 = vlaneseq
        %v3278 = vshrl.u32 %v3277, 7
        %v3279 = vsub.s32 %v3276, %v3278
        %v3280 = vrot.slane %v3272, %v3279
        %v3282 = vunpack.c.l.s4 1934713408
        %v3283 = vunpack.c.0.s8 %v3282
        %v3284 = vlaneseq
        %v3285 = vshrl.u32 %v3284, 7
        %v3286 = vsub.s32 %v3283, %v3285
        %v3287 = vrot.slane %v3273, %v3286
        %v3288 = vcombine.high %v3264, 0.0
        %v3289 = vcombine.high %v3271, 0.0
        %v3290 = vcombine.high %v3280, 0.0
        %v3291 = vcombine.high %v3287, 0.0
        %3293 = vrot.lane.b32.xlu0 %v3220, 16
        %v3294 = vpop.permute.xlu0 %3293
        %3297 = vrot.lane.b32.xlu0 %v3203, 32
        %v3298 = vpop.permute.xlu0 %3297
        %3301 = vrot.lane.b32.xlu0 %v3221, 48
        %v3302 = vpop.permute.xlu0 %3301
        %3305 = vrot.lane.b32.xlu0 %v3212, 64
        %v3306 = vpop.permute.xlu0 %3305
        %3309 = vrot.lane.b32.xlu0 %v3222, 80
        %v3310 = vpop.permute.xlu0 %3309
        %3313 = vrot.lane.b32.xlu0 %v3219, 96
        %v3314 = vpop.permute.xlu0 %3313
        %3317 = vrot.lane.b32.xlu0 %v3223, 112
        %v3318 = vpop.permute.xlu0 %3317
        %3321 = vrot.lane.b32.xlu0 %v3288, 16
        %v3322 = vpop.permute.xlu0 %3321
        %3325 = vrot.lane.b32.xlu0 %v3271, 32
        %v3326 = vpop.permute.xlu0 %3325
        %3329 = vrot.lane.b32.xlu0 %v3289, 48
        %v3330 = vpop.permute.xlu0 %3329
        %3333 = vrot.lane.b32.xlu0 %v3280, 64
        %v3334 = vpop.permute.xlu0 %3333
        %3337 = vrot.lane.b32.xlu0 %v3290, 80
        %v3338 = vpop.permute.xlu0 %3337
        %3341 = vrot.lane.b32.xlu0 %v3287, 96
        %v3342 = vpop.permute.xlu0 %3341
        %3345 = vrot.lane.b32.xlu0 %v3291, 112
        %v3346 = vpop.permute.xlu0 %3345
        %v3348 = vsel %vm758, %v3196, %v3294
        %v3349 = vsel %vm760, %v3348, %v3298
        %v3350 = vsel %vm762, %v3349, %v3302
        %v3351 = vsel %vm764, %v3350, %v3306
        %v3352 = vsel %vm766, %v3351, %v3310
        %v3353 = vsel %vm768, %v3352, %v3314
        %v3354 = vsel %vm770, %v3353, %v3318
        %v3355 = vsel %vm758, %v3264, %v3322
        %v3356 = vsel %vm760, %v3355, %v3326
        %v3357 = vsel %vm762, %v3356, %v3330
        %v3358 = vsel %vm764, %v3357, %v3334
        %v3359 = vsel %vm766, %v3358, %v3338
        %v3360 = vsel %vm768, %v3359, %v3342
        %v3361 = vsel %vm770, %v3360, %v3346
        %3362 = vst [vmem:[#allocation3] sm:$0xf] %v3354
        %3363 = vst [vmem:[#allocation3 + $0x8] sm:$0xf] %v3361
        %v3364 = vld [vmem:[#allocation2] sm:$0xff]
        %v3365 = vld [vmem:[#allocation2 + $0x8] sm:$0xff]
        %v3366 = vld [vmem:[#allocation2 + $0x18] sm:$0xff]
        %v3367 = vld [vmem:[#allocation2 + $0x20] sm:$0xff]
        %v3368 = vld [vmem:[#allocation2 + $0x30] sm:$0xff]
        %v3369 = vld [vmem:[#allocation2 + $0x38] sm:$0xff]
        %v3370 = vld [vmem:[#allocation2 + $0x48] sm:$0xff]
        %v3371 = vld [vmem:[#allocation2 + $0x50] sm:$0xff]
        %3380 = vrot.lane.b32.xlu0 %v3364, 127
        %v3381 = vpop.permute.xlu0 %3380
        %3382 = vrot.lane.b32.xlu0 %v3365, 127
        %v3383 = vpop.permute.xlu0 %3382
        %3384 = vrot.lane.b32.xlu0 %v3366, 127
        %v3385 = vpop.permute.xlu0 %3384
        %3386 = vrot.lane.b32.xlu0 %v3367, 127
        %v3387 = vpop.permute.xlu0 %3386
        %3388 = vrot.lane.b32.xlu0 %v3368, 127
        %v3389 = vpop.permute.xlu0 %3388
        %3390 = vrot.lane.b32.xlu0 %v3369, 127
        %v3391 = vpop.permute.xlu0 %3390
        %3392 = vrot.lane.b32.xlu0 %v3370, 127
        %v3393 = vpop.permute.xlu0 %3392
        %3394 = vrot.lane.b32.xlu0 %v3371, 127
        %v3395 = vpop.permute.xlu0 %3394
        %v3404 = vcombine.low %v3381, %v3389
        %v3405 = vcombine.high %v3381, %v3389
        %v3407 = vunpack.c.l.s4 1983009808
        %v3408 = vunpack.c.0.s8 %v3407
        %v3409 = vlaneseq
        %v3410 = vshrl.u32 %v3409, 7
        %v3411 = vsub.s32 %v3408, %v3410
        %v3412 = vrot.slane %v3404, %v3411
        %v3414 = vunpack.c.l.s4 1983009808
        %v3415 = vunpack.c.0.s8 %v3414
        %v3416 = vlaneseq
        %v3417 = vshrl.u32 %v3416, 7
        %v3418 = vsub.s32 %v3415, %v3417
        %v3419 = vrot.slane %v3405, %v3418
        %v3420 = vcombine.low %v3385, %v3393
        %v3421 = vcombine.high %v3385, %v3393
        %v3423 = vunpack.c.l.s4 1983009808
        %v3424 = vunpack.c.0.s8 %v3423
        %v3425 = vlaneseq
        %v3426 = vshrl.u32 %v3425, 7
        %v3427 = vsub.s32 %v3424, %v3426
        %v3428 = vrot.slane %v3420, %v3427
        %v3430 = vunpack.c.l.s4 1983009808
        %v3431 = vunpack.c.0.s8 %v3430
        %v3432 = vlaneseq
        %v3433 = vshrl.u32 %v3432, 7
        %v3434 = vsub.s32 %v3431, %v3433
        %v3435 = vrot.slane %v3421, %v3434
        %v3436 = vcombine.low %v3412, %v3428
        %v3437 = vcombine.high %v3412, %v3428
        %v3439 = vunpack.c.l.s4 1934713408
        %v3440 = vunpack.c.0.s8 %v3439
        %v3441 = vlaneseq
        %v3442 = vshrl.u32 %v3441, 7
        %v3443 = vsub.s32 %v3440, %v3442
        %v3444 = vrot.slane %v3436, %v3443
        %v3446 = vunpack.c.l.s4 1934713408
        %v3447 = vunpack.c.0.s8 %v3446
        %v3448 = vlaneseq
        %v3449 = vshrl.u32 %v3448, 7
        %v3450 = vsub.s32 %v3447, %v3449
        %v3451 = vrot.slane %v3437, %v3450
        %v3452 = vcombine.low %v3419, %v3435
        %v3453 = vcombine.high %v3419, %v3435
        %v3455 = vunpack.c.l.s4 1934713408
        %v3456 = vunpack.c.0.s8 %v3455
        %v3457 = vlaneseq
        %v3458 = vshrl.u32 %v3457, 7
        %v3459 = vsub.s32 %v3456, %v3458
        %v3460 = vrot.slane %v3452, %v3459
        %v3462 = vunpack.c.l.s4 1934713408
        %v3463 = vunpack.c.0.s8 %v3462
        %v3464 = vlaneseq
        %v3465 = vshrl.u32 %v3464, 7
        %v3466 = vsub.s32 %v3463, %v3465
        %v3467 = vrot.slane %v3453, %v3466
        %v3468 = vcombine.high %v3444, 0.0
        %v3469 = vcombine.high %v3451, 0.0
        %v3470 = vcombine.high %v3460, 0.0
        %v3471 = vcombine.high %v3467, 0.0
        %v3472 = vcombine.low %v3383, %v3391
        %v3473 = vcombine.high %v3383, %v3391
        %v3475 = vunpack.c.l.s4 1983009808
        %v3476 = vunpack.c.0.s8 %v3475
        %v3477 = vlaneseq
        %v3478 = vshrl.u32 %v3477, 7
        %v3479 = vsub.s32 %v3476, %v3478
        %v3480 = vrot.slane %v3472, %v3479
        %v3482 = vunpack.c.l.s4 1983009808
        %v3483 = vunpack.c.0.s8 %v3482
        %v3484 = vlaneseq
        %v3485 = vshrl.u32 %v3484, 7
        %v3486 = vsub.s32 %v3483, %v3485
        %v3487 = vrot.slane %v3473, %v3486
        %v3488 = vcombine.low %v3387, %v3395
        %v3489 = vcombine.high %v3387, %v3395
        %v3491 = vunpack.c.l.s4 1983009808
        %v3492 = vunpack.c.0.s8 %v3491
        %v3493 = vlaneseq
        %v3494 = vshrl.u32 %v3493, 7
        %v3495 = vsub.s32 %v3492, %v3494
        %v3496 = vrot.slane %v3488, %v3495
        %v3498 = vunpack.c.l.s4 1983009808
        %v3499 = vunpack.c.0.s8 %v3498
        %v3500 = vlaneseq
        %v3501 = vshrl.u32 %v3500, 7
        %v3502 = vsub.s32 %v3499, %v3501
        %v3503 = vrot.slane %v3489, %v3502
        %v3504 = vcombine.low %v3480, %v3496
        %v3505 = vcombine.high %v3480, %v3496
        %v3507 = vunpack.c.l.s4 1934713408
        %v3508 = vunpack.c.0.s8 %v3507
        %v3509 = vlaneseq
        %v3510 = vshrl.u32 %v3509, 7
        %v3511 = vsub.s32 %v3508, %v3510
        %v3512 = vrot.slane %v3504, %v3511
        %v3514 = vunpack.c.l.s4 1934713408
        %v3515 = vunpack.c.0.s8 %v3514
        %v3516 = vlaneseq
        %v3517 = vshrl.u32 %v3516, 7
        %v3518 = vsub.s32 %v3515, %v3517
        %v3519 = vrot.slane %v3505, %v3518
        %v3520 = vcombine.low %v3487, %v3503
        %v3521 = vcombine.high %v3487, %v3503
        %v3523 = vunpack.c.l.s4 1934713408
        %v3524 = vunpack.c.0.s8 %v3523
        %v3525 = vlaneseq
        %v3526 = vshrl.u32 %v3525, 7
        %v3527 = vsub.s32 %v3524, %v3526
        %v3528 = vrot.slane %v3520, %v3527
        %v3530 = vunpack.c.l.s4 1934713408
        %v3531 = vunpack.c.0.s8 %v3530
        %v3532 = vlaneseq
        %v3533 = vshrl.u32 %v3532, 7
        %v3534 = vsub.s32 %v3531, %v3533
        %v3535 = vrot.slane %v3521, %v3534
        %v3536 = vcombine.high %v3512, 0.0
        %v3537 = vcombine.high %v3519, 0.0
        %v3538 = vcombine.high %v3528, 0.0
        %v3539 = vcombine.high %v3535, 0.0
        %3541 = vrot.lane.b32.xlu0 %v3468, 16
        %v3542 = vpop.permute.xlu0 %3541
        %3545 = vrot.lane.b32.xlu0 %v3451, 32
        %v3546 = vpop.permute.xlu0 %3545
        %3549 = vrot.lane.b32.xlu0 %v3469, 48
        %v3550 = vpop.permute.xlu0 %3549
        %3553 = vrot.lane.b32.xlu0 %v3460, 64
        %v3554 = vpop.permute.xlu0 %3553
        %3557 = vrot.lane.b32.xlu0 %v3470, 80
        %v3558 = vpop.permute.xlu0 %3557
        %3561 = vrot.lane.b32.xlu0 %v3467, 96
        %v3562 = vpop.permute.xlu0 %3561
        %3565 = vrot.lane.b32.xlu0 %v3471, 112
        %v3566 = vpop.permute.xlu0 %3565
        %3569 = vrot.lane.b32.xlu0 %v3536, 16
        %v3570 = vpop.permute.xlu0 %3569
        %3573 = vrot.lane.b32.xlu0 %v3519, 32
        %v3574 = vpop.permute.xlu0 %3573
        %3577 = vrot.lane.b32.xlu0 %v3537, 48
        %v3578 = vpop.permute.xlu0 %3577
        %3581 = vrot.lane.b32.xlu0 %v3528, 64
        %v3582 = vpop.permute.xlu0 %3581
        %3585 = vrot.lane.b32.xlu0 %v3538, 80
        %v3586 = vpop.permute.xlu0 %3585
        %3589 = vrot.lane.b32.xlu0 %v3535, 96
        %v3590 = vpop.permute.xlu0 %3589
        %3593 = vrot.lane.b32.xlu0 %v3539, 112
        %v3594 = vpop.permute.xlu0 %3593
        %v3596 = vsel %vm758, %v3444, %v3542
        %v3597 = vsel %vm760, %v3596, %v3546
        %v3598 = vsel %vm762, %v3597, %v3550
        %v3599 = vsel %vm764, %v3598, %v3554
        %v3600 = vsel %vm766, %v3599, %v3558
        %v3601 = vsel %vm768, %v3600, %v3562
        %v3602 = vsel %vm770, %v3601, %v3566
        %v3603 = vsel %vm758, %v3512, %v3570
        %v3604 = vsel %vm760, %v3603, %v3574
        %v3605 = vsel %vm762, %v3604, %v3578
        %v3606 = vsel %vm764, %v3605, %v3582
        %v3607 = vsel %vm766, %v3606, %v3586
        %v3608 = vsel %vm768, %v3607, %v3590
        %v3609 = vsel %vm770, %v3608, %v3594
        %v3612 = vrot.slane %v3602, 4
        %v3613 = vrot.slane %v3609, 4
        %3616 = vst [vmem:[#allocation3] sm:$0xf0] %v3612
        %3617 = vst [vmem:[#allocation3 + $0x8] sm:$0xf0] %v3613
        %v3618 = vld [vmem:[#allocation2] sm:$0xff]
        %v3619 = vld [vmem:[#allocation2 + $0x8] sm:$0xff]
        %v3620 = vld [vmem:[#allocation2 + $0x18] sm:$0xff]
        %v3621 = vld [vmem:[#allocation2 + $0x20] sm:$0xff]
        %v3622 = vld [vmem:[#allocation2 + $0x30] sm:$0xff]
        %v3623 = vld [vmem:[#allocation2 + $0x38] sm:$0xff]
        %v3624 = vld [vmem:[#allocation2 + $0x48] sm:$0xff]
        %v3625 = vld [vmem:[#allocation2 + $0x50] sm:$0xff]
        %3634 = vrot.lane.b32.xlu0 %v3618, 126
        %v3635 = vpop.permute.xlu0 %3634
        %3636 = vrot.lane.b32.xlu0 %v3619, 126
        %v3637 = vpop.permute.xlu0 %3636
        %3638 = vrot.lane.b32.xlu0 %v3620, 126
        %v3639 = vpop.permute.xlu0 %3638
        %3640 = vrot.lane.b32.xlu0 %v3621, 126
        %v3641 = vpop.permute.xlu0 %3640
        %3642 = vrot.lane.b32.xlu0 %v3622, 126
        %v3643 = vpop.permute.xlu0 %3642
        %3644 = vrot.lane.b32.xlu0 %v3623, 126
        %v3645 = vpop.permute.xlu0 %3644
        %3646 = vrot.lane.b32.xlu0 %v3624, 126
        %v3647 = vpop.permute.xlu0 %3646
        %3648 = vrot.lane.b32.xlu0 %v3625, 126
        %v3649 = vpop.permute.xlu0 %3648
        %v3658 = vcombine.low %v3635, %v3643
        %v3659 = vcombine.high %v3635, %v3643
        %v3661 = vunpack.c.l.s4 1983009808
        %v3662 = vunpack.c.0.s8 %v3661
        %v3663 = vlaneseq
        %v3664 = vshrl.u32 %v3663, 7
        %v3665 = vsub.s32 %v3662, %v3664
        %v3666 = vrot.slane %v3658, %v3665
        %v3668 = vunpack.c.l.s4 1983009808
        %v3669 = vunpack.c.0.s8 %v3668
        %v3670 = vlaneseq
        %v3671 = vshrl.u32 %v3670, 7
        %v3672 = vsub.s32 %v3669, %v3671
        %v3673 = vrot.slane %v3659, %v3672
        %v3674 = vcombine.low %v3639, %v3647
        %v3675 = vcombine.high %v3639, %v3647
        %v3677 = vunpack.c.l.s4 1983009808
        %v3678 = vunpack.c.0.s8 %v3677
        %v3679 = vlaneseq
        %v3680 = vshrl.u32 %v3679, 7
        %v3681 = vsub.s32 %v3678, %v3680
        %v3682 = vrot.slane %v3674, %v3681
        %v3684 = vunpack.c.l.s4 1983009808
        %v3685 = vunpack.c.0.s8 %v3684
        %v3686 = vlaneseq
        %v3687 = vshrl.u32 %v3686, 7
        %v3688 = vsub.s32 %v3685, %v3687
        %v3689 = vrot.slane %v3675, %v3688
        %v3690 = vcombine.low %v3666, %v3682
        %v3691 = vcombine.high %v3666, %v3682
        %v3693 = vunpack.c.l.s4 1934713408
        %v3694 = vunpack.c.0.s8 %v3693
        %v3695 = vlaneseq
        %v3696 = vshrl.u32 %v3695, 7
        %v3697 = vsub.s32 %v3694, %v3696
        %v3698 = vrot.slane %v3690, %v3697
        %v3700 = vunpack.c.l.s4 1934713408
        %v3701 = vunpack.c.0.s8 %v3700
        %v3702 = vlaneseq
        %v3703 = vshrl.u32 %v3702, 7
        %v3704 = vsub.s32 %v3701, %v3703
        %v3705 = vrot.slane %v3691, %v3704
        %v3706 = vcombine.low %v3673, %v3689
        %v3707 = vcombine.high %v3673, %v3689
        %v3709 = vunpack.c.l.s4 1934713408
        %v3710 = vunpack.c.0.s8 %v3709
        %v3711 = vlaneseq
        %v3712 = vshrl.u32 %v3711, 7
        %v3713 = vsub.s32 %v3710, %v3712
        %v3714 = vrot.slane %v3706, %v3713
        %v3716 = vunpack.c.l.s4 1934713408
        %v3717 = vunpack.c.0.s8 %v3716
        %v3718 = vlaneseq
        %v3719 = vshrl.u32 %v3718, 7
        %v3720 = vsub.s32 %v3717, %v3719
        %v3721 = vrot.slane %v3707, %v3720
        %v3722 = vcombine.high %v3698, 0.0
        %v3723 = vcombine.high %v3705, 0.0
        %v3724 = vcombine.high %v3714, 0.0
        %v3725 = vcombine.high %v3721, 0.0
        %v3726 = vcombine.low %v3637, %v3645
        %v3727 = vcombine.high %v3637, %v3645
        %v3729 = vunpack.c.l.s4 1983009808
        %v3730 = vunpack.c.0.s8 %v3729
        %v3731 = vlaneseq
        %v3732 = vshrl.u32 %v3731, 7
        %v3733 = vsub.s32 %v3730, %v3732
        %v3734 = vrot.slane %v3726, %v3733
        %v3736 = vunpack.c.l.s4 1983009808
        %v3737 = vunpack.c.0.s8 %v3736
        %v3738 = vlaneseq
        %v3739 = vshrl.u32 %v3738, 7
        %v3740 = vsub.s32 %v3737, %v3739
        %v3741 = vrot.slane %v3727, %v3740
        %v3742 = vcombine.low %v3641, %v3649
        %v3743 = vcombine.high %v3641, %v3649
        %v3745 = vunpack.c.l.s4 1983009808
        %v3746 = vunpack.c.0.s8 %v3745
        %v3747 = vlaneseq
        %v3748 = vshrl.u32 %v3747, 7
        %v3749 = vsub.s32 %v3746, %v3748
        %v3750 = vrot.slane %v3742, %v3749
        %v3752 = vunpack.c.l.s4 1983009808
        %v3753 = vunpack.c.0.s8 %v3752
        %v3754 = vlaneseq
        %v3755 = vshrl.u32 %v3754, 7
        %v3756 = vsub.s32 %v3753, %v3755
        %v3757 = vrot.slane %v3743, %v3756
        %v3758 = vcombine.low %v3734, %v3750
        %v3759 = vcombine.high %v3734, %v3750
        %v3761 = vunpack.c.l.s4 1934713408
        %v3762 = vunpack.c.0.s8 %v3761
        %v3763 = vlaneseq
        %v3764 = vshrl.u32 %v3763, 7
        %v3765 = vsub.s32 %v3762, %v3764
        %v3766 = vrot.slane %v3758, %v3765
        %v3768 = vunpack.c.l.s4 1934713408
        %v3769 = vunpack.c.0.s8 %v3768
        %v3770 = vlaneseq
        %v3771 = vshrl.u32 %v3770, 7
        %v3772 = vsub.s32 %v3769, %v3771
        %v3773 = vrot.slane %v3759, %v3772
        %v3774 = vcombine.low %v3741, %v3757
        %v3775 = vcombine.high %v3741, %v3757
        %v3777 = vunpack.c.l.s4 1934713408
        %v3778 = vunpack.c.0.s8 %v3777
        %v3779 = vlaneseq
        %v3780 = vshrl.u32 %v3779, 7
        %v3781 = vsub.s32 %v3778, %v3780
        %v3782 = vrot.slane %v3774, %v3781
        %v3784 = vunpack.c.l.s4 1934713408
        %v3785 = vunpack.c.0.s8 %v3784
        %v3786 = vlaneseq
        %v3787 = vshrl.u32 %v3786, 7
        %v3788 = vsub.s32 %v3785, %v3787
        %v3789 = vrot.slane %v3775, %v3788
        %v3790 = vcombine.high %v3766, 0.0
        %v3791 = vcombine.high %v3773, 0.0
        %v3792 = vcombine.high %v3782, 0.0
        %v3793 = vcombine.high %v3789, 0.0
        %3795 = vrot.lane.b32.xlu0 %v3722, 16
        %v3796 = vpop.permute.xlu0 %3795
        %3799 = vrot.lane.b32.xlu0 %v3705, 32
        %v3800 = vpop.permute.xlu0 %3799
        %3803 = vrot.lane.b32.xlu0 %v3723, 48
        %v3804 = vpop.permute.xlu0 %3803
        %3807 = vrot.lane.b32.xlu0 %v3714, 64
        %v3808 = vpop.permute.xlu0 %3807
        %3811 = vrot.lane.b32.xlu0 %v3724, 80
        %v3812 = vpop.permute.xlu0 %3811
        %3815 = vrot.lane.b32.xlu0 %v3721, 96
        %v3816 = vpop.permute.xlu0 %3815
        %3819 = vrot.lane.b32.xlu0 %v3725, 112
        %v3820 = vpop.permute.xlu0 %3819
        %3823 = vrot.lane.b32.xlu0 %v3790, 16
        %v3824 = vpop.permute.xlu0 %3823
        %3827 = vrot.lane.b32.xlu0 %v3773, 32
        %v3828 = vpop.permute.xlu0 %3827
        %3831 = vrot.lane.b32.xlu0 %v3791, 48
        %v3832 = vpop.permute.xlu0 %3831
        %3835 = vrot.lane.b32.xlu0 %v3782, 64
        %v3836 = vpop.permute.xlu0 %3835
        %3839 = vrot.lane.b32.xlu0 %v3792, 80
        %v3840 = vpop.permute.xlu0 %3839
        %3843 = vrot.lane.b32.xlu0 %v3789, 96
        %v3844 = vpop.permute.xlu0 %3843
        %3847 = vrot.lane.b32.xlu0 %v3793, 112
        %v3848 = vpop.permute.xlu0 %3847
        %v3850 = vsel %vm758, %v3698, %v3796
        %v3851 = vsel %vm760, %v3850, %v3800
        %v3852 = vsel %vm762, %v3851, %v3804
        %v3853 = vsel %vm764, %v3852, %v3808
        %v3854 = vsel %vm766, %v3853, %v3812
        %v3855 = vsel %vm768, %v3854, %v3816
        %v3856 = vsel %vm770, %v3855, %v3820
        %v3857 = vsel %vm758, %v3766, %v3824
        %v3858 = vsel %vm760, %v3857, %v3828
        %v3859 = vsel %vm762, %v3858, %v3832
        %v3860 = vsel %vm764, %v3859, %v3836
        %v3861 = vsel %vm766, %v3860, %v3840
        %v3862 = vsel %vm768, %v3861, %v3844
        %v3863 = vsel %vm770, %v3862, %v3848
        %3864 = vst [vmem:[#allocation3 + $0x10] sm:$0xf] %v3856
        %3865 = vst [vmem:[#allocation3 + $0x18] sm:$0xf] %v3863
        %v3866 = vld [vmem:[#allocation2 + $0x1] sm:$0xff]
        %v3867 = vld [vmem:[#allocation2 + $0x9] sm:$0xff]
        %v3868 = vld [vmem:[#allocation2 + $0x19] sm:$0xff]
        %v3869 = vld [vmem:[#allocation2 + $0x21] sm:$0xff]
        %v3870 = vld [vmem:[#allocation2 + $0x31] sm:$0xff]
        %v3871 = vld [vmem:[#allocation2 + $0x39] sm:$0xff]
        %v3872 = vld [vmem:[#allocation2 + $0x49] sm:$0xff]
        %v3873 = vld [vmem:[#allocation2 + $0x51] sm:$0xff]
        %v3874 = vcombine.low %v3866, %v3870
        %v3875 = vcombine.high %v3866, %v3870
        %v3877 = vunpack.c.l.s4 1983009808
        %v3878 = vunpack.c.0.s8 %v3877
        %v3879 = vlaneseq
        %v3880 = vshrl.u32 %v3879, 7
        %v3881 = vsub.s32 %v3878, %v3880
        %v3882 = vrot.slane %v3874, %v3881
        %v3884 = vunpack.c.l.s4 1983009808
        %v3885 = vunpack.c.0.s8 %v3884
        %v3886 = vlaneseq
        %v3887 = vshrl.u32 %v3886, 7
        %v3888 = vsub.s32 %v3885, %v3887
        %v3889 = vrot.slane %v3875, %v3888
        %v3890 = vcombine.low %v3868, %v3872
        %v3891 = vcombine.high %v3868, %v3872
        %v3893 = vunpack.c.l.s4 1983009808
        %v3894 = vunpack.c.0.s8 %v3893
        %v3895 = vlaneseq
        %v3896 = vshrl.u32 %v3895, 7
        %v3897 = vsub.s32 %v3894, %v3896
        %v3898 = vrot.slane %v3890, %v3897
        %v3900 = vunpack.c.l.s4 1983009808
        %v3901 = vunpack.c.0.s8 %v3900
        %v3902 = vlaneseq
        %v3903 = vshrl.u32 %v3902, 7
        %v3904 = vsub.s32 %v3901, %v3903
        %v3905 = vrot.slane %v3891, %v3904
        %v3906 = vcombine.low %v3882, %v3898
        %v3907 = vcombine.high %v3882, %v3898
        %v3909 = vunpack.c.l.s4 1934713408
        %v3910 = vunpack.c.0.s8 %v3909
        %v3911 = vlaneseq
        %v3912 = vshrl.u32 %v3911, 7
        %v3913 = vsub.s32 %v3910, %v3912
        %v3914 = vrot.slane %v3906, %v3913
        %v3916 = vunpack.c.l.s4 1934713408
        %v3917 = vunpack.c.0.s8 %v3916
        %v3918 = vlaneseq
        %v3919 = vshrl.u32 %v3918, 7
        %v3920 = vsub.s32 %v3917, %v3919
        %v3921 = vrot.slane %v3907, %v3920
        %v3922 = vcombine.low %v3889, %v3905
        %v3923 = vcombine.high %v3889, %v3905
        %v3925 = vunpack.c.l.s4 1934713408
        %v3926 = vunpack.c.0.s8 %v3925
        %v3927 = vlaneseq
        %v3928 = vshrl.u32 %v3927, 7
        %v3929 = vsub.s32 %v3926, %v3928
        %v3930 = vrot.slane %v3922, %v3929
        %v3932 = vunpack.c.l.s4 1934713408
        %v3933 = vunpack.c.0.s8 %v3932
        %v3934 = vlaneseq
        %v3935 = vshrl.u32 %v3934, 7
        %v3936 = vsub.s32 %v3933, %v3935
        %v3937 = vrot.slane %v3923, %v3936
        %v3938 = vcombine.high %v3914, 0.0
        %v3939 = vcombine.high %v3921, 0.0
        %v3940 = vcombine.high %v3930, 0.0
        %v3941 = vcombine.high %v3937, 0.0
        %v3942 = vcombine.low %v3867, %v3871
        %v3943 = vcombine.high %v3867, %v3871
        %v3945 = vunpack.c.l.s4 1983009808
        %v3946 = vunpack.c.0.s8 %v3945
        %v3947 = vlaneseq
        %v3948 = vshrl.u32 %v3947, 7
        %v3949 = vsub.s32 %v3946, %v3948
        %v3950 = vrot.slane %v3942, %v3949
        %v3952 = vunpack.c.l.s4 1983009808
        %v3953 = vunpack.c.0.s8 %v3952
        %v3954 = vlaneseq
        %v3955 = vshrl.u32 %v3954, 7
        %v3956 = vsub.s32 %v3953, %v3955
        %v3957 = vrot.slane %v3943, %v3956
        %v3958 = vcombine.low %v3869, %v3873
        %v3959 = vcombine.high %v3869, %v3873
        %v3961 = vunpack.c.l.s4 1983009808
        %v3962 = vunpack.c.0.s8 %v3961
        %v3963 = vlaneseq
        %v3964 = vshrl.u32 %v3963, 7
        %v3965 = vsub.s32 %v3962, %v3964
        %v3966 = vrot.slane %v3958, %v3965
        %v3968 = vunpack.c.l.s4 1983009808
        %v3969 = vunpack.c.0.s8 %v3968
        %v3970 = vlaneseq
        %v3971 = vshrl.u32 %v3970, 7
        %v3972 = vsub.s32 %v3969, %v3971
        %v3973 = vrot.slane %v3959, %v3972
        %v3974 = vcombine.low %v3950, %v3966
        %v3975 = vcombine.high %v3950, %v3966
        %v3977 = vunpack.c.l.s4 1934713408
        %v3978 = vunpack.c.0.s8 %v3977
        %v3979 = vlaneseq
        %v3980 = vshrl.u32 %v3979, 7
        %v3981 = vsub.s32 %v3978, %v3980
        %v3982 = vrot.slane %v3974, %v3981
        %v3984 = vunpack.c.l.s4 1934713408
        %v3985 = vunpack.c.0.s8 %v3984
        %v3986 = vlaneseq
        %v3987 = vshrl.u32 %v3986, 7
        %v3988 = vsub.s32 %v3985, %v3987
        %v3989 = vrot.slane %v3975, %v3988
        %v3990 = vcombine.low %v3957, %v3973
        %v3991 = vcombine.high %v3957, %v3973
        %v3993 = vunpack.c.l.s4 1934713408
        %v3994 = vunpack.c.0.s8 %v3993
        %v3995 = vlaneseq
        %v3996 = vshrl.u32 %v3995, 7
        %v3997 = vsub.s32 %v3994, %v3996
        %v3998 = vrot.slane %v3990, %v3997
        %v4000 = vunpack.c.l.s4 1934713408
        %v4001 = vunpack.c.0.s8 %v4000
        %v4002 = vlaneseq
        %v4003 = vshrl.u32 %v4002, 7
        %v4004 = vsub.s32 %v4001, %v4003
        %v4005 = vrot.slane %v3991, %v4004
        %v4006 = vcombine.high %v3982, 0.0
        %v4007 = vcombine.high %v3989, 0.0
        %v4008 = vcombine.high %v3998, 0.0
        %v4009 = vcombine.high %v4005, 0.0
        %4011 = vrot.lane.b32.xlu0 %v3938, 16
        %v4012 = vpop.permute.xlu0 %4011
        %4015 = vrot.lane.b32.xlu0 %v3921, 32
        %v4016 = vpop.permute.xlu0 %4015
        %4019 = vrot.lane.b32.xlu0 %v3939, 48
        %v4020 = vpop.permute.xlu0 %4019
        %4023 = vrot.lane.b32.xlu0 %v3930, 64
        %v4024 = vpop.permute.xlu0 %4023
        %4027 = vrot.lane.b32.xlu0 %v3940, 80
        %v4028 = vpop.permute.xlu0 %4027
        %4031 = vrot.lane.b32.xlu0 %v3937, 96
        %v4032 = vpop.permute.xlu0 %4031
        %4035 = vrot.lane.b32.xlu0 %v3941, 112
        %v4036 = vpop.permute.xlu0 %4035
        %4039 = vrot.lane.b32.xlu0 %v4006, 16
        %v4040 = vpop.permute.xlu0 %4039
        %4043 = vrot.lane.b32.xlu0 %v3989, 32
        %v4044 = vpop.permute.xlu0 %4043
        %4047 = vrot.lane.b32.xlu0 %v4007, 48
        %v4048 = vpop.permute.xlu0 %4047
        %4051 = vrot.lane.b32.xlu0 %v3998, 64
        %v4052 = vpop.permute.xlu0 %4051
        %4055 = vrot.lane.b32.xlu0 %v4008, 80
        %v4056 = vpop.permute.xlu0 %4055
        %4059 = vrot.lane.b32.xlu0 %v4005, 96
        %v4060 = vpop.permute.xlu0 %4059
        %4063 = vrot.lane.b32.xlu0 %v4009, 112
        %v4064 = vpop.permute.xlu0 %4063
        %v4066 = vsel %vm758, %v3914, %v4012
        %v4067 = vsel %vm760, %v4066, %v4016
        %v4068 = vsel %vm762, %v4067, %v4020
        %v4069 = vsel %vm764, %v4068, %v4024
        %v4070 = vsel %vm766, %v4069, %v4028
        %v4071 = vsel %vm768, %v4070, %v4032
        %v4072 = vsel %vm770, %v4071, %v4036
        %v4073 = vsel %vm758, %v3982, %v4040
        %v4074 = vsel %vm760, %v4073, %v4044
        %v4075 = vsel %vm762, %v4074, %v4048
        %v4076 = vsel %vm764, %v4075, %v4052
        %v4077 = vsel %vm766, %v4076, %v4056
        %v4078 = vsel %vm768, %v4077, %v4060
        %v4079 = vsel %vm770, %v4078, %v4064
        %v4082 = vrot.slane %v4072, 4
        %v4083 = vrot.slane %v4079, 4
        %4086 = vst [vmem:[#allocation3 + $0x10] sm:$0xf0] %v4082
        %4087 = vst [vmem:[#allocation3 + $0x18] sm:$0xf0] %v4083
        %v4088 = vld [vmem:[#allocation2 + $0x1] sm:$0xff]
        %v4089 = vld [vmem:[#allocation2 + $0x9] sm:$0xff]
        %v4090 = vld [vmem:[#allocation2 + $0x19] sm:$0xff]
        %v4091 = vld [vmem:[#allocation2 + $0x21] sm:$0xff]
        %v4092 = vld [vmem:[#allocation2 + $0x31] sm:$0xff]
        %v4093 = vld [vmem:[#allocation2 + $0x39] sm:$0xff]
        %v4094 = vld [vmem:[#allocation2 + $0x49] sm:$0xff]
        %v4095 = vld [vmem:[#allocation2 + $0x51] sm:$0xff]
        %4104 = vrot.lane.b32.xlu0 %v4088, 127
        %v4105 = vpop.permute.xlu0 %4104
        %4106 = vrot.lane.b32.xlu0 %v4089, 127
        %v4107 = vpop.permute.xlu0 %4106
        %4108 = vrot.lane.b32.xlu0 %v4090, 127
        %v4109 = vpop.permute.xlu0 %4108
        %4110 = vrot.lane.b32.xlu0 %v4091, 127
        %v4111 = vpop.permute.xlu0 %4110
        %4112 = vrot.lane.b32.xlu0 %v4092, 127
        %v4113 = vpop.permute.xlu0 %4112
        %4114 = vrot.lane.b32.xlu0 %v4093, 127
        %v4115 = vpop.permute.xlu0 %4114
        %4116 = vrot.lane.b32.xlu0 %v4094, 127
        %v4117 = vpop.permute.xlu0 %4116
        %4118 = vrot.lane.b32.xlu0 %v4095, 127
        %v4119 = vpop.permute.xlu0 %4118
        %v4128 = vcombine.low %v4105, %v4113
        %v4129 = vcombine.high %v4105, %v4113
        %v4131 = vunpack.c.l.s4 1983009808
        %v4132 = vunpack.c.0.s8 %v4131
        %v4133 = vlaneseq
        %v4134 = vshrl.u32 %v4133, 7
        %v4135 = vsub.s32 %v4132, %v4134
        %v4136 = vrot.slane %v4128, %v4135
        %v4138 = vunpack.c.l.s4 1983009808
        %v4139 = vunpack.c.0.s8 %v4138
        %v4140 = vlaneseq
        %v4141 = vshrl.u32 %v4140, 7
        %v4142 = vsub.s32 %v4139, %v4141
        %v4143 = vrot.slane %v4129, %v4142
        %v4144 = vcombine.low %v4109, %v4117
        %v4145 = vcombine.high %v4109, %v4117
        %v4147 = vunpack.c.l.s4 1983009808
        %v4148 = vunpack.c.0.s8 %v4147
        %v4149 = vlaneseq
        %v4150 = vshrl.u32 %v4149, 7
        %v4151 = vsub.s32 %v4148, %v4150
        %v4152 = vrot.slane %v4144, %v4151
        %v4154 = vunpack.c.l.s4 1983009808
        %v4155 = vunpack.c.0.s8 %v4154
        %v4156 = vlaneseq
        %v4157 = vshrl.u32 %v4156, 7
        %v4158 = vsub.s32 %v4155, %v4157
        %v4159 = vrot.slane %v4145, %v4158
        %v4160 = vcombine.low %v4136, %v4152
        %v4161 = vcombine.high %v4136, %v4152
        %v4163 = vunpack.c.l.s4 1934713408
        %v4164 = vunpack.c.0.s8 %v4163
        %v4165 = vlaneseq
        %v4166 = vshrl.u32 %v4165, 7
        %v4167 = vsub.s32 %v4164, %v4166
        %v4168 = vrot.slane %v4160, %v4167
        %v4170 = vunpack.c.l.s4 1934713408
        %v4171 = vunpack.c.0.s8 %v4170
        %v4172 = vlaneseq
        %v4173 = vshrl.u32 %v4172, 7
        %v4174 = vsub.s32 %v4171, %v4173
        %v4175 = vrot.slane %v4161, %v4174
        %v4176 = vcombine.low %v4143, %v4159
        %v4177 = vcombine.high %v4143, %v4159
        %v4179 = vunpack.c.l.s4 1934713408
        %v4180 = vunpack.c.0.s8 %v4179
        %v4181 = vlaneseq
        %v4182 = vshrl.u32 %v4181, 7
        %v4183 = vsub.s32 %v4180, %v4182
        %v4184 = vrot.slane %v4176, %v4183
        %v4186 = vunpack.c.l.s4 1934713408
        %v4187 = vunpack.c.0.s8 %v4186
        %v4188 = vlaneseq
        %v4189 = vshrl.u32 %v4188, 7
        %v4190 = vsub.s32 %v4187, %v4189
        %v4191 = vrot.slane %v4177, %v4190
        %v4192 = vcombine.high %v4168, 0.0
        %v4193 = vcombine.high %v4175, 0.0
        %v4194 = vcombine.high %v4184, 0.0
        %v4195 = vcombine.high %v4191, 0.0
        %v4196 = vcombine.low %v4107, %v4115
        %v4197 = vcombine.high %v4107, %v4115
        %v4199 = vunpack.c.l.s4 1983009808
        %v4200 = vunpack.c.0.s8 %v4199
        %v4201 = vlaneseq
        %v4202 = vshrl.u32 %v4201, 7
        %v4203 = vsub.s32 %v4200, %v4202
        %v4204 = vrot.slane %v4196, %v4203
        %v4206 = vunpack.c.l.s4 1983009808
        %v4207 = vunpack.c.0.s8 %v4206
        %v4208 = vlaneseq
        %v4209 = vshrl.u32 %v4208, 7
        %v4210 = vsub.s32 %v4207, %v4209
        %v4211 = vrot.slane %v4197, %v4210
        %v4212 = vcombine.low %v4111, %v4119
        %v4213 = vcombine.high %v4111, %v4119
        %v4215 = vunpack.c.l.s4 1983009808
        %v4216 = vunpack.c.0.s8 %v4215
        %v4217 = vlaneseq
        %v4218 = vshrl.u32 %v4217, 7
        %v4219 = vsub.s32 %v4216, %v4218
        %v4220 = vrot.slane %v4212, %v4219
        %v4222 = vunpack.c.l.s4 1983009808
        %v4223 = vunpack.c.0.s8 %v4222
        %v4224 = vlaneseq
        %v4225 = vshrl.u32 %v4224, 7
        %v4226 = vsub.s32 %v4223, %v4225
        %v4227 = vrot.slane %v4213, %v4226
        %v4228 = vcombine.low %v4204, %v4220
        %v4229 = vcombine.high %v4204, %v4220
        %v4231 = vunpack.c.l.s4 1934713408
        %v4232 = vunpack.c.0.s8 %v4231
        %v4233 = vlaneseq
        %v4234 = vshrl.u32 %v4233, 7
        %v4235 = vsub.s32 %v4232, %v4234
        %v4236 = vrot.slane %v4228, %v4235
        %v4238 = vunpack.c.l.s4 1934713408
        %v4239 = vunpack.c.0.s8 %v4238
        %v4240 = vlaneseq
        %v4241 = vshrl.u32 %v4240, 7
        %v4242 = vsub.s32 %v4239, %v4241
        %v4243 = vrot.slane %v4229, %v4242
        %v4244 = vcombine.low %v4211, %v4227
        %v4245 = vcombine.high %v4211, %v4227
        %v4247 = vunpack.c.l.s4 1934713408
        %v4248 = vunpack.c.0.s8 %v4247
        %v4249 = vlaneseq
        %v4250 = vshrl.u32 %v4249, 7
        %v4251 = vsub.s32 %v4248, %v4250
        %v4252 = vrot.slane %v4244, %v4251
        %v4254 = vunpack.c.l.s4 1934713408
        %v4255 = vunpack.c.0.s8 %v4254
        %v4256 = vlaneseq
        %v4257 = vshrl.u32 %v4256, 7
        %v4258 = vsub.s32 %v4255, %v4257
        %v4259 = vrot.slane %v4245, %v4258
        %v4260 = vcombine.high %v4236, 0.0
        %v4261 = vcombine.high %v4243, 0.0
        %v4262 = vcombine.high %v4252, 0.0
        %v4263 = vcombine.high %v4259, 0.0
        %4265 = vrot.lane.b32.xlu0 %v4192, 16
        %v4266 = vpop.permute.xlu0 %4265
        %4269 = vrot.lane.b32.xlu0 %v4175, 32
        %v4270 = vpop.permute.xlu0 %4269
        %4273 = vrot.lane.b32.xlu0 %v4193, 48
        %v4274 = vpop.permute.xlu0 %4273
        %4277 = vrot.lane.b32.xlu0 %v4184, 64
        %v4278 = vpop.permute.xlu0 %4277
        %4281 = vrot.lane.b32.xlu0 %v4194, 80
        %v4282 = vpop.permute.xlu0 %4281
        %4285 = vrot.lane.b32.xlu0 %v4191, 96
        %v4286 = vpop.permute.xlu0 %4285
        %4289 = vrot.lane.b32.xlu0 %v4195, 112
        %v4290 = vpop.permute.xlu0 %4289
        %4293 = vrot.lane.b32.xlu0 %v4260, 16
        %v4294 = vpop.permute.xlu0 %4293
        %4297 = vrot.lane.b32.xlu0 %v4243, 32
        %v4298 = vpop.permute.xlu0 %4297
        %4301 = vrot.lane.b32.xlu0 %v4261, 48
        %v4302 = vpop.permute.xlu0 %4301
        %4305 = vrot.lane.b32.xlu0 %v4252, 64
        %v4306 = vpop.permute.xlu0 %4305
        %4309 = vrot.lane.b32.xlu0 %v4262, 80
        %v4310 = vpop.permute.xlu0 %4309
        %4313 = vrot.lane.b32.xlu0 %v4259, 96
        %v4314 = vpop.permute.xlu0 %4313
        %4317 = vrot.lane.b32.xlu0 %v4263, 112
        %v4318 = vpop.permute.xlu0 %4317
        %v4320 = vsel %vm758, %v4168, %v4266
        %v4321 = vsel %vm760, %v4320, %v4270
        %v4322 = vsel %vm762, %v4321, %v4274
        %v4323 = vsel %vm764, %v4322, %v4278
        %v4324 = vsel %vm766, %v4323, %v4282
        %v4325 = vsel %vm768, %v4324, %v4286
        %v4326 = vsel %vm770, %v4325, %v4290
        %v4327 = vsel %vm758, %v4236, %v4294
        %v4328 = vsel %vm760, %v4327, %v4298
        %v4329 = vsel %vm762, %v4328, %v4302
        %v4330 = vsel %vm764, %v4329, %v4306
        %v4331 = vsel %vm766, %v4330, %v4310
        %v4332 = vsel %vm768, %v4331, %v4314
        %v4333 = vsel %vm770, %v4332, %v4318
        %4334 = vst [vmem:[#allocation3 + $0x20] sm:$0xf] %v4326
        %4335 = vst [vmem:[#allocation3 + $0x28] sm:$0xf] %v4333
        %v4336 = vld [vmem:[#allocation2 + $0x1] sm:$0xff]
        %v4337 = vld [vmem:[#allocation2 + $0x9] sm:$0xff]
        %v4338 = vld [vmem:[#allocation2 + $0x19] sm:$0xff]
        %v4339 = vld [vmem:[#allocation2 + $0x21] sm:$0xff]
        %v4340 = vld [vmem:[#allocation2 + $0x31] sm:$0xff]
        %v4341 = vld [vmem:[#allocation2 + $0x39] sm:$0xff]
        %v4342 = vld [vmem:[#allocation2 + $0x49] sm:$0xff]
        %v4343 = vld [vmem:[#allocation2 + $0x51] sm:$0xff]
        %4352 = vrot.lane.b32.xlu0 %v4336, 126
        %v4353 = vpop.permute.xlu0 %4352
        %4354 = vrot.lane.b32.xlu0 %v4337, 126
        %v4355 = vpop.permute.xlu0 %4354
        %4356 = vrot.lane.b32.xlu0 %v4338, 126
        %v4357 = vpop.permute.xlu0 %4356
        %4358 = vrot.lane.b32.xlu0 %v4339, 126
        %v4359 = vpop.permute.xlu0 %4358
        %4360 = vrot.lane.b32.xlu0 %v4340, 126
        %v4361 = vpop.permute.xlu0 %4360
        %4362 = vrot.lane.b32.xlu0 %v4341, 126
        %v4363 = vpop.permute.xlu0 %4362
        %4364 = vrot.lane.b32.xlu0 %v4342, 126
        %v4365 = vpop.permute.xlu0 %4364
        %4366 = vrot.lane.b32.xlu0 %v4343, 126
        %v4367 = vpop.permute.xlu0 %4366
        %v4376 = vcombine.low %v4353, %v4361
        %v4377 = vcombine.high %v4353, %v4361
        %v4379 = vunpack.c.l.s4 1983009808
        %v4380 = vunpack.c.0.s8 %v4379
        %v4381 = vlaneseq
        %v4382 = vshrl.u32 %v4381, 7
        %v4383 = vsub.s32 %v4380, %v4382
        %v4384 = vrot.slane %v4376, %v4383
        %v4386 = vunpack.c.l.s4 1983009808
        %v4387 = vunpack.c.0.s8 %v4386
        %v4388 = vlaneseq
        %v4389 = vshrl.u32 %v4388, 7
        %v4390 = vsub.s32 %v4387, %v4389
        %v4391 = vrot.slane %v4377, %v4390
        %v4392 = vcombine.low %v4357, %v4365
        %v4393 = vcombine.high %v4357, %v4365
        %v4395 = vunpack.c.l.s4 1983009808
        %v4396 = vunpack.c.0.s8 %v4395
        %v4397 = vlaneseq
        %v4398 = vshrl.u32 %v4397, 7
        %v4399 = vsub.s32 %v4396, %v4398
        %v4400 = vrot.slane %v4392, %v4399
        %v4402 = vunpack.c.l.s4 1983009808
        %v4403 = vunpack.c.0.s8 %v4402
        %v4404 = vlaneseq
        %v4405 = vshrl.u32 %v4404, 7
        %v4406 = vsub.s32 %v4403, %v4405
        %v4407 = vrot.slane %v4393, %v4406
        %v4408 = vcombine.low %v4384, %v4400
        %v4409 = vcombine.high %v4384, %v4400
        %v4411 = vunpack.c.l.s4 1934713408
        %v4412 = vunpack.c.0.s8 %v4411
        %v4413 = vlaneseq
        %v4414 = vshrl.u32 %v4413, 7
        %v4415 = vsub.s32 %v4412, %v4414
        %v4416 = vrot.slane %v4408, %v4415
        %v4418 = vunpack.c.l.s4 1934713408
        %v4419 = vunpack.c.0.s8 %v4418
        %v4420 = vlaneseq
        %v4421 = vshrl.u32 %v4420, 7
        %v4422 = vsub.s32 %v4419, %v4421
        %v4423 = vrot.slane %v4409, %v4422
        %v4424 = vcombine.low %v4391, %v4407
        %v4425 = vcombine.high %v4391, %v4407
        %v4427 = vunpack.c.l.s4 1934713408
        %v4428 = vunpack.c.0.s8 %v4427
        %v4429 = vlaneseq
        %v4430 = vshrl.u32 %v4429, 7
        %v4431 = vsub.s32 %v4428, %v4430
        %v4432 = vrot.slane %v4424, %v4431
        %v4434 = vunpack.c.l.s4 1934713408
        %v4435 = vunpack.c.0.s8 %v4434
        %v4436 = vlaneseq
        %v4437 = vshrl.u32 %v4436, 7
        %v4438 = vsub.s32 %v4435, %v4437
        %v4439 = vrot.slane %v4425, %v4438
        %v4440 = vcombine.high %v4416, 0.0
        %v4441 = vcombine.high %v4423, 0.0
        %v4442 = vcombine.high %v4432, 0.0
        %v4443 = vcombine.high %v4439, 0.0
        %v4444 = vcombine.low %v4355, %v4363
        %v4445 = vcombine.high %v4355, %v4363
        %v4447 = vunpack.c.l.s4 1983009808
        %v4448 = vunpack.c.0.s8 %v4447
        %v4449 = vlaneseq
        %v4450 = vshrl.u32 %v4449, 7
        %v4451 = vsub.s32 %v4448, %v4450
        %v4452 = vrot.slane %v4444, %v4451
        %v4454 = vunpack.c.l.s4 1983009808
        %v4455 = vunpack.c.0.s8 %v4454
        %v4456 = vlaneseq
        %v4457 = vshrl.u32 %v4456, 7
        %v4458 = vsub.s32 %v4455, %v4457
        %v4459 = vrot.slane %v4445, %v4458
        %v4460 = vcombine.low %v4359, %v4367
        %v4461 = vcombine.high %v4359, %v4367
        %v4463 = vunpack.c.l.s4 1983009808
        %v4464 = vunpack.c.0.s8 %v4463
        %v4465 = vlaneseq
        %v4466 = vshrl.u32 %v4465, 7
        %v4467 = vsub.s32 %v4464, %v4466
        %v4468 = vrot.slane %v4460, %v4467
        %v4470 = vunpack.c.l.s4 1983009808
        %v4471 = vunpack.c.0.s8 %v4470
        %v4472 = vlaneseq
        %v4473 = vshrl.u32 %v4472, 7
        %v4474 = vsub.s32 %v4471, %v4473
        %v4475 = vrot.slane %v4461, %v4474
        %v4476 = vcombine.low %v4452, %v4468
        %v4477 = vcombine.high %v4452, %v4468
        %v4479 = vunpack.c.l.s4 1934713408
        %v4480 = vunpack.c.0.s8 %v4479
        %v4481 = vlaneseq
        %v4482 = vshrl.u32 %v4481, 7
        %v4483 = vsub.s32 %v4480, %v4482
        %v4484 = vrot.slane %v4476, %v4483
        %v4486 = vunpack.c.l.s4 1934713408
        %v4487 = vunpack.c.0.s8 %v4486
        %v4488 = vlaneseq
        %v4489 = vshrl.u32 %v4488, 7
        %v4490 = vsub.s32 %v4487, %v4489
        %v4491 = vrot.slane %v4477, %v4490
        %v4492 = vcombine.low %v4459, %v4475
        %v4493 = vcombine.high %v4459, %v4475
        %v4495 = vunpack.c.l.s4 1934713408
        %v4496 = vunpack.c.0.s8 %v4495
        %v4497 = vlaneseq
        %v4498 = vshrl.u32 %v4497, 7
        %v4499 = vsub.s32 %v4496, %v4498
        %v4500 = vrot.slane %v4492, %v4499
        %v4502 = vunpack.c.l.s4 1934713408
        %v4503 = vunpack.c.0.s8 %v4502
        %v4504 = vlaneseq
        %v4505 = vshrl.u32 %v4504, 7
        %v4506 = vsub.s32 %v4503, %v4505
        %v4507 = vrot.slane %v4493, %v4506
        %v4508 = vcombine.high %v4484, 0.0
        %v4509 = vcombine.high %v4491, 0.0
        %v4510 = vcombine.high %v4500, 0.0
        %v4511 = vcombine.high %v4507, 0.0
        %4513 = vrot.lane.b32.xlu0 %v4440, 16
        %v4514 = vpop.permute.xlu0 %4513
        %4517 = vrot.lane.b32.xlu0 %v4423, 32
        %v4518 = vpop.permute.xlu0 %4517
        %4521 = vrot.lane.b32.xlu0 %v4441, 48
        %v4522 = vpop.permute.xlu0 %4521
        %4525 = vrot.lane.b32.xlu0 %v4432, 64
        %v4526 = vpop.permute.xlu0 %4525
        %4529 = vrot.lane.b32.xlu0 %v4442, 80
        %v4530 = vpop.permute.xlu0 %4529
        %4533 = vrot.lane.b32.xlu0 %v4439, 96
        %v4534 = vpop.permute.xlu0 %4533
        %4537 = vrot.lane.b32.xlu0 %v4443, 112
        %v4538 = vpop.permute.xlu0 %4537
        %4541 = vrot.lane.b32.xlu0 %v4508, 16
        %v4542 = vpop.permute.xlu0 %4541
        %4545 = vrot.lane.b32.xlu0 %v4491, 32
        %v4546 = vpop.permute.xlu0 %4545
        %4549 = vrot.lane.b32.xlu0 %v4509, 48
        %v4550 = vpop.permute.xlu0 %4549
        %4553 = vrot.lane.b32.xlu0 %v4500, 64
        %v4554 = vpop.permute.xlu0 %4553
        %4557 = vrot.lane.b32.xlu0 %v4510, 80
        %v4558 = vpop.permute.xlu0 %4557
        %4561 = vrot.lane.b32.xlu0 %v4507, 96
        %v4562 = vpop.permute.xlu0 %4561
        %4565 = vrot.lane.b32.xlu0 %v4511, 112
        %v4566 = vpop.permute.xlu0 %4565
        %v4568 = vsel %vm758, %v4416, %v4514
        %v4569 = vsel %vm760, %v4568, %v4518
        %v4570 = vsel %vm762, %v4569, %v4522
        %v4571 = vsel %vm764, %v4570, %v4526
        %v4572 = vsel %vm766, %v4571, %v4530
        %v4573 = vsel %vm768, %v4572, %v4534
        %v4574 = vsel %vm770, %v4573, %v4538
        %v4575 = vsel %vm758, %v4484, %v4542
        %v4576 = vsel %vm760, %v4575, %v4546
        %v4577 = vsel %vm762, %v4576, %v4550
        %v4578 = vsel %vm764, %v4577, %v4554
        %v4579 = vsel %vm766, %v4578, %v4558
        %v4580 = vsel %vm768, %v4579, %v4562
        %v4581 = vsel %vm770, %v4580, %v4566
        %v4584 = vrot.slane %v4574, 4
        %v4585 = vrot.slane %v4581, 4
        %4588 = vst [vmem:[#allocation3 + $0x20] sm:$0xf0] %v4584
        %4589 = vst [vmem:[#allocation3 + $0x28] sm:$0xf0] %v4585
        %v4590 = vld [vmem:[#allocation2 + $0x2] sm:$0xff]
        %v4591 = vld [vmem:[#allocation2 + $0xa] sm:$0xff]
        %v4592 = vld [vmem:[#allocation2 + $0x1a] sm:$0xff]
        %v4593 = vld [vmem:[#allocation2 + $0x22] sm:$0xff]
        %v4594 = vld [vmem:[#allocation2 + $0x32] sm:$0xff]
        %v4595 = vld [vmem:[#allocation2 + $0x3a] sm:$0xff]
        %v4596 = vld [vmem:[#allocation2 + $0x4a] sm:$0xff]
        %v4597 = vld [vmem:[#allocation2 + $0x52] sm:$0xff]
        %v4598 = vcombine.low %v4590, %v4594
        %v4599 = vcombine.high %v4590, %v4594
        %v4601 = vunpack.c.l.s4 1983009808
        %v4602 = vunpack.c.0.s8 %v4601
        %v4603 = vlaneseq
        %v4604 = vshrl.u32 %v4603, 7
        %v4605 = vsub.s32 %v4602, %v4604
        %v4606 = vrot.slane %v4598, %v4605
        %v4608 = vunpack.c.l.s4 1983009808
        %v4609 = vunpack.c.0.s8 %v4608
        %v4610 = vlaneseq
        %v4611 = vshrl.u32 %v4610, 7
        %v4612 = vsub.s32 %v4609, %v4611
        %v4613 = vrot.slane %v4599, %v4612
        %v4614 = vcombine.low %v4592, %v4596
        %v4615 = vcombine.high %v4592, %v4596
        %v4617 = vunpack.c.l.s4 1983009808
        %v4618 = vunpack.c.0.s8 %v4617
        %v4619 = vlaneseq
        %v4620 = vshrl.u32 %v4619, 7
        %v4621 = vsub.s32 %v4618, %v4620
        %v4622 = vrot.slane %v4614, %v4621
        %v4624 = vunpack.c.l.s4 1983009808
        %v4625 = vunpack.c.0.s8 %v4624
        %v4626 = vlaneseq
        %v4627 = vshrl.u32 %v4626, 7
        %v4628 = vsub.s32 %v4625, %v4627
        %v4629 = vrot.slane %v4615, %v4628
        %v4630 = vcombine.low %v4606, %v4622
        %v4631 = vcombine.high %v4606, %v4622
        %v4633 = vunpack.c.l.s4 1934713408
        %v4634 = vunpack.c.0.s8 %v4633
        %v4635 = vlaneseq
        %v4636 = vshrl.u32 %v4635, 7
        %v4637 = vsub.s32 %v4634, %v4636
        %v4638 = vrot.slane %v4630, %v4637
        %v4640 = vunpack.c.l.s4 1934713408
        %v4641 = vunpack.c.0.s8 %v4640
        %v4642 = vlaneseq
        %v4643 = vshrl.u32 %v4642, 7
        %v4644 = vsub.s32 %v4641, %v4643
        %v4645 = vrot.slane %v4631, %v4644
        %v4646 = vcombine.low %v4613, %v4629
        %v4647 = vcombine.high %v4613, %v4629
        %v4649 = vunpack.c.l.s4 1934713408
        %v4650 = vunpack.c.0.s8 %v4649
        %v4651 = vlaneseq
        %v4652 = vshrl.u32 %v4651, 7
        %v4653 = vsub.s32 %v4650, %v4652
        %v4654 = vrot.slane %v4646, %v4653
        %v4656 = vunpack.c.l.s4 1934713408
        %v4657 = vunpack.c.0.s8 %v4656
        %v4658 = vlaneseq
        %v4659 = vshrl.u32 %v4658, 7
        %v4660 = vsub.s32 %v4657, %v4659
        %v4661 = vrot.slane %v4647, %v4660
        %v4662 = vcombine.high %v4638, 0.0
        %v4663 = vcombine.high %v4645, 0.0
        %v4664 = vcombine.high %v4654, 0.0
        %v4665 = vcombine.high %v4661, 0.0
        %v4666 = vcombine.low %v4591, %v4595
        %v4667 = vcombine.high %v4591, %v4595
        %v4669 = vunpack.c.l.s4 1983009808
        %v4670 = vunpack.c.0.s8 %v4669
        %v4671 = vlaneseq
        %v4672 = vshrl.u32 %v4671, 7
        %v4673 = vsub.s32 %v4670, %v4672
        %v4674 = vrot.slane %v4666, %v4673
        %v4676 = vunpack.c.l.s4 1983009808
        %v4677 = vunpack.c.0.s8 %v4676
        %v4678 = vlaneseq
        %v4679 = vshrl.u32 %v4678, 7
        %v4680 = vsub.s32 %v4677, %v4679
        %v4681 = vrot.slane %v4667, %v4680
        %v4682 = vcombine.low %v4593, %v4597
        %v4683 = vcombine.high %v4593, %v4597
        %v4685 = vunpack.c.l.s4 1983009808
        %v4686 = vunpack.c.0.s8 %v4685
        %v4687 = vlaneseq
        %v4688 = vshrl.u32 %v4687, 7
        %v4689 = vsub.s32 %v4686, %v4688
        %v4690 = vrot.slane %v4682, %v4689
        %v4692 = vunpack.c.l.s4 1983009808
        %v4693 = vunpack.c.0.s8 %v4692
        %v4694 = vlaneseq
        %v4695 = vshrl.u32 %v4694, 7
        %v4696 = vsub.s32 %v4693, %v4695
        %v4697 = vrot.slane %v4683, %v4696
        %v4698 = vcombine.low %v4674, %v4690
        %v4699 = vcombine.high %v4674, %v4690
        %v4701 = vunpack.c.l.s4 1934713408
        %v4702 = vunpack.c.0.s8 %v4701
        %v4703 = vlaneseq
        %v4704 = vshrl.u32 %v4703, 7
        %v4705 = vsub.s32 %v4702, %v4704
        %v4706 = vrot.slane %v4698, %v4705
        %v4708 = vunpack.c.l.s4 1934713408
        %v4709 = vunpack.c.0.s8 %v4708
        %v4710 = vlaneseq
        %v4711 = vshrl.u32 %v4710, 7
        %v4712 = vsub.s32 %v4709, %v4711
        %v4713 = vrot.slane %v4699, %v4712
        %v4714 = vcombine.low %v4681, %v4697
        %v4715 = vcombine.high %v4681, %v4697
        %v4717 = vunpack.c.l.s4 1934713408
        %v4718 = vunpack.c.0.s8 %v4717
        %v4719 = vlaneseq
        %v4720 = vshrl.u32 %v4719, 7
        %v4721 = vsub.s32 %v4718, %v4720
        %v4722 = vrot.slane %v4714, %v4721
        %v4724 = vunpack.c.l.s4 1934713408
        %v4725 = vunpack.c.0.s8 %v4724
        %v4726 = vlaneseq
        %v4727 = vshrl.u32 %v4726, 7
        %v4728 = vsub.s32 %v4725, %v4727
        %v4729 = vrot.slane %v4715, %v4728
        %v4730 = vcombine.high %v4706, 0.0
        %v4731 = vcombine.high %v4713, 0.0
        %v4732 = vcombine.high %v4722, 0.0
        %v4733 = vcombine.high %v4729, 0.0
        %4735 = vrot.lane.b32.xlu0 %v4662, 16
        %v4736 = vpop.permute.xlu0 %4735
        %4739 = vrot.lane.b32.xlu0 %v4645, 32
        %v4740 = vpop.permute.xlu0 %4739
        %4743 = vrot.lane.b32.xlu0 %v4663, 48
        %v4744 = vpop.permute.xlu0 %4743
        %4747 = vrot.lane.b32.xlu0 %v4654, 64
        %v4748 = vpop.permute.xlu0 %4747
        %4751 = vrot.lane.b32.xlu0 %v4664, 80
        %v4752 = vpop.permute.xlu0 %4751
        %4755 = vrot.lane.b32.xlu0 %v4661, 96
        %v4756 = vpop.permute.xlu0 %4755
        %4759 = vrot.lane.b32.xlu0 %v4665, 112
        %v4760 = vpop.permute.xlu0 %4759
        %4763 = vrot.lane.b32.xlu0 %v4730, 16
        %v4764 = vpop.permute.xlu0 %4763
        %4767 = vrot.lane.b32.xlu0 %v4713, 32
        %v4768 = vpop.permute.xlu0 %4767
        %4771 = vrot.lane.b32.xlu0 %v4731, 48
        %v4772 = vpop.permute.xlu0 %4771
        %4775 = vrot.lane.b32.xlu0 %v4722, 64
        %v4776 = vpop.permute.xlu0 %4775
        %4779 = vrot.lane.b32.xlu0 %v4732, 80
        %v4780 = vpop.permute.xlu0 %4779
        %4783 = vrot.lane.b32.xlu0 %v4729, 96
        %v4784 = vpop.permute.xlu0 %4783
        %4787 = vrot.lane.b32.xlu0 %v4733, 112
        %v4788 = vpop.permute.xlu0 %4787
        %v4790 = vsel %vm758, %v4638, %v4736
        %v4791 = vsel %vm760, %v4790, %v4740
        %v4792 = vsel %vm762, %v4791, %v4744
        %v4793 = vsel %vm764, %v4792, %v4748
        %v4794 = vsel %vm766, %v4793, %v4752
        %v4795 = vsel %vm768, %v4794, %v4756
        %v4796 = vsel %vm770, %v4795, %v4760
        %v4797 = vsel %vm758, %v4706, %v4764
        %v4798 = vsel %vm760, %v4797, %v4768
        %v4799 = vsel %vm762, %v4798, %v4772
        %v4800 = vsel %vm764, %v4799, %v4776
        %v4801 = vsel %vm766, %v4800, %v4780
        %v4802 = vsel %vm768, %v4801, %v4784
        %v4803 = vsel %vm770, %v4802, %v4788
        %4804 = vst [vmem:[#allocation3 + $0x30] sm:$0xf] %v4796
        %4805 = vst [vmem:[#allocation3 + $0x38] sm:$0xf] %v4803
        %v4806 = vld [vmem:[#allocation2 + $0x2] sm:$0xff]
        %v4807 = vld [vmem:[#allocation2 + $0xa] sm:$0xff]
        %v4808 = vld [vmem:[#allocation2 + $0x1a] sm:$0xff]
        %v4809 = vld [vmem:[#allocation2 + $0x22] sm:$0xff]
        %v4810 = vld [vmem:[#allocation2 + $0x32] sm:$0xff]
        %v4811 = vld [vmem:[#allocation2 + $0x3a] sm:$0xff]
        %v4812 = vld [vmem:[#allocation2 + $0x4a] sm:$0xff]
        %v4813 = vld [vmem:[#allocation2 + $0x52] sm:$0xff]
        %4822 = vrot.lane.b32.xlu0 %v4806, 127
        %v4823 = vpop.permute.xlu0 %4822
        %4824 = vrot.lane.b32.xlu0 %v4807, 127
        %v4825 = vpop.permute.xlu0 %4824
        %4826 = vrot.lane.b32.xlu0 %v4808, 127
        %v4827 = vpop.permute.xlu0 %4826
        %4828 = vrot.lane.b32.xlu0 %v4809, 127
        %v4829 = vpop.permute.xlu0 %4828
        %4830 = vrot.lane.b32.xlu0 %v4810, 127
        %v4831 = vpop.permute.xlu0 %4830
        %4832 = vrot.lane.b32.xlu0 %v4811, 127
        %v4833 = vpop.permute.xlu0 %4832
        %4834 = vrot.lane.b32.xlu0 %v4812, 127
        %v4835 = vpop.permute.xlu0 %4834
        %4836 = vrot.lane.b32.xlu0 %v4813, 127
        %v4837 = vpop.permute.xlu0 %4836
        %v4846 = vcombine.low %v4823, %v4831
        %v4847 = vcombine.high %v4823, %v4831
        %v4849 = vunpack.c.l.s4 1983009808
        %v4850 = vunpack.c.0.s8 %v4849
        %v4851 = vlaneseq
        %v4852 = vshrl.u32 %v4851, 7
        %v4853 = vsub.s32 %v4850, %v4852
        %v4854 = vrot.slane %v4846, %v4853
        %v4856 = vunpack.c.l.s4 1983009808
        %v4857 = vunpack.c.0.s8 %v4856
        %v4858 = vlaneseq
        %v4859 = vshrl.u32 %v4858, 7
        %v4860 = vsub.s32 %v4857, %v4859
        %v4861 = vrot.slane %v4847, %v4860
        %v4862 = vcombine.low %v4827, %v4835
        %v4863 = vcombine.high %v4827, %v4835
        %v4865 = vunpack.c.l.s4 1983009808
        %v4866 = vunpack.c.0.s8 %v4865
        %v4867 = vlaneseq
        %v4868 = vshrl.u32 %v4867, 7
        %v4869 = vsub.s32 %v4866, %v4868
        %v4870 = vrot.slane %v4862, %v4869
        %v4872 = vunpack.c.l.s4 1983009808
        %v4873 = vunpack.c.0.s8 %v4872
        %v4874 = vlaneseq
        %v4875 = vshrl.u32 %v4874, 7
        %v4876 = vsub.s32 %v4873, %v4875
        %v4877 = vrot.slane %v4863, %v4876
        %v4878 = vcombine.low %v4854, %v4870
        %v4879 = vcombine.high %v4854, %v4870
        %v4881 = vunpack.c.l.s4 1934713408
        %v4882 = vunpack.c.0.s8 %v4881
        %v4883 = vlaneseq
        %v4884 = vshrl.u32 %v4883, 7
        %v4885 = vsub.s32 %v4882, %v4884
        %v4886 = vrot.slane %v4878, %v4885
        %v4888 = vunpack.c.l.s4 1934713408
        %v4889 = vunpack.c.0.s8 %v4888
        %v4890 = vlaneseq
        %v4891 = vshrl.u32 %v4890, 7
        %v4892 = vsub.s32 %v4889, %v4891
        %v4893 = vrot.slane %v4879, %v4892
        %v4894 = vcombine.low %v4861, %v4877
        %v4895 = vcombine.high %v4861, %v4877
        %v4897 = vunpack.c.l.s4 1934713408
        %v4898 = vunpack.c.0.s8 %v4897
        %v4899 = vlaneseq
        %v4900 = vshrl.u32 %v4899, 7
        %v4901 = vsub.s32 %v4898, %v4900
        %v4902 = vrot.slane %v4894, %v4901
        %v4904 = vunpack.c.l.s4 1934713408
        %v4905 = vunpack.c.0.s8 %v4904
        %v4906 = vlaneseq
        %v4907 = vshrl.u32 %v4906, 7
        %v4908 = vsub.s32 %v4905, %v4907
        %v4909 = vrot.slane %v4895, %v4908
        %v4910 = vcombine.high %v4886, 0.0
        %v4911 = vcombine.high %v4893, 0.0
        %v4912 = vcombine.high %v4902, 0.0
        %v4913 = vcombine.high %v4909, 0.0
        %v4914 = vcombine.low %v4825, %v4833
        %v4915 = vcombine.high %v4825, %v4833
        %v4917 = vunpack.c.l.s4 1983009808
        %v4918 = vunpack.c.0.s8 %v4917
        %v4919 = vlaneseq
        %v4920 = vshrl.u32 %v4919, 7
        %v4921 = vsub.s32 %v4918, %v4920
        %v4922 = vrot.slane %v4914, %v4921
        %v4924 = vunpack.c.l.s4 1983009808
        %v4925 = vunpack.c.0.s8 %v4924
        %v4926 = vlaneseq
        %v4927 = vshrl.u32 %v4926, 7
        %v4928 = vsub.s32 %v4925, %v4927
        %v4929 = vrot.slane %v4915, %v4928
        %v4930 = vcombine.low %v4829, %v4837
        %v4931 = vcombine.high %v4829, %v4837
        %v4933 = vunpack.c.l.s4 1983009808
        %v4934 = vunpack.c.0.s8 %v4933
        %v4935 = vlaneseq
        %v4936 = vshrl.u32 %v4935, 7
        %v4937 = vsub.s32 %v4934, %v4936
        %v4938 = vrot.slane %v4930, %v4937
        %v4940 = vunpack.c.l.s4 1983009808
        %v4941 = vunpack.c.0.s8 %v4940
        %v4942 = vlaneseq
        %v4943 = vshrl.u32 %v4942, 7
        %v4944 = vsub.s32 %v4941, %v4943
        %v4945 = vrot.slane %v4931, %v4944
        %v4946 = vcombine.low %v4922, %v4938
        %v4947 = vcombine.high %v4922, %v4938
        %v4949 = vunpack.c.l.s4 1934713408
        %v4950 = vunpack.c.0.s8 %v4949
        %v4951 = vlaneseq
        %v4952 = vshrl.u32 %v4951, 7
        %v4953 = vsub.s32 %v4950, %v4952
        %v4954 = vrot.slane %v4946, %v4953
        %v4956 = vunpack.c.l.s4 1934713408
        %v4957 = vunpack.c.0.s8 %v4956
        %v4958 = vlaneseq
        %v4959 = vshrl.u32 %v4958, 7
        %v4960 = vsub.s32 %v4957, %v4959
        %v4961 = vrot.slane %v4947, %v4960
        %v4962 = vcombine.low %v4929, %v4945
        %v4963 = vcombine.high %v4929, %v4945
        %v4965 = vunpack.c.l.s4 1934713408
        %v4966 = vunpack.c.0.s8 %v4965
        %v4967 = vlaneseq
        %v4968 = vshrl.u32 %v4967, 7
        %v4969 = vsub.s32 %v4966, %v4968
        %v4970 = vrot.slane %v4962, %v4969
        %v4972 = vunpack.c.l.s4 1934713408
        %v4973 = vunpack.c.0.s8 %v4972
        %v4974 = vlaneseq
        %v4975 = vshrl.u32 %v4974, 7
        %v4976 = vsub.s32 %v4973, %v4975
        %v4977 = vrot.slane %v4963, %v4976
        %v4978 = vcombine.high %v4954, 0.0
        %v4979 = vcombine.high %v4961, 0.0
        %v4980 = vcombine.high %v4970, 0.0
        %v4981 = vcombine.high %v4977, 0.0
        %4983 = vrot.lane.b32.xlu0 %v4910, 16
        %v4984 = vpop.permute.xlu0 %4983
        %4987 = vrot.lane.b32.xlu0 %v4893, 32
        %v4988 = vpop.permute.xlu0 %4987
        %4991 = vrot.lane.b32.xlu0 %v4911, 48
        %v4992 = vpop.permute.xlu0 %4991
        %4995 = vrot.lane.b32.xlu0 %v4902, 64
        %v4996 = vpop.permute.xlu0 %4995
        %4999 = vrot.lane.b32.xlu0 %v4912, 80
        %v5000 = vpop.permute.xlu0 %4999
        %5003 = vrot.lane.b32.xlu0 %v4909, 96
        %v5004 = vpop.permute.xlu0 %5003
        %5007 = vrot.lane.b32.xlu0 %v4913, 112
        %v5008 = vpop.permute.xlu0 %5007
        %5011 = vrot.lane.b32.xlu0 %v4978, 16
        %v5012 = vpop.permute.xlu0 %5011
        %5015 = vrot.lane.b32.xlu0 %v4961, 32
        %v5016 = vpop.permute.xlu0 %5015
        %5019 = vrot.lane.b32.xlu0 %v4979, 48
        %v5020 = vpop.permute.xlu0 %5019
        %5023 = vrot.lane.b32.xlu0 %v4970, 64
        %v5024 = vpop.permute.xlu0 %5023
        %5027 = vrot.lane.b32.xlu0 %v4980, 80
        %v5028 = vpop.permute.xlu0 %5027
        %5031 = vrot.lane.b32.xlu0 %v4977, 96
        %v5032 = vpop.permute.xlu0 %5031
        %5035 = vrot.lane.b32.xlu0 %v4981, 112
        %v5036 = vpop.permute.xlu0 %5035
        %v5038 = vsel %vm758, %v4886, %v4984
        %v5039 = vsel %vm760, %v5038, %v4988
        %v5040 = vsel %vm762, %v5039, %v4992
        %v5041 = vsel %vm764, %v5040, %v4996
        %v5042 = vsel %vm766, %v5041, %v5000
        %v5043 = vsel %vm768, %v5042, %v5004
        %v5044 = vsel %vm770, %v5043, %v5008
        %v5045 = vsel %vm758, %v4954, %v5012
        %v5046 = vsel %vm760, %v5045, %v5016
        %v5047 = vsel %vm762, %v5046, %v5020
        %v5048 = vsel %vm764, %v5047, %v5024
        %v5049 = vsel %vm766, %v5048, %v5028
        %v5050 = vsel %vm768, %v5049, %v5032
        %v5051 = vsel %vm770, %v5050, %v5036
        %v5054 = vrot.slane %v5044, 4
        %v5055 = vrot.slane %v5051, 4
        %5058 = vst [vmem:[#allocation3 + $0x30] sm:$0xf0] %v5054
        %5059 = vst [vmem:[#allocation3 + $0x38] sm:$0xf0] %v5055
        %v5060 = vld [vmem:[#allocation2 + $0x2] sm:$0xff]
        %v5061 = vld [vmem:[#allocation2 + $0xa] sm:$0xff]
        %v5062 = vld [vmem:[#allocation2 + $0x1a] sm:$0xff]
        %v5063 = vld [vmem:[#allocation2 + $0x22] sm:$0xff]
        %v5064 = vld [vmem:[#allocation2 + $0x32] sm:$0xff]
        %v5065 = vld [vmem:[#allocation2 + $0x3a] sm:$0xff]
        %v5066 = vld [vmem:[#allocation2 + $0x4a] sm:$0xff]
        %v5067 = vld [vmem:[#allocation2 + $0x52] sm:$0xff]
        %5076 = vrot.lane.b32.xlu0 %v5060, 126
        %v5077 = vpop.permute.xlu0 %5076
        %5078 = vrot.lane.b32.xlu0 %v5061, 126
        %v5079 = vpop.permute.xlu0 %5078
        %5080 = vrot.lane.b32.xlu0 %v5062, 126
        %v5081 = vpop.permute.xlu0 %5080
        %5082 = vrot.lane.b32.xlu0 %v5063, 126
        %v5083 = vpop.permute.xlu0 %5082
        %5084 = vrot.lane.b32.xlu0 %v5064, 126
        %v5085 = vpop.permute.xlu0 %5084
        %5086 = vrot.lane.b32.xlu0 %v5065, 126
        %v5087 = vpop.permute.xlu0 %5086
        %5088 = vrot.lane.b32.xlu0 %v5066, 126
        %v5089 = vpop.permute.xlu0 %5088
        %5090 = vrot.lane.b32.xlu0 %v5067, 126
        %v5091 = vpop.permute.xlu0 %5090
        %v5100 = vcombine.low %v5077, %v5085
        %v5101 = vcombine.high %v5077, %v5085
        %v5103 = vunpack.c.l.s4 1983009808
        %v5104 = vunpack.c.0.s8 %v5103
        %v5105 = vlaneseq
        %v5106 = vshrl.u32 %v5105, 7
        %v5107 = vsub.s32 %v5104, %v5106
        %v5108 = vrot.slane %v5100, %v5107
        %v5110 = vunpack.c.l.s4 1983009808
        %v5111 = vunpack.c.0.s8 %v5110
        %v5112 = vlaneseq
        %v5113 = vshrl.u32 %v5112, 7
        %v5114 = vsub.s32 %v5111, %v5113
        %v5115 = vrot.slane %v5101, %v5114
        %v5116 = vcombine.low %v5081, %v5089
        %v5117 = vcombine.high %v5081, %v5089
        %v5119 = vunpack.c.l.s4 1983009808
        %v5120 = vunpack.c.0.s8 %v5119
        %v5121 = vlaneseq
        %v5122 = vshrl.u32 %v5121, 7
        %v5123 = vsub.s32 %v5120, %v5122
        %v5124 = vrot.slane %v5116, %v5123
        %v5126 = vunpack.c.l.s4 1983009808
        %v5127 = vunpack.c.0.s8 %v5126
        %v5128 = vlaneseq
        %v5129 = vshrl.u32 %v5128, 7
        %v5130 = vsub.s32 %v5127, %v5129
        %v5131 = vrot.slane %v5117, %v5130
        %v5132 = vcombine.low %v5108, %v5124
        %v5133 = vcombine.high %v5108, %v5124
        %v5135 = vunpack.c.l.s4 1934713408
        %v5136 = vunpack.c.0.s8 %v5135
        %v5137 = vlaneseq
        %v5138 = vshrl.u32 %v5137, 7
        %v5139 = vsub.s32 %v5136, %v5138
        %v5140 = vrot.slane %v5132, %v5139
        %v5142 = vunpack.c.l.s4 1934713408
        %v5143 = vunpack.c.0.s8 %v5142
        %v5144 = vlaneseq
        %v5145 = vshrl.u32 %v5144, 7
        %v5146 = vsub.s32 %v5143, %v5145
        %v5147 = vrot.slane %v5133, %v5146
        %v5148 = vcombine.low %v5115, %v5131
        %v5149 = vcombine.high %v5115, %v5131
        %v5151 = vunpack.c.l.s4 1934713408
        %v5152 = vunpack.c.0.s8 %v5151
        %v5153 = vlaneseq
        %v5154 = vshrl.u32 %v5153, 7
        %v5155 = vsub.s32 %v5152, %v5154
        %v5156 = vrot.slane %v5148, %v5155
        %v5158 = vunpack.c.l.s4 1934713408
        %v5159 = vunpack.c.0.s8 %v5158
        %v5160 = vlaneseq
        %v5161 = vshrl.u32 %v5160, 7
        %v5162 = vsub.s32 %v5159, %v5161
        %v5163 = vrot.slane %v5149, %v5162
        %v5164 = vcombine.high %v5140, 0.0
        %v5165 = vcombine.high %v5147, 0.0
        %v5166 = vcombine.high %v5156, 0.0
        %v5167 = vcombine.high %v5163, 0.0
        %v5168 = vcombine.low %v5079, %v5087
        %v5169 = vcombine.high %v5079, %v5087
        %v5171 = vunpack.c.l.s4 1983009808
        %v5172 = vunpack.c.0.s8 %v5171
        %v5173 = vlaneseq
        %v5174 = vshrl.u32 %v5173, 7
        %v5175 = vsub.s32 %v5172, %v5174
        %v5176 = vrot.slane %v5168, %v5175
        %v5178 = vunpack.c.l.s4 1983009808
        %v5179 = vunpack.c.0.s8 %v5178
        %v5180 = vlaneseq
        %v5181 = vshrl.u32 %v5180, 7
        %v5182 = vsub.s32 %v5179, %v5181
        %v5183 = vrot.slane %v5169, %v5182
        %v5184 = vcombine.low %v5083, %v5091
        %v5185 = vcombine.high %v5083, %v5091
        %v5187 = vunpack.c.l.s4 1983009808
        %v5188 = vunpack.c.0.s8 %v5187
        %v5189 = vlaneseq
        %v5190 = vshrl.u32 %v5189, 7
        %v5191 = vsub.s32 %v5188, %v5190
        %v5192 = vrot.slane %v5184, %v5191
        %v5194 = vunpack.c.l.s4 1983009808
        %v5195 = vunpack.c.0.s8 %v5194
        %v5196 = vlaneseq
        %v5197 = vshrl.u32 %v5196, 7
        %v5198 = vsub.s32 %v5195, %v5197
        %v5199 = vrot.slane %v5185, %v5198
        %v5200 = vcombine.low %v5176, %v5192
        %v5201 = vcombine.high %v5176, %v5192
        %v5203 = vunpack.c.l.s4 1934713408
        %v5204 = vunpack.c.0.s8 %v5203
        %v5205 = vlaneseq
        %v5206 = vshrl.u32 %v5205, 7
        %v5207 = vsub.s32 %v5204, %v5206
        %v5208 = vrot.slane %v5200, %v5207
        %v5210 = vunpack.c.l.s4 1934713408
        %v5211 = vunpack.c.0.s8 %v5210
        %v5212 = vlaneseq
        %v5213 = vshrl.u32 %v5212, 7
        %v5214 = vsub.s32 %v5211, %v5213
        %v5215 = vrot.slane %v5201, %v5214
        %v5216 = vcombine.low %v5183, %v5199
        %v5217 = vcombine.high %v5183, %v5199
        %v5219 = vunpack.c.l.s4 1934713408
        %v5220 = vunpack.c.0.s8 %v5219
        %v5221 = vlaneseq
        %v5222 = vshrl.u32 %v5221, 7
        %v5223 = vsub.s32 %v5220, %v5222
        %v5224 = vrot.slane %v5216, %v5223
        %v5226 = vunpack.c.l.s4 1934713408
        %v5227 = vunpack.c.0.s8 %v5226
        %v5228 = vlaneseq
        %v5229 = vshrl.u32 %v5228, 7
        %v5230 = vsub.s32 %v5227, %v5229
        %v5231 = vrot.slane %v5217, %v5230
        %v5232 = vcombine.high %v5208, 0.0
        %v5233 = vcombine.high %v5215, 0.0
        %v5234 = vcombine.high %v5224, 0.0
        %v5235 = vcombine.high %v5231, 0.0
        %5237 = vrot.lane.b32.xlu0 %v5164, 16
        %v5238 = vpop.permute.xlu0 %5237
        %5241 = vrot.lane.b32.xlu0 %v5147, 32
        %v5242 = vpop.permute.xlu0 %5241
        %5245 = vrot.lane.b32.xlu0 %v5165, 48
        %v5246 = vpop.permute.xlu0 %5245
        %5249 = vrot.lane.b32.xlu0 %v5156, 64
        %v5250 = vpop.permute.xlu0 %5249
        %5253 = vrot.lane.b32.xlu0 %v5166, 80
        %v5254 = vpop.permute.xlu0 %5253
        %5257 = vrot.lane.b32.xlu0 %v5163, 96
        %v5258 = vpop.permute.xlu0 %5257
        %5261 = vrot.lane.b32.xlu0 %v5167, 112
        %v5262 = vpop.permute.xlu0 %5261
        %5265 = vrot.lane.b32.xlu0 %v5232, 16
        %v5266 = vpop.permute.xlu0 %5265
        %5269 = vrot.lane.b32.xlu0 %v5215, 32
        %v5270 = vpop.permute.xlu0 %5269
        %5273 = vrot.lane.b32.xlu0 %v5233, 48
        %v5274 = vpop.permute.xlu0 %5273
        %5277 = vrot.lane.b32.xlu0 %v5224, 64
        %v5278 = vpop.permute.xlu0 %5277
        %5281 = vrot.lane.b32.xlu0 %v5234, 80
        %v5282 = vpop.permute.xlu0 %5281
        %5285 = vrot.lane.b32.xlu0 %v5231, 96
        %v5286 = vpop.permute.xlu0 %5285
        %5289 = vrot.lane.b32.xlu0 %v5235, 112
        %v5290 = vpop.permute.xlu0 %5289
        %v5292 = vsel %vm758, %v5140, %v5238
        %v5293 = vsel %vm760, %v5292, %v5242
        %v5294 = vsel %vm762, %v5293, %v5246
        %v5295 = vsel %vm764, %v5294, %v5250
        %v5296 = vsel %vm766, %v5295, %v5254
        %v5297 = vsel %vm768, %v5296, %v5258
        %v5298 = vsel %vm770, %v5297, %v5262
        %v5299 = vsel %vm758, %v5208, %v5266
        %v5300 = vsel %vm760, %v5299, %v5270
        %v5301 = vsel %vm762, %v5300, %v5274
        %v5302 = vsel %vm764, %v5301, %v5278
        %v5303 = vsel %vm766, %v5302, %v5282
        %v5304 = vsel %vm768, %v5303, %v5286
        %v5305 = vsel %vm770, %v5304, %v5290
        %5306 = vst [vmem:[#allocation3 + $0x40] sm:$0xf] %v5298
        %5307 = vst [vmem:[#allocation3 + $0x48] sm:$0xf] %v5305
        %v5308 = vld [vmem:[#allocation3] sm:$0xff]
        %v5309 = vld [vmem:[#allocation3 + $0x8] sm:$0xff]
        %v5310 = vld [vmem:[#allocation3 + $0x10] sm:$0xff]
        %v5311 = vld [vmem:[#allocation3 + $0x18] sm:$0xff]
        %v5312 = vld [vmem:[#allocation3 + $0x20] sm:$0xff]
        %v5313 = vld [vmem:[#allocation3 + $0x28] sm:$0xff]
        %v5314 = vld [vmem:[#allocation3 + $0x30] sm:$0xff]
        %v5315 = vld [vmem:[#allocation3 + $0x38] sm:$0xff]
        %v5316 = vld [vmem:[#allocation3 + $0x40] sm:$0xf]
        %v5317 = vld [vmem:[#allocation3 + $0x48] sm:$0xf]
        %5319 = vset.pattern.permute.xlu0 0
        %5320 = vperm.xlu0 %5319, %v3147
        %v5321 = vpop.permute.xlu0 %5320
        %v5324 = vsel %vm2740, %v3146, 0
        %v5327 = vsel %vm2744, %v5316, 0
        %v5330 = vsel %vm2744, %v5317, 0
        %5332 = vmatprep.subr.mxu0 0.0
        %5333 = vmatpush1.msra.mxu0 0.0
        %5334 = vmatprep.subr.mxu0 0.0
        %5335 = vmatpush1.msra.mxu0 0.0
        %5336 = vmatprep.subr.mxu0 0.0
        %5337 = vmatpush1.msra.mxu0 0.0
        %5338 = vmatprep.subr.mxu0 0.0
        %5339 = vmatpush1.msra.mxu0 0.0
        %5340 = vmatprep.subr.mxu0 0.0
        %5341 = vmatpush1.msra.mxu0 0.0
        %5342 = vmatprep.subr.mxu0 0.0
        %5343 = vmatpush1.msra.mxu0 0.0
        %5344 = vmatprep.subr.mxu0 0.0
        %5345 = vmatpush1.msra.mxu0 0.0
        %5346 = vmatprep.subr.mxu0 0.0
        %5347 = vmatpush1.msra.mxu0 0.0
        %5348 = vmatprep.subr.mxu0 0.0
        %5349 = vmatpush1.msra.mxu0 0.0
        %5350 = vmatprep.subr.mxu0 0.0
        %5351 = vmatpush1.msra.mxu0 0.0
        %5352 = vmatprep.subr.mxu0 0.0
        %5353 = vmatpush1.msra.mxu0 0.0
        %5354 = vmatprep.subr.mxu0 %v5330
        %5355 = vmatpush1.msra.mxu0 %v5327
        %5356 = vmatprep.subr.mxu0 %v5315
        %5357 = vmatpush1.msra.mxu0 %v5314
        %5358 = vmatprep.subr.mxu0 %v5313
        %5359 = vmatpush1.msra.mxu0 %v5312
        %5360 = vmatprep.subr.mxu0 %v5311
        %5361 = vmatpush1.msra.mxu0 %v5310
        %5362 = vmatprep.subr.mxu0 %v5309
        %5363 = vmatpush1.msra.mxu0 %v5308
        %5364 = vmatprep.subr.mxu0 0.0
        %5365 = vmatpush2.msra.mxu0 0.0
        %5366 = vmatprep.subr.mxu0 0.0
        %5367 = vmatpush2.msra.mxu0 0.0
        %5368 = vmatprep.subr.mxu0 0.0
        %5369 = vmatpush2.msra.mxu0 0.0
        %5370 = vmatprep.subr.mxu0 0.0
        %5371 = vmatpush2.msra.mxu0 0.0
        %5372 = vmatprep.subr.mxu0 0.0
        %5373 = vmatpush2.msra.mxu0 0.0
        %5374 = vmatprep.subr.mxu0 0.0
        %5375 = vmatpush2.msra.mxu0 0.0
        %5376 = vmatprep.subr.mxu0 0.0
        %5377 = vmatpush2.msra.mxu0 0.0
        %5378 = vmatprep.subr.mxu0 0.0
        %5379 = vmatpush2.msra.mxu0 0.0
        %5380 = vmatprep.subr.mxu0 0.0
        %5381 = vmatpush2.msra.mxu0 0.0
        %5382 = vmatprep.subr.mxu0 0.0
        %5383 = vmatpush2.msra.mxu0 0.0
        %5384 = vmatprep.subr.mxu0 0.0
        %5385 = vmatpush2.msra.mxu0 0.0
        %5386 = vmatprep.subr.mxu0 0.0
        %5387 = vmatpush2.msra.mxu0 0.0
        %5388 = vmatprep.subr.mxu0 0.0
        %5389 = vmatpush2.msra.mxu0 0.0
        %5390 = vmatprep.subr.mxu0 0.0
        %5391 = vmatpush2.msra.mxu0 0.0
        %5392 = vmatprep.subr.mxu0 0.0
        %5393 = vmatpush2.msra.mxu0 0.0
        %5394 = vmatprep.subr.mxu0 0.0
        %5395 = vmatpush2.msra.mxu0 0.0
        %5396 = vmatprep.mubr.f32.mxu0 0.0
        %5397 = vmatmul.mubr.f32.gmra.mxu0 %v5324
        %v5398 = vpop.f32.mrf.mxu0
        %v5399 = vadd.f32 %v5321, %v5398
        %v5400 = vpop.f32.mrf.mxu0
        %v5401 = vadd.f32 %v5321, %v5400
        %5402 = vdwg.mxu0
        %v5403 = vsel %vm2744, %v5399, 0.0
        %v5404 = vsel %vm2744, %v5401, 0.0
        %v5405 = vadd.f32 %v5403, %v5404
        %5406 = vadd.xlane.f32.xlu0 %v5405
        %v5407 = vpop.xlane.xlu0 %5406
        %v5408 = vmul.f32 %v5399, %v5399
        %v5409 = vmul.f32 %v5401, %v5401
        %v5410 = vsel %vm2744, %v5408, 0.0
        %v5411 = vsel %vm2744, %v5409, 0.0
        %v5412 = vadd.f32 %v5410, %v5411
        %5413 = vadd.xlane.f32.xlu0 %v5412
        %v5414 = vpop.xlane.xlu0 %5413
        %v5415 = vmul.f32 %v5407, 0.00390625
        %v5416 = vmul.f32 %v5414, 0.00390625
        %v5417 = vmul.f32 %v5415, %v5415
        %v5418 = vsub.f32 %v5416, %v5417
        %v5419 = vsub.f32 %v5399, %v5415
        %v5420 = vsub.f32 %v5401, %v5415
        %v5421 = vadd.f32 %v5418, 1e-05
        %v5422 = vrsqrt.pop %v5421
        %v5423 = vmul.f32 %v5419, %v5422
        %v5424 = vmul.f32 %v5420, %v5422
        %v5427 = vcombine.low %v5423, %v5424
        %v5429 = vadd.f32 %v241, %v5427
        %5430 = vst [vmem:[%s240] sm:$0xff] %v5429
        %s5431 = sand.u32 %s140, 1
        %s5432 = scalar_lea.sflag [#allocation6], %s5431
        %s5433 = sand.u32 %s140, 1
        %s5434 = smul.addr %s5433, 8
        %s5435 = scalar_lea.vmem [#allocation7], %s5434
        // Predicated region
        $region45: #{tpu_custom_call.1} parent=39 // pred_check
          %p5436 = pneg %p150
        $region46: #{tpu_custom_call.1} parent=39 // pred_check_branch
          %5438 = sbr.rel (%p5436) target = $region48
        $region47: #{tpu_custom_call.1} parent=39 // pred_region
          %s5440 = ssub.s32 128, 128
          %5441 = vsyncadd %s5432, %s5440
          %s5442 = smul.addr %s22, 2
          %s5443 = smul.addr %s5442, 64
          %s5444 = scalar_lea.hbm %s5, %s5443
          %s5446 = sshll.u32 %s5435, 4
          %s5447 = int_to_ptr.vmem [resolvable:$true] %s5446
          %5449 = dma.vmem_to_hbm [thread:$0]  %s5447, 128, %s5444, %s5432
        $region48: #{tpu_custom_call.1} parent=39 // pred_fallthru
          _
      $region40: #{tpu_custom_call.1} parent=5 // pred_fallthru
        _
      %p5450 = scmp.le.s32.totalorder 2, %s17
      // Predicated region
      $region49: #{tpu_custom_call.1} parent=5 // pred_check
        %p5451 = pneg %p5450
      $region50: #{tpu_custom_call.1} parent=5 // pred_check_branch
        %5453 = sbr.rel (%p5451) target = $region52
      $region51: #{tpu_custom_call.1} parent=5 // pred_region
        %s5454 = ssub.s32 %s17, 2
        // Predicated region
        $region53: #{tpu_custom_call.1} parent=51 // pred_check
          %p5455 = pneg %p156
        $region54: #{tpu_custom_call.1} parent=51 // pred_check_branch
          %5457 = sbr.rel (%p5455) target = $region56
        $region55: #{tpu_custom_call.1} parent=51 // pred_region
          %s5458 = sand.u32 %s141, 1
          %s5459 = scalar_lea.sflag [#allocation6], %s5458
          %s5460 = sand.u32 %s141, 1
          %s5461 = smul.addr %s5460, 8
          %s5462 = scalar_lea.vmem [#allocation7], %s5461
          %5463 = dma.done %s5459, 128
        $region56: #{tpu_custom_call.1} parent=51 // pred_fallthru
          _
      $region52: #{tpu_custom_call.1} parent=5 // pred_fallthru
        _
    $region6: #{tpu_custom_call.1} parent=1 // loop_footer
      %s21 = sadd.s32 1, %s17
    $region7: #{tpu_custom_call.1} parent=1 // loop_footer_branch
      %16 = sbr.rel target = $region3
    $region8: #{tpu_custom_call.1} parent=1 // loop_exit
      _
    %5464 = vsyncpa [#allocation5], 1
    %s5465 = scalar_lea.sflag [#allocation5], 1
    %5466 = vsyncpa %s5465, 1
    %5467 = vsyncpa [#allocation6], 1
    %s5468 = scalar_lea.sflag [#allocation6], 1
    %5469 = vsyncpa %s5468, 1

</llo_original>
